<compile_context>
chip_gen: v7x
topology: tpu7x:2x2x1
jax: 0.10.0
libtpu: 0.0.40
codegen_flags: <defaults>
</compile_context>

<pallas_src>
import functools
import math

import jax
import jax.numpy as jnp
import numpy as np
from jax.experimental import pallas as pl
from jax.experimental.pallas import tpu as pltpu


# ---------------------------------------------------------------------------
# Kernel: one full TransformerBlock on a (Bt, S, D) activation tile.
# ---------------------------------------------------------------------------
def _transformer_block_kernel(
    x_ref,                        # (Bt, S, D)     activations (bf16)
    wqkv_ref,                     # (H, D, 3*hd)   bf16; q slice pre-scaled by 1/sqrt(hd)
    bqkv_ref,                     # (H, 1, 3*hd)   bf16
    wo_ref,                       # (D, D)         bf16 out_proj (rows head-major)
    bo_ref,                       # (1, D)         bf16
    w1_ref, b1_ref,               # (D, F), (1, F) bf16
    w2_ref, b2_ref,               # (F, D), (1, D) bf16
    ln1g_ref, ln1b_ref,           # (1, D) f32
    ln2g_ref, ln2b_ref,           # (1, D) f32
    o_ref,                        # (Bt, S, D)
    *,
    num_heads: int,
    fused_out_proj: bool,
    approx_softmax: bool,
):
    Bt, S, D = x_ref.shape
    H = num_heads
    hd = D // H
    N = Bt * S                    # rows processed per grid step
    G = H * Bt                    # (head, batch) groups for batched attention

    x_in = x_ref[...].reshape(N, D)            # leading-dim merge only (free)
    x_f32 = x_in.astype(jnp.float32)           # residual / LN path in f32
    x_bf = x_in.astype(jnp.bfloat16)

    # ---- Fused QKV projection: ONE head-batched MXU pass over (H, D, 3*hd).
    # hd < 128 here, so head-batched weights avoid lane-misaligned head slices;
    # the broadcast LHS is the acknowledged cost of keeping that form.
    xh = jnp.broadcast_to(x_bf[None, :, :], (H, N, D))
    qkv = jax.lax.dot_general(
        xh, wqkv_ref[...],
        dimension_numbers=(((2,), (1,)), ((0,), (0,))),
        preferred_element_type=jnp.float32,
    ) + bqkv_ref[...].astype(jnp.float32)                       # (H, N, 3*hd)

    q = qkv[:, :, 0 * hd:1 * hd]                                # pre-scaled by 1/sqrt(hd)
    k = qkv[:, :, 1 * hd:2 * hd]
    v = qkv[:, :, 2 * hd:3 * hd]

    qg = q.reshape(G, S, hd).astype(jnp.bfloat16)               # group g = h*Bt + b
    kg = k.reshape(G, S, hd).astype(jnp.bfloat16)
    vg = v.reshape(G, S, hd).astype(jnp.bfloat16)

    # ---- Scaled dot-product attention; softmax statistics in f32.
    # TODO(synk): for large S, tile over the KV axis (flash-style online softmax)
    # instead of materializing the full (G, S, S) score matrix in VMEM.
    scores = jax.lax.dot_general(
        qg, kg, dimension_numbers=(((2,), (2,)), ((0,), (0,))),
        preferred_element_type=jnp.float32)                     # (G, S, S)
    scores = scores - jnp.max(scores, axis=-1, keepdims=True)
    p = jnp.exp(scores)
    denom = jnp.sum(p, axis=-1, keepdims=True)                  # (G, S, 1)

    ctx = jax.lax.dot_general(
        p.astype(jnp.bfloat16), vg,
        dimension_numbers=(((2,), (1,)), ((0,), (0,))),
        preferred_element_type=jnp.float32)                     # (G, S, hd)
    if approx_softmax:
        ctx = ctx * pl.reciprocal(denom, approx=True)           # EUP slot, small (S, hd)
    else:
        ctx = ctx / denom

    ctx_h = ctx.reshape(H, N, hd).astype(jnp.bfloat16)          # (H, N, hd)

    # ---- Output projection.
    if fused_out_proj:
        # Single MXU pass with K = H*hd = D: gather heads onto the lane axis and
        # hit the (D, D) out_proj weight once.  No (H, N, D) f32 intermediate,
        # no H-1 full-tile adds.
        ctx_rows = jnp.concatenate([ctx_h[h] for h in range(H)], axis=-1)   # (N, D)
        attn = jnp.dot(ctx_rows, wo_ref[...], preferred_element_type=jnp.float32)
    else:
        # Conservative fallback: per-head matmuls accumulated over heads.
        wo_h = wo_ref[...].reshape(H, hd, D)
        attn_h = jax.lax.dot_general(
            ctx_h, wo_h, dimension_numbers=(((2,), (1,)), ((0,), (0,))),
            preferred_element_type=jnp.float32)                 # (H, N, D)
        attn = jnp.sum(attn_h, axis=0)
    attn = attn + bo_ref[...].astype(jnp.float32)               # (N, D)

    # ---- Residual + LayerNorm1 (f32, biased variance, eps=1e-5 as PyTorch).
    s = attn + x_f32
    mu = jnp.mean(s, axis=-1, keepdims=True)
    var = jnp.mean(jnp.square(s - mu), axis=-1, keepdims=True)
    s = (s - mu) * jax.lax.rsqrt(var + 1e-5)
    s = s * ln1g_ref[...] + ln1b_ref[...]

    # ---- FFN: Linear -> LeakyReLU(0.01) -> Linear.
    h1 = jnp.dot(s.astype(jnp.bfloat16), w1_ref[...],
                 preferred_element_type=jnp.float32) + b1_ref[...].astype(jnp.float32)
    h1 = jnp.maximum(h1, 0.01 * h1)                             # LeakyReLU via vmul+vmax
    out = jnp.dot(h1.astype(jnp.bfloat16), w2_ref[...],
                  preferred_element_type=jnp.float32) + b2_ref[...].astype(jnp.float32)

    # ---- Residual + LayerNorm2.
    out = out + s
    mu2 = jnp.mean(out, axis=-1, keepdims=True)
    var2 = jnp.mean(jnp.square(out - mu2), axis=-1, keepdims=True)
    out = (out - mu2) * jax.lax.rsqrt(var2 + 1e-5)
    out = out * ln2g_ref[...] + ln2b_ref[...]

    o_ref[...] = out.reshape(Bt, S, D).astype(o_ref.dtype)


# ---------------------------------------------------------------------------
# VMEM budget helpers (generation-aware).
# ---------------------------------------------------------------------------
def _vmem_capacity_bytes():
    """Per-core VMEM capacity; conservative (v7x = 64 MiB) fallback on failure."""
    try:
        cap = getattr(pltpu.get_tpu_info(), "vmem_capacity_bytes", None)
        if cap:
            return int(cap)
    except Exception:
        pass
    return 64 * 1024 * 1024


def _vmem_limit_bytes():
    # Explicit scoped-VMEM limit (the default scoped limit is well below physical).
    return min(int(_vmem_capacity_bytes() * 3 // 4), 96 * 1024 * 1024)


def _choose_batch_tile(B, S, D, H, F):
    """Largest batch tile whose in-kernel working set fits the VMEM budget,
    while keeping >= 2 grid steps so both v7x TensorCores receive work."""
    hd = D // H
    budget = _vmem_capacity_bytes() // 2       # leave half for compiler scratch etc.
    weights_bytes = 2 * (3 * D * D + 3 * D + D * D + D + 2 * D * F + F + D) + 16 * D

    def tile_bytes(bt):
        N = bt * S
        G = H * bt
        io = 2 * 2 * (bt * S * D * 2)                           # dbl-buffered bf16 in+out
        act = (H * N * D * 2                                    # broadcast bf16 LHS
               + H * N * 3 * hd * 4                             # qkv (f32)
               + 3 * G * S * hd * 2                             # q / k / v (bf16)
               + 2 * G * S * S * 4                              # scores + probs (f32)
               + G * S * hd * 4                                 # ctx (f32)
               + 4 * N * D * 4                                  # attn / s / out / residual
               + N * F * 6)                                     # ffn hidden (f32 + bf16)
        return io + act

    cands = [bt for bt in range(1, B + 1) if B % bt == 0]
    multi = [bt for bt in cands if B // bt >= 2]                # >= 2 grid steps if possible
    if multi:
        cands = multi
    best = 1
    for bt in cands:
        if weights_bytes + tile_bytes(bt) <= budget:
            best = bt
    return best


# ---------------------------------------------------------------------------
# Wrapper: batch-tiled pallas_call for one TransformerBlock.
# ---------------------------------------------------------------------------
def transformer_block(x, blk, num_heads, batch_tile=None, approx_softmax=True):
    """x: (B, S, D) bf16/f32.  blk: dict of kernel-layout weights (see pack_block)."""
    B, S, D = x.shape
    F = blk["w1"].shape[1]
    Bt = batch_tile if batch_tile is not None else _choose_batch_tile(B, S, D, num_heads, F)
    assert B % Bt == 0 and D % num_heads == 0

    weight_names = ("wqkv", "bqkv", "wo", "bo", "w1", "b1", "w2", "b2",
                    "ln1_g", "ln1_b", "ln2_g", "ln2_b")
    weights = tuple(blk[n] for n in weight_names)

    cost = pl.CostEstimate(
        flops=int(2 * B * S * D * 3 * D          # qkv projection
                  + 4 * B * S * S * D            # scores + ctx
                  + 2 * B * S * D * D            # out projection
                  + 4 * B * S * D * F),          # ffn1 + ffn2
        transcendentals=int(B * num_heads * S * S),
        bytes_accessed=int(2 * x.size * x.dtype.itemsize
                           + sum(int(np.prod(w.shape)) * w.dtype.itemsize
                                 for w in weights)),
    )

    def build(single_buffer_weights, fused_out_proj):
        def const_spec(a):
            nd = a.ndim

            def imap(b):
                return (0,) * nd

            if single_buffer_weights:
                # Weights keep the same block index for every grid step; one VMEM
                # buffer suffices (halves weight-resident VMEM; matters on v7x).
                return pl.BlockSpec(a.shape, imap, pipeline_mode=pl.Buffered(1))
            return pl.BlockSpec(a.shape, imap)

        kernel = functools.partial(
            _transformer_block_kernel, num_heads=num_heads,
            fused_out_proj=fused_out_proj, approx_softmax=approx_softmax)
        return pl.pallas_call(
            kernel,
            out_shape=jax.ShapeDtypeStruct((B, S, D), x.dtype),
            grid_spec=pltpu.PrefetchScalarGridSpec(
                num_scalar_prefetch=0,
                grid=(B // Bt,),
                in_specs=[pl.BlockSpec((Bt, S, D), lambda b: (b, 0, 0))]
                         + [const_spec(a) for a in weights],
                out_specs=pl.BlockSpec((Bt, S, D), lambda b: (b, 0, 0)),
            ),
            compiler_params=pltpu.CompilerParams(
                dimension_semantics=("parallel",),
                vmem_limit_bytes=_vmem_limit_bytes(),
            ),
            cost_estimate=cost,
        )

    # Prefer the fully-optimized configuration; degrade gracefully if this JAX /
    # Mosaic build rejects single-buffered weights or the lane-gather fusion.
    last_err = None
    for cfg in ((True, True), (False, True), (False, False)):
        try:
            return build(*cfg)(x, *weights)
        except Exception as e:            # capability fallback, not error hiding
            last_err = e
    raise last_err


def behavior_transformer(x, params, num_heads, approx_softmax=True):
    """x: (B, S, model_dim - position_dim); sinusoidal position emb is concatenated."""
    B, S, _ = x.shape
    pe = params["position_emb"]                                   # (S, position_dim)
    x = jnp.concatenate(
        [x, jnp.broadcast_to(pe[None, :, :], (B, S, pe.shape[-1]))], axis=-1)
    # Carry inter-block activations in bf16 in HBM (matmuls consume bf16 anyway);
    # residual / LayerNorm math is done in f32 inside the kernel.
    x = x.astype(jnp.bfloat16)
    for blk in params["blocks"]:
        x = transformer_block(x, blk, num_heads, approx_softmax=approx_softmax)
    return x.astype(jnp.float32)


# ---------------------------------------------------------------------------
# Parameter construction: torch-layout weights -> kernel layout.
# ---------------------------------------------------------------------------
def make_position_emb(seq_len, position_dim):
    # Sinusoidal PE exactly as in BehaviorTransformer.reset_parameters.
    pe = np.zeros((seq_len, position_dim), dtype=np.float32)
    position = np.arange(0, seq_len, dtype=np.float32)[:, None]
    div_term = np.exp(
        np.arange(0, position_dim, 2, dtype=np.float32)
        * (-np.log(10000.0) / position_dim))
    pe[:, 0::2] = np.sin(position * div_term)
    pe[:, 1::2] = np.cos(position * div_term)
    return jnp.asarray(pe)


def pack_block(p, num_heads, compute_dtype=jnp.bfloat16):
    """Convert torch-layout block params to the kernel layout.

    torch in_proj_weight rows: [0:D]=q, [D:2D]=k, [2D:3D]=v (same for the bias).
    Heads own contiguous hd-chunks of output dims.  The 1/sqrt(hd) attention
    scale is folded into wq / bq.  QKV is stacked per head into (H, D, 3*hd).
    """
    D = p["out_proj_weight"].shape[0]
    F = p["ffn1_weight"].shape[0]
    H = num_heads
    hd = D // H
    scale = 1.0 / math.sqrt(hd)

    wq = p["in_proj_weight"][0 * D:1 * D].T * scale               # (D_in, D_out)
    wk = p["in_proj_weight"][1 * D:2 * D].T
    wv = p["in_proj_weight"][2 * D:3 * D].T
    bq = p["in_proj_bias"][0 * D:1 * D] * scale
    bk = p["in_proj_bias"][1 * D:2 * D]
    bv = p["in_proj_bias"][2 * D:3 * D]

    def heads_w(w):      # (D, H*hd) head-grouped cols -> (H, D, hd)
        return jnp.transpose(w.reshape(D, H, hd), (1, 0, 2))

    def heads_b(b):      # (H*hd,) -> (H, 1, hd)
        return b.reshape(H, 1, hd)

    wqkv = jnp.concatenate([heads_w(wq), heads_w(wk), heads_w(wv)],
                           axis=-1).astype(compute_dtype)         # (H, D, 3*hd)
    bqkv = jnp.concatenate([heads_b(bq), heads_b(bk), heads_b(bv)],
                           axis=-1).astype(compute_dtype)         # (H, 1, 3*hd)

    return {
        "wqkv": wqkv, "bqkv": bqkv,
        # out_proj_weight is (D_out, D_in) with D_in head-major -> one host transpose.
        "wo": p["out_proj_weight"].T.astype(compute_dtype),       # (D, D)
        "bo": p["out_proj_bias"].reshape(1, D).astype(compute_dtype),
        "w1": p["ffn1_weight"].T.astype(compute_dtype),           # (D, F)
        "b1": p["ffn1_bias"].reshape(1, F).astype(compute_dtype),
        "w2": p["ffn2_weight"].T.astype(compute_dtype),           # (F, D)
        "b2": p["ffn2_bias"].reshape(1, D).astype(compute_dtype),
        "ln1_g": p["ln1_weight"].reshape(1, D).astype(jnp.float32),
        "ln1_b": p["ln1_bias"].reshape(1, D).astype(jnp.float32),
        "ln2_g": p["ln2_weight"].reshape(1, D).astype(jnp.float32),
        "ln2_b": p["ln2_bias"].reshape(1, D).astype(jnp.float32),
    }


def init_params(key, seq_len, model_dim, ffn_dim, position_dim, num_layers, num_heads):
    D, F = model_dim, ffn_dim
    blocks = []
    for _ in range(num_layers):
        key, *ks = jax.random.split(key, 7)
        scale = 1.0 / math.sqrt(D)
        torch_style = {
            "in_proj_weight": jax.random.normal(ks[0], (3 * D, D), jnp.float32) * scale,
            "in_proj_bias": jax.random.normal(ks[1], (3 * D,), jnp.float32) * 0.01,
            "out_proj_weight": jax.random.normal(ks[2], (D, D), jnp.float32) * scale,
            "out_proj_bias": jnp.zeros((D,), jnp.float32),
            "ffn1_weight": jax.random.normal(ks[3], (F, D), jnp.float32) * scale,
            "ffn1_bias": jax.random.normal(ks[4], (F,), jnp.float32) * 0.01,
            "ffn2_weight": jax.random.normal(ks[5], (D, F), jnp.float32) * (1.0 / math.sqrt(F)),
            "ffn2_bias": jnp.zeros((D,), jnp.float32),
            "ln1_weight": jnp.ones((D,), jnp.float32),
            "ln1_bias": jnp.zeros((D,), jnp.float32),
            "ln2_weight": jnp.ones((D,), jnp.float32),
            "ln2_bias": jnp.zeros((D,), jnp.float32),
        }
        blocks.append(pack_block(torch_style, num_heads))
    return {
        "position_emb": make_position_emb(seq_len, position_dim),
        "blocks": blocks,
    }


if __name__ == "__main__":
    # Small config consistent with the module's constructor semantics.
    batch = 2
    seq_len = 8
    model_dim = 32          # transformer model dim (after position-emb concat)
    num_heads = 4
    position_dim = 4
    ffn_dim = model_dim     # TransformerBlock uses ffn_dim = model_dim
    num_layers = 1

    key = jax.random.PRNGKey(0)
    kx, kp = jax.random.split(key)

    # Input feature dim = model_dim - position_dim; forward concatenates the PE.
    x = jax.random.normal(kx, (batch, seq_len, model_dim - position_dim), jnp.float32)
    params = init_params(kp, seq_len, model_dim, ffn_dim, position_dim,
                         num_layers, num_heads)

    out = behavior_transformer(x, params, num_heads)
    out = jax.block_until_ready(out)
    assert out.shape == (batch, seq_len, model_dim)
    assert bool(jnp.all(jnp.isfinite(out)))
    print("KERNEL_OK")
</pallas_src>

<mosaic_0001>
module attributes {stable_mosaic.version = 11 : i64} {
  func.func @_transformer_block_kernel(%arg0: i32, %arg1: memref<1x8x32xbf16, #tpu.memory_space<vmem>>, %arg2: memref<4x32x24xbf16, #tpu.memory_space<vmem>>, %arg3: memref<4x1x24xbf16, #tpu.memory_space<vmem>>, %arg4: memref<32x32xbf16, #tpu.memory_space<vmem>>, %arg5: memref<1x32xbf16, #tpu.memory_space<vmem>>, %arg6: memref<32x32xbf16, #tpu.memory_space<vmem>>, %arg7: memref<1x32xbf16, #tpu.memory_space<vmem>>, %arg8: memref<32x32xbf16, #tpu.memory_space<vmem>>, %arg9: memref<1x32xbf16, #tpu.memory_space<vmem>>, %arg10: memref<1x32xf32, #tpu.memory_space<vmem>>, %arg11: memref<1x32xf32, #tpu.memory_space<vmem>>, %arg12: memref<1x32xf32, #tpu.memory_space<vmem>>, %arg13: memref<1x32xf32, #tpu.memory_space<vmem>>, %arg14: memref<1x8x32xbf16, #tpu.memory_space<vmem>>) attributes {dimension_semantics = [#tpu.dimension_semantics<parallel>], iteration_bounds = array<i64: 2>, scalar_prefetch = 0 : i64, scratch_operands = 0 : i64, tpu.core_type = #tpu.core_type<tc>, window_params = [{transform_indices = @transform_0, window_bounds = array<i64: 1, 8, 32>}, {pipeline_mode = #tpu.pipeline_mode<synchronous>, transform_indices = @transform_1, window_bounds = array<i64: 4, 32, 24>}, {pipeline_mode = #tpu.pipeline_mode<synchronous>, transform_indices = @transform_2, window_bounds = array<i64: 4, 1, 24>}, {pipeline_mode = #tpu.pipeline_mode<synchronous>, transform_indices = @transform_3, window_bounds = array<i64: 32, 32>}, {pipeline_mode = #tpu.pipeline_mode<synchronous>, transform_indices = @transform_4, window_bounds = array<i64: 1, 32>}, {pipeline_mode = #tpu.pipeline_mode<synchronous>, transform_indices = @transform_5, window_bounds = array<i64: 32, 32>}, {pipeline_mode = #tpu.pipeline_mode<synchronous>, transform_indices = @transform_6, window_bounds = array<i64: 1, 32>}, {pipeline_mode = #tpu.pipeline_mode<synchronous>, transform_indices = @transform_7, window_bounds = array<i64: 32, 32>}, {pipeline_mode = #tpu.pipeline_mode<synchronous>, transform_indices = @transform_8, window_bounds = array<i64: 1, 32>}, {pipeline_mode = #tpu.pipeline_mode<synchronous>, transform_indices = @transform_9, window_bounds = array<i64: 1, 32>}, {pipeline_mode = #tpu.pipeline_mode<synchronous>, transform_indices = @transform_10, window_bounds = array<i64: 1, 32>}, {pipeline_mode = #tpu.pipeline_mode<synchronous>, transform_indices = @transform_11, window_bounds = array<i64: 1, 32>}, {pipeline_mode = #tpu.pipeline_mode<synchronous>, transform_indices = @transform_12, window_bounds = array<i64: 1, 32>}, {transform_indices = @transform_13, window_bounds = array<i64: 1, 8, 32>}]} {
    %c0 = arith.constant 0 : index
    %c0_0 = arith.constant 0 : index
    %c0_1 = arith.constant 0 : index
    %0 = vector.load %arg1[%c0, %c0_0, %c0_1] : memref<1x8x32xbf16, #tpu.memory_space<vmem>>, vector<1x8x32xbf16>
    %1 = vector.shape_cast %0 : vector<1x8x32xbf16> to vector<8x32xbf16>
    %2 = arith.extf %1 : vector<8x32xbf16> to vector<8x32xf32>
    %3 = vector.shape_cast %1 : vector<8x32xbf16> to vector<1x8x32xbf16>
    %4 = vector.shape_cast %3 : vector<1x8x32xbf16> to vector<1x8x32xbf16>
    %5 = vector.broadcast %4 : vector<1x8x32xbf16> to vector<4x8x32xbf16>
    %c0_2 = arith.constant 0 : index
    %c0_3 = arith.constant 0 : index
    %c0_4 = arith.constant 0 : index
    %6 = vector.load %arg2[%c0_2, %c0_3, %c0_4] : memref<4x32x24xbf16, #tpu.memory_space<vmem>>, vector<4x32x24xbf16>
    %cst = arith.constant dense<0.000000e+00> : vector<4x8x24xf32>
    %7 = tpu.matmul %5, %6, %cst {dimension_numbers = #tpu.dot_dimension_numbers<[2], [1], [1], [2], [0, 0, 0, 1, 1, 2], [0], [0]>} : vector<4x8x32xbf16>, vector<4x32x24xbf16>, vector<4x8x24xf32> -> vector<4x8x24xf32>
    %c0_5 = arith.constant 0 : index
    %c0_6 = arith.constant 0 : index
    %c0_7 = arith.constant 0 : index
    %8 = vector.load %arg3[%c0_5, %c0_6, %c0_7] : memref<4x1x24xbf16, #tpu.memory_space<vmem>>, vector<4x1x24xbf16>
    %9 = arith.extf %8 : vector<4x1x24xbf16> to vector<4x1x24xf32>
    %10 = vector.broadcast %9 : vector<4x1x24xf32> to vector<4x8x24xf32>
    %11 = arith.addf %7, %10 : vector<4x8x24xf32>
    %12 = vector.extract_strided_slice %11 {offsets = [0, 0, 0], sizes = [4, 8, 8], strides = [1, 1, 1]} : vector<4x8x24xf32> to vector<4x8x8xf32>
    %13 = vector.extract_strided_slice %11 {offsets = [0, 0, 8], sizes = [4, 8, 8], strides = [1, 1, 1]} : vector<4x8x24xf32> to vector<4x8x8xf32>
    %14 = vector.extract_strided_slice %11 {offsets = [0, 0, 16], sizes = [4, 8, 8], strides = [1, 1, 1]} : vector<4x8x24xf32> to vector<4x8x8xf32>
    %15 = arith.truncf %12 : vector<4x8x8xf32> to vector<4x8x8xbf16>
    %16 = arith.truncf %13 : vector<4x8x8xf32> to vector<4x8x8xbf16>
    %17 = arith.truncf %14 : vector<4x8x8xf32> to vector<4x8x8xbf16>
    %cst_8 = arith.constant dense<0.000000e+00> : vector<4x8x8xf32>
    %18 = tpu.matmul %15, %16, %cst_8 {dimension_numbers = #tpu.dot_dimension_numbers<[2], [2], [1], [1], [0, 0, 0, 1, 1, 1], [0], [0]>} : vector<4x8x8xbf16>, vector<4x8x8xbf16>, vector<4x8x8xf32> -> vector<4x8x8xf32>
    %cst_9 = arith.constant dense<0xFF800000> : vector<4x8xf32>
    %19 = vector.multi_reduction <maximumf>, %18, %cst_9 [2] : vector<4x8x8xf32> to vector<4x8xf32>
    %20 = vector.shape_cast %19 : vector<4x8xf32> to vector<4x8x1xf32>
    %21 = vector.broadcast %20 : vector<4x8x1xf32> to vector<4x8x8xf32>
    %22 = arith.subf %18, %21 : vector<4x8x8xf32>
    %23 = math.exp %22 : vector<4x8x8xf32>
    %cst_10 = arith.constant dense<0.000000e+00> : vector<4x8xf32>
    %24 = vector.multi_reduction <add>, %23, %cst_10 [2] : vector<4x8x8xf32> to vector<4x8xf32>
    %25 = vector.shape_cast %24 : vector<4x8xf32> to vector<4x8x1xf32>
    %26 = arith.truncf %23 : vector<4x8x8xf32> to vector<4x8x8xbf16>
    %cst_11 = arith.constant dense<0.000000e+00> : vector<4x8x8xf32>
    %27 = tpu.matmul %26, %17, %cst_11 {dimension_numbers = #tpu.dot_dimension_numbers<[2], [1], [1], [2], [0, 0, 0, 1, 1, 2], [0], [0]>} : vector<4x8x8xbf16>, vector<4x8x8xbf16>, vector<4x8x8xf32> -> vector<4x8x8xf32>
    %28 = tpu.reciprocal %25 {approx = true} : vector<4x8x1xf32> -> vector<4x8x1xf32>
    %29 = vector.broadcast %28 : vector<4x8x1xf32> to vector<4x8x8xf32>
    %30 = arith.mulf %27, %29 : vector<4x8x8xf32>
    %31 = arith.truncf %30 : vector<4x8x8xf32> to vector<4x8x8xbf16>
    %32 = vector.extract_strided_slice %31 {offsets = [0, 0, 0], sizes = [1, 8, 8], strides = [1, 1, 1]} : vector<4x8x8xbf16> to vector<1x8x8xbf16>
    %33 = vector.shape_cast %32 : vector<1x8x8xbf16> to vector<8x8xbf16>
    %34 = vector.extract_strided_slice %31 {offsets = [1, 0, 0], sizes = [1, 8, 8], strides = [1, 1, 1]} : vector<4x8x8xbf16> to vector<1x8x8xbf16>
    %35 = vector.shape_cast %34 : vector<1x8x8xbf16> to vector<8x8xbf16>
    %36 = vector.extract_strided_slice %31 {offsets = [2, 0, 0], sizes = [1, 8, 8], strides = [1, 1, 1]} : vector<4x8x8xbf16> to vector<1x8x8xbf16>
    %37 = vector.shape_cast %36 : vector<1x8x8xbf16> to vector<8x8xbf16>
    %38 = vector.extract_strided_slice %31 {offsets = [3, 0, 0], sizes = [1, 8, 8], strides = [1, 1, 1]} : vector<4x8x8xbf16> to vector<1x8x8xbf16>
    %39 = vector.shape_cast %38 : vector<1x8x8xbf16> to vector<8x8xbf16>
    %40 = tpu.concatenate %33, %35, %37, %39 in 1 : vector<8x8xbf16>, vector<8x8xbf16>, vector<8x8xbf16>, vector<8x8xbf16> -> vector<8x32xbf16>
    %c0_12 = arith.constant 0 : index
    %c0_13 = arith.constant 0 : index
    %41 = vector.load %arg4[%c0_12, %c0_13] : memref<32x32xbf16, #tpu.memory_space<vmem>>, vector<32x32xbf16>
    %cst_14 = arith.constant dense<0.000000e+00> : vector<8x32xf32>
    %42 = tpu.matmul %40, %41, %cst_14 {dimension_numbers = #tpu.dot_dimension_numbers<[1], [0], [0], [1], [0, 0, 1, 1], [], []>} : vector<8x32xbf16>, vector<32x32xbf16>, vector<8x32xf32> -> vector<8x32xf32>
    %c0_15 = arith.constant 0 : index
    %c0_16 = arith.constant 0 : index
    %43 = vector.load %arg5[%c0_15, %c0_16] : memref<1x32xbf16, #tpu.memory_space<vmem>>, vector<1x32xbf16>
    %44 = arith.extf %43 : vector<1x32xbf16> to vector<1x32xf32>
    %45 = vector.broadcast %44 : vector<1x32xf32> to vector<8x32xf32>
    %46 = arith.addf %42, %45 : vector<8x32xf32>
    %47 = arith.addf %46, %2 : vector<8x32xf32>
    %cst_17 = arith.constant dense<0.000000e+00> : vector<8xf32>
    %48 = vector.multi_reduction <add>, %47, %cst_17 [1] : vector<8x32xf32> to vector<8xf32>
    %49 = vector.shape_cast %48 : vector<8xf32> to vector<8x1xf32>
    %cst_18 = arith.constant 3.200000e+01 : f32
    %50 = vector.broadcast %cst_18 : f32 to vector<8x1xf32>
    %51 = arith.divf %49, %50 : vector<8x1xf32>
    %52 = vector.broadcast %51 : vector<8x1xf32> to vector<8x32xf32>
    %53 = arith.subf %47, %52 : vector<8x32xf32>
    %54 = arith.mulf %53, %53 : vector<8x32xf32>
    %cst_19 = arith.constant dense<0.000000e+00> : vector<8xf32>
    %55 = vector.multi_reduction <add>, %54, %cst_19 [1] : vector<8x32xf32> to vector<8xf32>
    %56 = vector.shape_cast %55 : vector<8xf32> to vector<8x1xf32>
    %cst_20 = arith.constant 3.200000e+01 : f32
    %57 = vector.broadcast %cst_20 : f32 to vector<8x1xf32>
    %58 = arith.divf %56, %57 : vector<8x1xf32>
    %59 = vector.broadcast %51 : vector<8x1xf32> to vector<8x32xf32>
    %60 = arith.subf %47, %59 : vector<8x32xf32>
    %cst_21 = arith.constant 9.99999974E-6 : f32
    %61 = vector.broadcast %cst_21 : f32 to vector<8x1xf32>
    %62 = arith.addf %58, %61 : vector<8x1xf32>
    %63 = math.rsqrt %62 : vector<8x1xf32>
    %64 = vector.broadcast %63 : vector<8x1xf32> to vector<8x32xf32>
    %65 = arith.mulf %60, %64 : vector<8x32xf32>
    %c0_22 = arith.constant 0 : index
    %c0_23 = arith.constant 0 : index
    %66 = vector.load %arg10[%c0_22, %c0_23] : memref<1x32xf32, #tpu.memory_space<vmem>>, vector<1x32xf32>
    %67 = vector.broadcast %66 : vector<1x32xf32> to vector<8x32xf32>
    %68 = arith.mulf %65, %67 : vector<8x32xf32>
    %c0_24 = arith.constant 0 : index
    %c0_25 = arith.constant 0 : index
    %69 = vector.load %arg11[%c0_24, %c0_25] : memref<1x32xf32, #tpu.memory_space<vmem>>, vector<1x32xf32>
    %70 = vector.broadcast %69 : vector<1x32xf32> to vector<8x32xf32>
    %71 = arith.addf %68, %70 : vector<8x32xf32>
    %72 = arith.truncf %71 : vector<8x32xf32> to vector<8x32xbf16>
    %c0_26 = arith.constant 0 : index
    %c0_27 = arith.constant 0 : index
    %73 = vector.load %arg6[%c0_26, %c0_27] : memref<32x32xbf16, #tpu.memory_space<vmem>>, vector<32x32xbf16>
    %cst_28 = arith.constant dense<0.000000e+00> : vector<8x32xf32>
    %74 = tpu.matmul %72, %73, %cst_28 {dimension_numbers = #tpu.dot_dimension_numbers<[1], [0], [0], [1], [0, 0, 1, 1], [], []>} : vector<8x32xbf16>, vector<32x32xbf16>, vector<8x32xf32> -> vector<8x32xf32>
    %c0_29 = arith.constant 0 : index
    %c0_30 = arith.constant 0 : index
    %75 = vector.load %arg7[%c0_29, %c0_30] : memref<1x32xbf16, #tpu.memory_space<vmem>>, vector<1x32xbf16>
    %76 = arith.extf %75 : vector<1x32xbf16> to vector<1x32xf32>
    %77 = vector.broadcast %76 : vector<1x32xf32> to vector<8x32xf32>
    %78 = arith.addf %74, %77 : vector<8x32xf32>
    %cst_31 = arith.constant 0.00999999977 : f32
    %79 = vector.broadcast %cst_31 : f32 to vector<8x32xf32>
    %80 = arith.mulf %79, %78 : vector<8x32xf32>
    %81 = arith.maximumf %78, %80 : vector<8x32xf32>
    %82 = arith.truncf %81 : vector<8x32xf32> to vector<8x32xbf16>
    %c0_32 = arith.constant 0 : index
    %c0_33 = arith.constant 0 : index
    %83 = vector.load %arg8[%c0_32, %c0_33] : memref<32x32xbf16, #tpu.memory_space<vmem>>, vector<32x32xbf16>
    %cst_34 = arith.constant dense<0.000000e+00> : vector<8x32xf32>
    %84 = tpu.matmul %82, %83, %cst_34 {dimension_numbers = #tpu.dot_dimension_numbers<[1], [0], [0], [1], [0, 0, 1, 1], [], []>} : vector<8x32xbf16>, vector<32x32xbf16>, vector<8x32xf32> -> vector<8x32xf32>
    %c0_35 = arith.constant 0 : index
    %c0_36 = arith.constant 0 : index
    %85 = vector.load %arg9[%c0_35, %c0_36] : memref<1x32xbf16, #tpu.memory_space<vmem>>, vector<1x32xbf16>
    %86 = arith.extf %85 : vector<1x32xbf16> to vector<1x32xf32>
    %87 = vector.broadcast %86 : vector<1x32xf32> to vector<8x32xf32>
    %88 = arith.addf %84, %87 : vector<8x32xf32>
    %89 = arith.addf %88, %71 : vector<8x32xf32>
    %cst_37 = arith.constant dense<0.000000e+00> : vector<8xf32>
    %90 = vector.multi_reduction <add>, %89, %cst_37 [1] : vector<8x32xf32> to vector<8xf32>
    %91 = vector.shape_cast %90 : vector<8xf32> to vector<8x1xf32>
    %cst_38 = arith.constant 3.200000e+01 : f32
    %92 = vector.broadcast %cst_38 : f32 to vector<8x1xf32>
    %93 = arith.divf %91, %92 : vector<8x1xf32>
    %94 = vector.broadcast %93 : vector<8x1xf32> to vector<8x32xf32>
    %95 = arith.subf %89, %94 : vector<8x32xf32>
    %96 = arith.mulf %95, %95 : vector<8x32xf32>
    %cst_39 = arith.constant dense<0.000000e+00> : vector<8xf32>
    %97 = vector.multi_reduction <add>, %96, %cst_39 [1] : vector<8x32xf32> to vector<8xf32>
    %98 = vector.shape_cast %97 : vector<8xf32> to vector<8x1xf32>
    %cst_40 = arith.constant 3.200000e+01 : f32
    %99 = vector.broadcast %cst_40 : f32 to vector<8x1xf32>
    %100 = arith.divf %98, %99 : vector<8x1xf32>
    %101 = vector.broadcast %93 : vector<8x1xf32> to vector<8x32xf32>
    %102 = arith.subf %89, %101 : vector<8x32xf32>
    %cst_41 = arith.constant 9.99999974E-6 : f32
    %103 = vector.broadcast %cst_41 : f32 to vector<8x1xf32>
    %104 = arith.addf %100, %103 : vector<8x1xf32>
    %105 = math.rsqrt %104 : vector<8x1xf32>
    %106 = vector.broadcast %105 : vector<8x1xf32> to vector<8x32xf32>
    %107 = arith.mulf %102, %106 : vector<8x32xf32>
    %c0_42 = arith.constant 0 : index
    %c0_43 = arith.constant 0 : index
    %108 = vector.load %arg12[%c0_42, %c0_43] : memref<1x32xf32, #tpu.memory_space<vmem>>, vector<1x32xf32>
    %109 = vector.broadcast %108 : vector<1x32xf32> to vector<8x32xf32>
    %110 = arith.mulf %107, %109 : vector<8x32xf32>
    %c0_44 = arith.constant 0 : index
    %c0_45 = arith.constant 0 : index
    %111 = vector.load %arg13[%c0_44, %c0_45] : memref<1x32xf32, #tpu.memory_space<vmem>>, vector<1x32xf32>
    %112 = vector.broadcast %111 : vector<1x32xf32> to vector<8x32xf32>
    %113 = arith.addf %110, %112 : vector<8x32xf32>
    %114 = vector.shape_cast %113 : vector<8x32xf32> to vector<1x8x32xf32>
    %115 = arith.truncf %114 : vector<1x8x32xf32> to vector<1x8x32xbf16>
    %c0_46 = arith.constant 0 : index
    %c0_47 = arith.constant 0 : index
    %c0_48 = arith.constant 0 : index
    %116 = vector.load %arg14[%c0_46, %c0_47, %c0_48] : memref<1x8x32xbf16, #tpu.memory_space<vmem>>, vector<1x8x32xbf16>
    tpu.vector_store %arg14[%c0_46, %c0_47, %c0_48], %115 {strides = array<i32>} : memref<1x8x32xbf16, #tpu.memory_space<vmem>>, vector<1x8x32xbf16>,
    return
  }
  func.func @transform_0(%arg0: i32) -> (i32, i32, i32) {
    %c0_i32 = arith.constant 0 : i32
    %c0_i32_0 = arith.constant 0 : i32
    %c0_i32_1 = arith.constant 0 : i32
    return %arg0, %c0_i32, %c0_i32_0 : i32, i32, i32
  }
  func.func @transform_1(%arg0: i32) -> (i32, i32, i32) {
    %c0_i32 = arith.constant 0 : i32
    %c0_i32_0 = arith.constant 0 : i32
    %c0_i32_1 = arith.constant 0 : i32
    %c0_i32_2 = arith.constant 0 : i32
    return %c0_i32, %c0_i32_0, %c0_i32_1 : i32, i32, i32
  }
  func.func @transform_2(%arg0: i32) -> (i32, i32, i32) {
    %c0_i32 = arith.constant 0 : i32
    %c0_i32_0 = arith.constant 0 : i32
    %c0_i32_1 = arith.constant 0 : i32
    %c0_i32_2 = arith.constant 0 : i32
    return %c0_i32, %c0_i32_0, %c0_i32_1 : i32, i32, i32
  }
  func.func @transform_3(%arg0: i32) -> (i32, i32) {
    %c0_i32 = arith.constant 0 : i32
    %c0_i32_0 = arith.constant 0 : i32
    %c0_i32_1 = arith.constant 0 : i32
    return %c0_i32, %c0_i32_0 : i32, i32
  }
  func.func @transform_4(%arg0: i32) -> (i32, i32) {
    %c0_i32 = arith.constant 0 : i32
    %c0_i32_0 = arith.constant 0 : i32
    %c0_i32_1 = arith.constant 0 : i32
    return %c0_i32, %c0_i32_0 : i32, i32
  }
  func.func @transform_5(%arg0: i32) -> (i32, i32) {
    %c0_i32 = arith.constant 0 : i32
    %c0_i32_0 = arith.constant 0 : i32
    %c0_i32_1 = arith.constant 0 : i32
    return %c0_i32, %c0_i32_0 : i32, i32
  }
  func.func @transform_6(%arg0: i32) -> (i32, i32) {
    %c0_i32 = arith.constant 0 : i32
    %c0_i32_0 = arith.constant 0 : i32
    %c0_i32_1 = arith.constant 0 : i32
    return %c0_i32, %c0_i32_0 : i32, i32
  }
  func.func @transform_7(%arg0: i32) -> (i32, i32) {
    %c0_i32 = arith.constant 0 : i32
    %c0_i32_0 = arith.constant 0 : i32
    %c0_i32_1 = arith.constant 0 : i32
    return %c0_i32, %c0_i32_0 : i32, i32
  }
  func.func @transform_8(%arg0: i32) -> (i32, i32) {
    %c0_i32 = arith.constant 0 : i32
    %c0_i32_0 = arith.constant 0 : i32
    %c0_i32_1 = arith.constant 0 : i32
    return %c0_i32, %c0_i32_0 : i32, i32
  }
  func.func @transform_9(%arg0: i32) -> (i32, i32) {
    %c0_i32 = arith.constant 0 : i32
    %c0_i32_0 = arith.constant 0 : i32
    %c0_i32_1 = arith.constant 0 : i32
    return %c0_i32, %c0_i32_0 : i32, i32
  }
  func.func @transform_10(%arg0: i32) -> (i32, i32) {
    %c0_i32 = arith.constant 0 : i32
    %c0_i32_0 = arith.constant 0 : i32
    %c0_i32_1 = arith.constant 0 : i32
    return %c0_i32, %c0_i32_0 : i32, i32
  }
  func.func @transform_11(%arg0: i32) -> (i32, i32) {
    %c0_i32 = arith.constant 0 : i32
    %c0_i32_0 = arith.constant 0 : i32
    %c0_i32_1 = arith.constant 0 : i32
    return %c0_i32, %c0_i32_0 : i32, i32
  }
  func.func @transform_12(%arg0: i32) -> (i32, i32) {
    %c0_i32 = arith.constant 0 : i32
    %c0_i32_0 = arith.constant 0 : i32
    %c0_i32_1 = arith.constant 0 : i32
    return %c0_i32, %c0_i32_0 : i32, i32
  }
  func.func @transform_13(%arg0: i32) -> (i32, i32, i32) {
    %c0_i32 = arith.constant 0 : i32
    %c0_i32_0 = arith.constant 0 : i32
    %c0_i32_1 = arith.constant 0 : i32
    return %arg0, %c0_i32, %c0_i32_0 : i32, i32, i32
  }
}

module attributes {stable_mosaic.version = 11 : i64} {
  func.func @_transformer_block_kernel(%arg0: i32, %arg1: memref<1x8x32xbf16, #tpu.memory_space<vmem>>, %arg2: memref<4x32x24xbf16, #tpu.memory_space<vmem>>, %arg3: memref<4x1x24xbf16, #tpu.memory_space<vmem>>, %arg4: memref<32x32xbf16, #tpu.memory_space<vmem>>, %arg5: memref<1x32xbf16, #tpu.memory_space<vmem>>, %arg6: memref<32x32xbf16, #tpu.memory_space<vmem>>, %arg7: memref<1x32xbf16, #tpu.memory_space<vmem>>, %arg8: memref<32x32xbf16, #tpu.memory_space<vmem>>, %arg9: memref<1x32xbf16, #tpu.memory_space<vmem>>, %arg10: memref<1x32xf32, #tpu.memory_space<vmem>>, %arg11: memref<1x32xf32, #tpu.memory_space<vmem>>, %arg12: memref<1x32xf32, #tpu.memory_space<vmem>>, %arg13: memref<1x32xf32, #tpu.memory_space<vmem>>, %arg14: memref<1x8x32xbf16, #tpu.memory_space<vmem>>) attributes {dimension_semantics = [#tpu.dimension_semantics<parallel>], iteration_bounds = array<i64: 2>, scalar_prefetch = 0 : i64, scratch_operands = 0 : i64, tpu.core_type = #tpu.core_type<tc>, window_params = [{transform_indices = @transform_0, window_bounds = array<i64: 1, 8, 32>}, {pipeline_mode = #tpu.pipeline_mode<synchronous>, transform_indices = @transform_1, window_bounds = array<i64: 4, 32, 24>}, {pipeline_mode = #tpu.pipeline_mode<synchronous>, transform_indices = @transform_2, window_bounds = array<i64: 4, 1, 24>}, {pipeline_mode = #tpu.pipeline_mode<synchronous>, transform_indices = @transform_3, window_bounds = array<i64: 32, 32>}, {pipeline_mode = #tpu.pipeline_mode<synchronous>, transform_indices = @transform_4, window_bounds = array<i64: 1, 32>}, {pipeline_mode = #tpu.pipeline_mode<synchronous>, transform_indices = @transform_5, window_bounds = array<i64: 32, 32>}, {pipeline_mode = #tpu.pipeline_mode<synchronous>, transform_indices = @transform_6, window_bounds = array<i64: 1, 32>}, {pipeline_mode = #tpu.pipeline_mode<synchronous>, transform_indices = @transform_7, window_bounds = array<i64: 32, 32>}, {pipeline_mode = #tpu.pipeline_mode<synchronous>, transform_indices = @transform_8, window_bounds = array<i64: 1, 32>}, {pipeline_mode = #tpu.pipeline_mode<synchronous>, transform_indices = @transform_9, window_bounds = array<i64: 1, 32>}, {pipeline_mode = #tpu.pipeline_mode<synchronous>, transform_indices = @transform_10, window_bounds = array<i64: 1, 32>}, {pipeline_mode = #tpu.pipeline_mode<synchronous>, transform_indices = @transform_11, window_bounds = array<i64: 1, 32>}, {pipeline_mode = #tpu.pipeline_mode<synchronous>, transform_indices = @transform_12, window_bounds = array<i64: 1, 32>}, {transform_indices = @transform_13, window_bounds = array<i64: 1, 8, 32>}]} {
    %c0 = arith.constant 0 : index
    %c0_0 = arith.constant 0 : index
    %c0_1 = arith.constant 0 : index
    %0 = vector.load %arg1[%c0, %c0_0, %c0_1] : memref<1x8x32xbf16, #tpu.memory_space<vmem>>, vector<1x8x32xbf16>
    %1 = vector.shape_cast %0 : vector<1x8x32xbf16> to vector<8x32xbf16>
    %2 = arith.extf %1 : vector<8x32xbf16> to vector<8x32xf32>
    %3 = vector.shape_cast %1 : vector<8x32xbf16> to vector<1x8x32xbf16>
    %4 = vector.shape_cast %3 : vector<1x8x32xbf16> to vector<1x8x32xbf16>
    %5 = vector.broadcast %4 : vector<1x8x32xbf16> to vector<4x8x32xbf16>
    %c0_2 = arith.constant 0 : index
    %c0_3 = arith.constant 0 : index
    %c0_4 = arith.constant 0 : index
    %6 = vector.load %arg2[%c0_2, %c0_3, %c0_4] : memref<4x32x24xbf16, #tpu.memory_space<vmem>>, vector<4x32x24xbf16>
    %cst = arith.constant dense<0.000000e+00> : vector<4x8x24xf32>
    %7 = tpu.matmul %5, %6, %cst {dimension_numbers = #tpu.dot_dimension_numbers<[2], [1], [1], [2], [0, 0, 0, 1, 1, 2], [0], [0]>} : vector<4x8x32xbf16>, vector<4x32x24xbf16>, vector<4x8x24xf32> -> vector<4x8x24xf32>
    %c0_5 = arith.constant 0 : index
    %c0_6 = arith.constant 0 : index
    %c0_7 = arith.constant 0 : index
    %8 = vector.load %arg3[%c0_5, %c0_6, %c0_7] : memref<4x1x24xbf16, #tpu.memory_space<vmem>>, vector<4x1x24xbf16>
    %9 = arith.extf %8 : vector<4x1x24xbf16> to vector<4x1x24xf32>
    %10 = vector.broadcast %9 : vector<4x1x24xf32> to vector<4x8x24xf32>
    %11 = arith.addf %7, %10 : vector<4x8x24xf32>
    %12 = vector.extract_strided_slice %11 {offsets = [0, 0, 0], sizes = [4, 8, 8], strides = [1, 1, 1]} : vector<4x8x24xf32> to vector<4x8x8xf32>
    %13 = vector.extract_strided_slice %11 {offsets = [0, 0, 8], sizes = [4, 8, 8], strides = [1, 1, 1]} : vector<4x8x24xf32> to vector<4x8x8xf32>
    %14 = vector.extract_strided_slice %11 {offsets = [0, 0, 16], sizes = [4, 8, 8], strides = [1, 1, 1]} : vector<4x8x24xf32> to vector<4x8x8xf32>
    %15 = arith.truncf %12 : vector<4x8x8xf32> to vector<4x8x8xbf16>
    %16 = arith.truncf %13 : vector<4x8x8xf32> to vector<4x8x8xbf16>
    %17 = arith.truncf %14 : vector<4x8x8xf32> to vector<4x8x8xbf16>
    %cst_8 = arith.constant dense<0.000000e+00> : vector<4x8x8xf32>
    %18 = tpu.matmul %15, %16, %cst_8 {dimension_numbers = #tpu.dot_dimension_numbers<[2], [2], [1], [1], [0, 0, 0, 1, 1, 1], [0], [0]>} : vector<4x8x8xbf16>, vector<4x8x8xbf16>, vector<4x8x8xf32> -> vector<4x8x8xf32>
    %cst_9 = arith.constant dense<0xFF800000> : vector<4x8xf32>
    %19 = vector.multi_reduction <maximumf>, %18, %cst_9 [2] : vector<4x8x8xf32> to vector<4x8xf32>
    %20 = vector.shape_cast %19 : vector<4x8xf32> to vector<4x8x1xf32>
    %21 = vector.broadcast %20 : vector<4x8x1xf32> to vector<4x8x8xf32>
    %22 = arith.subf %18, %21 : vector<4x8x8xf32>
    %23 = math.exp %22 : vector<4x8x8xf32>
    %cst_10 = arith.constant dense<0.000000e+00> : vector<4x8xf32>
    %24 = vector.multi_reduction <add>, %23, %cst_10 [2] : vector<4x8x8xf32> to vector<4x8xf32>
    %25 = vector.shape_cast %24 : vector<4x8xf32> to vector<4x8x1xf32>
    %26 = arith.truncf %23 : vector<4x8x8xf32> to vector<4x8x8xbf16>
    %cst_11 = arith.constant dense<0.000000e+00> : vector<4x8x8xf32>
    %27 = tpu.matmul %26, %17, %cst_11 {dimension_numbers = #tpu.dot_dimension_numbers<[2], [1], [1], [2], [0, 0, 0, 1, 1, 2], [0], [0]>} : vector<4x8x8xbf16>, vector<4x8x8xbf16>, vector<4x8x8xf32> -> vector<4x8x8xf32>
    %28 = tpu.reciprocal %25 {approx = true} : vector<4x8x1xf32> -> vector<4x8x1xf32>
    %29 = vector.broadcast %28 : vector<4x8x1xf32> to vector<4x8x8xf32>
    %30 = arith.mulf %27, %29 : vector<4x8x8xf32>
    %31 = arith.truncf %30 : vector<4x8x8xf32> to vector<4x8x8xbf16>
    %32 = vector.extract_strided_slice %31 {offsets = [0, 0, 0], sizes = [1, 8, 8], strides = [1, 1, 1]} : vector<4x8x8xbf16> to vector<1x8x8xbf16>
    %33 = vector.shape_cast %32 : vector<1x8x8xbf16> to vector<8x8xbf16>
    %34 = vector.extract_strided_slice %31 {offsets = [1, 0, 0], sizes = [1, 8, 8], strides = [1, 1, 1]} : vector<4x8x8xbf16> to vector<1x8x8xbf16>
    %35 = vector.shape_cast %34 : vector<1x8x8xbf16> to vector<8x8xbf16>
    %36 = vector.extract_strided_slice %31 {offsets = [2, 0, 0], sizes = [1, 8, 8], strides = [1, 1, 1]} : vector<4x8x8xbf16> to vector<1x8x8xbf16>
    %37 = vector.shape_cast %36 : vector<1x8x8xbf16> to vector<8x8xbf16>
    %38 = vector.extract_strided_slice %31 {offsets = [3, 0, 0], sizes = [1, 8, 8], strides = [1, 1, 1]} : vector<4x8x8xbf16> to vector<1x8x8xbf16>
    %39 = vector.shape_cast %38 : vector<1x8x8xbf16> to vector<8x8xbf16>
    %40 = tpu.concatenate %33, %35, %37, %39 in 1 : vector<8x8xbf16>, vector<8x8xbf16>, vector<8x8xbf16>, vector<8x8xbf16> -> vector<8x32xbf16>
    %c0_12 = arith.constant 0 : index
    %c0_13 = arith.constant 0 : index
    %41 = vector.load %arg4[%c0_12, %c0_13] : memref<32x32xbf16, #tpu.memory_space<vmem>>, vector<32x32xbf16>
    %cst_14 = arith.constant dense<0.000000e+00> : vector<8x32xf32>
    %42 = tpu.matmul %40, %41, %cst_14 {dimension_numbers = #tpu.dot_dimension_numbers<[1], [0], [0], [1], [0, 0, 1, 1], [], []>} : vector<8x32xbf16>, vector<32x32xbf16>, vector<8x32xf32> -> vector<8x32xf32>
    %c0_15 = arith.constant 0 : index
    %c0_16 = arith.constant 0 : index
    %43 = vector.load %arg5[%c0_15, %c0_16] : memref<1x32xbf16, #tpu.memory_space<vmem>>, vector<1x32xbf16>
    %44 = arith.extf %43 : vector<1x32xbf16> to vector<1x32xf32>
    %45 = vector.broadcast %44 : vector<1x32xf32> to vector<8x32xf32>
    %46 = arith.addf %42, %45 : vector<8x32xf32>
    %47 = arith.addf %46, %2 : vector<8x32xf32>
    %cst_17 = arith.constant dense<0.000000e+00> : vector<8xf32>
    %48 = vector.multi_reduction <add>, %47, %cst_17 [1] : vector<8x32xf32> to vector<8xf32>
    %49 = vector.shape_cast %48 : vector<8xf32> to vector<8x1xf32>
    %cst_18 = arith.constant 3.200000e+01 : f32
    %50 = vector.broadcast %cst_18 : f32 to vector<8x1xf32>
    %51 = arith.divf %49, %50 : vector<8x1xf32>
    %52 = vector.broadcast %51 : vector<8x1xf32> to vector<8x32xf32>
    %53 = arith.subf %47, %52 : vector<8x32xf32>
    %54 = arith.mulf %53, %53 : vector<8x32xf32>
    %cst_19 = arith.constant dense<0.000000e+00> : vector<8xf32>
    %55 = vector.multi_reduction <add>, %54, %cst_19 [1] : vector<8x32xf32> to vector<8xf32>
    %56 = vector.shape_cast %55 : vector<8xf32> to vector<8x1xf32>
    %cst_20 = arith.constant 3.200000e+01 : f32
    %57 = vector.broadcast %cst_20 : f32 to vector<8x1xf32>
    %58 = arith.divf %56, %57 : vector<8x1xf32>
    %59 = vector.broadcast %51 : vector<8x1xf32> to vector<8x32xf32>
    %60 = arith.subf %47, %59 : vector<8x32xf32>
    %cst_21 = arith.constant 9.99999974E-6 : f32
    %61 = vector.broadcast %cst_21 : f32 to vector<8x1xf32>
    %62 = arith.addf %58, %61 : vector<8x1xf32>
    %63 = math.rsqrt %62 : vector<8x1xf32>
    %64 = vector.broadcast %63 : vector<8x1xf32> to vector<8x32xf32>
    %65 = arith.mulf %60, %64 : vector<8x32xf32>
    %c0_22 = arith.constant 0 : index
    %c0_23 = arith.constant 0 : index
    %66 = vector.load %arg10[%c0_22, %c0_23] : memref<1x32xf32, #tpu.memory_space<vmem>>, vector<1x32xf32>
    %67 = vector.broadcast %66 : vector<1x32xf32> to vector<8x32xf32>
    %68 = arith.mulf %65, %67 : vector<8x32xf32>
    %c0_24 = arith.constant 0 : index
    %c0_25 = arith.constant 0 : index
    %69 = vector.load %arg11[%c0_24, %c0_25] : memref<1x32xf32, #tpu.memory_space<vmem>>, vector<1x32xf32>
    %70 = vector.broadcast %69 : vector<1x32xf32> to vector<8x32xf32>
    %71 = arith.addf %68, %70 : vector<8x32xf32>
    %72 = arith.truncf %71 : vector<8x32xf32> to vector<8x32xbf16>
    %c0_26 = arith.constant 0 : index
    %c0_27 = arith.constant 0 : index
    %73 = vector.load %arg6[%c0_26, %c0_27] : memref<32x32xbf16, #tpu.memory_space<vmem>>, vector<32x32xbf16>
    %cst_28 = arith.constant dense<0.000000e+00> : vector<8x32xf32>
    %74 = tpu.matmul %72, %73, %cst_28 {dimension_numbers = #tpu.dot_dimension_numbers<[1], [0], [0], [1], [0, 0, 1, 1], [], []>} : vector<8x32xbf16>, vector<32x32xbf16>, vector<8x32xf32> -> vector<8x32xf32>
    %c0_29 = arith.constant 0 : index
    %c0_30 = arith.constant 0 : index
    %75 = vector.load %arg7[%c0_29, %c0_30] : memref<1x32xbf16, #tpu.memory_space<vmem>>, vector<1x32xbf16>
    %76 = arith.extf %75 : vector<1x32xbf16> to vector<1x32xf32>
    %77 = vector.broadcast %76 : vector<1x32xf32> to vector<8x32xf32>
    %78 = arith.addf %74, %77 : vector<8x32xf32>
    %cst_31 = arith.constant 0.00999999977 : f32
    %79 = vector.broadcast %cst_31 : f32 to vector<8x32xf32>
    %80 = arith.mulf %79, %78 : vector<8x32xf32>
    %81 = arith.maximumf %78, %80 : vector<8x32xf32>
    %82 = arith.truncf %81 : vector<8x32xf32> to vector<8x32xbf16>
    %c0_32 = arith.constant 0 : index
    %c0_33 = arith.constant 0 : index
    %83 = vector.load %arg8[%c0_32, %c0_33] : memref<32x32xbf16, #tpu.memory_space<vmem>>, vector<32x32xbf16>
    %cst_34 = arith.constant dense<0.000000e+00> : vector<8x32xf32>
    %84 = tpu.matmul %82, %83, %cst_34 {dimension_numbers = #tpu.dot_dimension_numbers<[1], [0], [0], [1], [0, 0, 1, 1], [], []>} : vector<8x32xbf16>, vector<32x32xbf16>, vector<8x32xf32> -> vector<8x32xf32>
    %c0_35 = arith.constant 0 : index
    %c0_36 = arith.constant 0 : index
    %85 = vector.load %arg9[%c0_35, %c0_36] : memref<1x32xbf16, #tpu.memory_space<vmem>>, vector<1x32xbf16>
    %86 = arith.extf %85 : vector<1x32xbf16> to vector<1x32xf32>
    %87 = vector.broadcast %86 : vector<1x32xf32> to vector<8x32xf32>
    %88 = arith.addf %84, %87 : vector<8x32xf32>
    %89 = arith.addf %88, %71 : vector<8x32xf32>
    %cst_37 = arith.constant dense<0.000000e+00> : vector<8xf32>
    %90 = vector.multi_reduction <add>, %89, %cst_37 [1] : vector<8x32xf32> to vector<8xf32>
    %91 = vector.shape_cast %90 : vector<8xf32> to vector<8x1xf32>
    %cst_38 = arith.constant 3.200000e+01 : f32
    %92 = vector.broadcast %cst_38 : f32 to vector<8x1xf32>
    %93 = arith.divf %91, %92 : vector<8x1xf32>
    %94 = vector.broadcast %93 : vector<8x1xf32> to vector<8x32xf32>
    %95 = arith.subf %89, %94 : vector<8x32xf32>
    %96 = arith.mulf %95, %95 : vector<8x32xf32>
    %cst_39 = arith.constant dense<0.000000e+00> : vector<8xf32>
    %97 = vector.multi_reduction <add>, %96, %cst_39 [1] : vector<8x32xf32> to vector<8xf32>
    %98 = vector.shape_cast %97 : vector<8xf32> to vector<8x1xf32>
    %cst_40 = arith.constant 3.200000e+01 : f32
    %99 = vector.broadcast %cst_40 : f32 to vector<8x1xf32>
    %100 = arith.divf %98, %99 : vector<8x1xf32>
    %101 = vector.broadcast %93 : vector<8x1xf32> to vector<8x32xf32>
    %102 = arith.subf %89, %101 : vector<8x32xf32>
    %cst_41 = arith.constant 9.99999974E-6 : f32
    %103 = vector.broadcast %cst_41 : f32 to vector<8x1xf32>
    %104 = arith.addf %100, %103 : vector<8x1xf32>
    %105 = math.rsqrt %104 : vector<8x1xf32>
    %106 = vector.broadcast %105 : vector<8x1xf32> to vector<8x32xf32>
    %107 = arith.mulf %102, %106 : vector<8x32xf32>
    %c0_42 = arith.constant 0 : index
    %c0_43 = arith.constant 0 : index
    %108 = vector.load %arg12[%c0_42, %c0_43] : memref<1x32xf32, #tpu.memory_space<vmem>>, vector<1x32xf32>
    %109 = vector.broadcast %108 : vector<1x32xf32> to vector<8x32xf32>
    %110 = arith.mulf %107, %109 : vector<8x32xf32>
    %c0_44 = arith.constant 0 : index
    %c0_45 = arith.constant 0 : index
    %111 = vector.load %arg13[%c0_44, %c0_45] : memref<1x32xf32, #tpu.memory_space<vmem>>, vector<1x32xf32>
    %112 = vector.broadcast %111 : vector<1x32xf32> to vector<8x32xf32>
    %113 = arith.addf %110, %112 : vector<8x32xf32>
    %114 = vector.shape_cast %113 : vector<8x32xf32> to vector<1x8x32xf32>
    %115 = arith.truncf %114 : vector<1x8x32xf32> to vector<1x8x32xbf16>
    %c0_46 = arith.constant 0 : index
    %c0_47 = arith.constant 0 : index
    %c0_48 = arith.constant 0 : index
    %116 = vector.load %arg14[%c0_46, %c0_47, %c0_48] : memref<1x8x32xbf16, #tpu.memory_space<vmem>>, vector<1x8x32xbf16>
    tpu.vector_store %arg14[%c0_46, %c0_47, %c0_48], %115 {strides = array<i32>} : memref<1x8x32xbf16, #tpu.memory_space<vmem>>, vector<1x8x32xbf16>,
    return
  }
  func.func @transform_0(%arg0: i32) -> (i32, i32, i32) {
    %c0_i32 = arith.constant 0 : i32
    %c0_i32_0 = arith.constant 0 : i32
    %c0_i32_1 = arith.constant 0 : i32
    return %arg0, %c0_i32, %c0_i32_0 : i32, i32, i32
  }
  func.func @transform_1(%arg0: i32) -> (i32, i32, i32) {
    %c0_i32 = arith.constant 0 : i32
    %c0_i32_0 = arith.constant 0 : i32
    %c0_i32_1 = arith.constant 0 : i32
    %c0_i32_2 = arith.constant 0 : i32
    return %c0_i32, %c0_i32_0, %c0_i32_1 : i32, i32, i32
  }
  func.func @transform_2(%arg0: i32) -> (i32, i32, i32) {
    %c0_i32 = arith.constant 0 : i32
    %c0_i32_0 = arith.constant 0 : i32
    %c0_i32_1 = arith.constant 0 : i32
    %c0_i32_2 = arith.constant 0 : i32
    return %c0_i32, %c0_i32_0, %c0_i32_1 : i32, i32, i32
  }
  func.func @transform_3(%arg0: i32) -> (i32, i32) {
    %c0_i32 = arith.constant 0 : i32
    %c0_i32_0 = arith.constant 0 : i32
    %c0_i32_1 = arith.constant 0 : i32
    return %c0_i32, %c0_i32_0 : i32, i32
  }
  func.func @transform_4(%arg0: i32) -> (i32, i32) {
    %c0_i32 = arith.constant 0 : i32
    %c0_i32_0 = arith.constant 0 : i32
    %c0_i32_1 = arith.constant 0 : i32
    return %c0_i32, %c0_i32_0 : i32, i32
  }
  func.func @transform_5(%arg0: i32) -> (i32, i32) {
    %c0_i32 = arith.constant 0 : i32
    %c0_i32_0 = arith.constant 0 : i32
    %c0_i32_1 = arith.constant 0 : i32
    return %c0_i32, %c0_i32_0 : i32, i32
  }
  func.func @transform_6(%arg0: i32) -> (i32, i32) {
    %c0_i32 = arith.constant 0 : i32
    %c0_i32_0 = arith.constant 0 : i32
    %c0_i32_1 = arith.constant 0 : i32
    return %c0_i32, %c0_i32_0 : i32, i32
  }
  func.func @transform_7(%arg0: i32) -> (i32, i32) {
    %c0_i32 = arith.constant 0 : i32
    %c0_i32_0 = arith.constant 0 : i32
    %c0_i32_1 = arith.constant 0 : i32
    return %c0_i32, %c0_i32_0 : i32, i32
  }
  func.func @transform_8(%arg0: i32) -> (i32, i32) {
    %c0_i32 = arith.constant 0 : i32
    %c0_i32_0 = arith.constant 0 : i32
    %c0_i32_1 = arith.constant 0 : i32
    return %c0_i32, %c0_i32_0 : i32, i32
  }
  func.func @transform_9(%arg0: i32) -> (i32, i32) {
    %c0_i32 = arith.constant 0 : i32
    %c0_i32_0 = arith.constant 0 : i32
    %c0_i32_1 = arith.constant 0 : i32
    return %c0_i32, %c0_i32_0 : i32, i32
  }
  func.func @transform_10(%arg0: i32) -> (i32, i32) {
    %c0_i32 = arith.constant 0 : i32
    %c0_i32_0 = arith.constant 0 : i32
    %c0_i32_1 = arith.constant 0 : i32
    return %c0_i32, %c0_i32_0 : i32, i32
  }
  func.func @transform_11(%arg0: i32) -> (i32, i32) {
    %c0_i32 = arith.constant 0 : i32
    %c0_i32_0 = arith.constant 0 : i32
    %c0_i32_1 = arith.constant 0 : i32
    return %c0_i32, %c0_i32_0 : i32, i32
  }
  func.func @transform_12(%arg0: i32) -> (i32, i32) {
    %c0_i32 = arith.constant 0 : i32
    %c0_i32_0 = arith.constant 0 : i32
    %c0_i32_1 = arith.constant 0 : i32
    return %c0_i32, %c0_i32_0 : i32, i32
  }
  func.func @transform_13(%arg0: i32) -> (i32, i32, i32) {
    %c0_i32 = arith.constant 0 : i32
    %c0_i32_0 = arith.constant 0 : i32
    %c0_i32_1 = arith.constant 0 : i32
    return %arg0, %c0_i32, %c0_i32_0 : i32, i32, i32
  }
}

module attributes {stable_mosaic.version = 11 : i64} {
  func.func @_transformer_block_kernel(%arg0: i32, %arg1: memref<1x8x32xbf16, #tpu.memory_space<vmem>>, %arg2: memref<4x32x24xbf16, #tpu.memory_space<vmem>>, %arg3: memref<4x1x24xbf16, #tpu.memory_space<vmem>>, %arg4: memref<32x32xbf16, #tpu.memory_space<vmem>>, %arg5: memref<1x32xbf16, #tpu.memory_space<vmem>>, %arg6: memref<32x32xbf16, #tpu.memory_space<vmem>>, %arg7: memref<1x32xbf16, #tpu.memory_space<vmem>>, %arg8: memref<32x32xbf16, #tpu.memory_space<vmem>>, %arg9: memref<1x32xbf16, #tpu.memory_space<vmem>>, %arg10: memref<1x32xf32, #tpu.memory_space<vmem>>, %arg11: memref<1x32xf32, #tpu.memory_space<vmem>>, %arg12: memref<1x32xf32, #tpu.memory_space<vmem>>, %arg13: memref<1x32xf32, #tpu.memory_space<vmem>>, %arg14: memref<1x8x32xbf16, #tpu.memory_space<vmem>>) attributes {dimension_semantics = [#tpu.dimension_semantics<parallel>], iteration_bounds = array<i64: 2>, scalar_prefetch = 0 : i64, scratch_operands = 0 : i64, tpu.core_type = #tpu.core_type<tc>, window_params = [{transform_indices = @transform_0, window_bounds = array<i64: 1, 8, 32>}, {pipeline_mode = #tpu.pipeline_mode<synchronous>, transform_indices = @transform_1, window_bounds = array<i64: 4, 32, 24>}, {pipeline_mode = #tpu.pipeline_mode<synchronous>, transform_indices = @transform_2, window_bounds = array<i64: 4, 1, 24>}, {pipeline_mode = #tpu.pipeline_mode<synchronous>, transform_indices = @transform_3, window_bounds = array<i64: 32, 32>}, {pipeline_mode = #tpu.pipeline_mode<synchronous>, transform_indices = @transform_4, window_bounds = array<i64: 1, 32>}, {pipeline_mode = #tpu.pipeline_mode<synchronous>, transform_indices = @transform_5, window_bounds = array<i64: 32, 32>}, {pipeline_mode = #tpu.pipeline_mode<synchronous>, transform_indices = @transform_6, window_bounds = array<i64: 1, 32>}, {pipeline_mode = #tpu.pipeline_mode<synchronous>, transform_indices = @transform_7, window_bounds = array<i64: 32, 32>}, {pipeline_mode = #tpu.pipeline_mode<synchronous>, transform_indices = @transform_8, window_bounds = array<i64: 1, 32>}, {pipeline_mode = #tpu.pipeline_mode<synchronous>, transform_indices = @transform_9, window_bounds = array<i64: 1, 32>}, {pipeline_mode = #tpu.pipeline_mode<synchronous>, transform_indices = @transform_10, window_bounds = array<i64: 1, 32>}, {pipeline_mode = #tpu.pipeline_mode<synchronous>, transform_indices = @transform_11, window_bounds = array<i64: 1, 32>}, {pipeline_mode = #tpu.pipeline_mode<synchronous>, transform_indices = @transform_12, window_bounds = array<i64: 1, 32>}, {transform_indices = @transform_13, window_bounds = array<i64: 1, 8, 32>}]} {
    %c0 = arith.constant 0 : index
    %c0_0 = arith.constant 0 : index
    %c0_1 = arith.constant 0 : index
    %0 = vector.load %arg1[%c0, %c0_0, %c0_1] : memref<1x8x32xbf16, #tpu.memory_space<vmem>>, vector<1x8x32xbf16>
    %1 = vector.shape_cast %0 : vector<1x8x32xbf16> to vector<8x32xbf16>
    %2 = arith.extf %1 : vector<8x32xbf16> to vector<8x32xf32>
    %3 = vector.shape_cast %1 : vector<8x32xbf16> to vector<1x8x32xbf16>
    %4 = vector.shape_cast %3 : vector<1x8x32xbf16> to vector<1x8x32xbf16>
    %5 = vector.broadcast %4 : vector<1x8x32xbf16> to vector<4x8x32xbf16>
    %c0_2 = arith.constant 0 : index
    %c0_3 = arith.constant 0 : index
    %c0_4 = arith.constant 0 : index
    %6 = vector.load %arg2[%c0_2, %c0_3, %c0_4] : memref<4x32x24xbf16, #tpu.memory_space<vmem>>, vector<4x32x24xbf16>
    %cst = arith.constant dense<0.000000e+00> : vector<4x8x24xf32>
    %7 = tpu.matmul %5, %6, %cst {dimension_numbers = #tpu.dot_dimension_numbers<[2], [1], [1], [2], [0, 0, 0, 1, 1, 2], [0], [0]>} : vector<4x8x32xbf16>, vector<4x32x24xbf16>, vector<4x8x24xf32> -> vector<4x8x24xf32>
    %c0_5 = arith.constant 0 : index
    %c0_6 = arith.constant 0 : index
    %c0_7 = arith.constant 0 : index
    %8 = vector.load %arg3[%c0_5, %c0_6, %c0_7] : memref<4x1x24xbf16, #tpu.memory_space<vmem>>, vector<4x1x24xbf16>
    %9 = arith.extf %8 : vector<4x1x24xbf16> to vector<4x1x24xf32>
    %10 = vector.broadcast %9 : vector<4x1x24xf32> to vector<4x8x24xf32>
    %11 = arith.addf %7, %10 : vector<4x8x24xf32>
    %12 = vector.extract_strided_slice %11 {offsets = [0, 0, 0], sizes = [4, 8, 8], strides = [1, 1, 1]} : vector<4x8x24xf32> to vector<4x8x8xf32>
    %13 = vector.extract_strided_slice %11 {offsets = [0, 0, 8], sizes = [4, 8, 8], strides = [1, 1, 1]} : vector<4x8x24xf32> to vector<4x8x8xf32>
    %14 = vector.extract_strided_slice %11 {offsets = [0, 0, 16], sizes = [4, 8, 8], strides = [1, 1, 1]} : vector<4x8x24xf32> to vector<4x8x8xf32>
    %15 = arith.truncf %12 : vector<4x8x8xf32> to vector<4x8x8xbf16>
    %16 = arith.truncf %13 : vector<4x8x8xf32> to vector<4x8x8xbf16>
    %17 = arith.truncf %14 : vector<4x8x8xf32> to vector<4x8x8xbf16>
    %cst_8 = arith.constant dense<0.000000e+00> : vector<4x8x8xf32>
    %18 = tpu.matmul %15, %16, %cst_8 {dimension_numbers = #tpu.dot_dimension_numbers<[2], [2], [1], [1], [0, 0, 0, 1, 1, 1], [0], [0]>} : vector<4x8x8xbf16>, vector<4x8x8xbf16>, vector<4x8x8xf32> -> vector<4x8x8xf32>
    %cst_9 = arith.constant dense<0xFF800000> : vector<4x8xf32>
    %19 = vector.multi_reduction <maximumf>, %18, %cst_9 [2] : vector<4x8x8xf32> to vector<4x8xf32>
    %20 = vector.shape_cast %19 : vector<4x8xf32> to vector<4x8x1xf32>
    %21 = vector.broadcast %20 : vector<4x8x1xf32> to vector<4x8x8xf32>
    %22 = arith.subf %18, %21 : vector<4x8x8xf32>
    %23 = math.exp %22 : vector<4x8x8xf32>
    %cst_10 = arith.constant dense<0.000000e+00> : vector<4x8xf32>
    %24 = vector.multi_reduction <add>, %23, %cst_10 [2] : vector<4x8x8xf32> to vector<4x8xf32>
    %25 = vector.shape_cast %24 : vector<4x8xf32> to vector<4x8x1xf32>
    %26 = arith.truncf %23 : vector<4x8x8xf32> to vector<4x8x8xbf16>
    %cst_11 = arith.constant dense<0.000000e+00> : vector<4x8x8xf32>
    %27 = tpu.matmul %26, %17, %cst_11 {dimension_numbers = #tpu.dot_dimension_numbers<[2], [1], [1], [2], [0, 0, 0, 1, 1, 2], [0], [0]>} : vector<4x8x8xbf16>, vector<4x8x8xbf16>, vector<4x8x8xf32> -> vector<4x8x8xf32>
    %28 = tpu.reciprocal %25 {approx = true} : vector<4x8x1xf32> -> vector<4x8x1xf32>
    %29 = vector.broadcast %28 : vector<4x8x1xf32> to vector<4x8x8xf32>
    %30 = arith.mulf %27, %29 : vector<4x8x8xf32>
    %31 = arith.truncf %30 : vector<4x8x8xf32> to vector<4x8x8xbf16>
    %c0_12 = arith.constant 0 : index
    %c0_13 = arith.constant 0 : index
    %32 = vector.load %arg4[%c0_12, %c0_13] : memref<32x32xbf16, #tpu.memory_space<vmem>>, vector<32x32xbf16>
    %33 = vector.shape_cast %32 : vector<32x32xbf16> to vector<4x8x32xbf16>
    %cst_14 = arith.constant dense<0.000000e+00> : vector<4x8x32xf32>
    %34 = tpu.matmul %31, %33, %cst_14 {dimension_numbers = #tpu.dot_dimension_numbers<[2], [1], [1], [2], [0, 0, 0, 1, 1, 2], [0], [0]>} : vector<4x8x8xbf16>, vector<4x8x32xbf16>, vector<4x8x32xf32> -> vector<4x8x32xf32>
    %cst_15 = arith.constant dense<0.000000e+00> : vector<8x32xf32>
    %35 = vector.multi_reduction <add>, %34, %cst_15 [0] : vector<4x8x32xf32> to vector<8x32xf32>
    %c0_16 = arith.constant 0 : index
    %c0_17 = arith.constant 0 : index
    %36 = vector.load %arg5[%c0_16, %c0_17] : memref<1x32xbf16, #tpu.memory_space<vmem>>, vector<1x32xbf16>
    %37 = arith.extf %36 : vector<1x32xbf16> to vector<1x32xf32>
    %38 = vector.broadcast %37 : vector<1x32xf32> to vector<8x32xf32>
    %39 = arith.addf %35, %38 : vector<8x32xf32>
    %40 = arith.addf %39, %2 : vector<8x32xf32>
    %cst_18 = arith.constant dense<0.000000e+00> : vector<8xf32>
    %41 = vector.multi_reduction <add>, %40, %cst_18 [1] : vector<8x32xf32> to vector<8xf32>
    %42 = vector.shape_cast %41 : vector<8xf32> to vector<8x1xf32>
    %cst_19 = arith.constant 3.200000e+01 : f32
    %43 = vector.broadcast %cst_19 : f32 to vector<8x1xf32>
    %44 = arith.divf %42, %43 : vector<8x1xf32>
    %45 = vector.broadcast %44 : vector<8x1xf32> to vector<8x32xf32>
    %46 = arith.subf %40, %45 : vector<8x32xf32>
    %47 = arith.mulf %46, %46 : vector<8x32xf32>
    %cst_20 = arith.constant dense<0.000000e+00> : vector<8xf32>
    %48 = vector.multi_reduction <add>, %47, %cst_20 [1] : vector<8x32xf32> to vector<8xf32>
    %49 = vector.shape_cast %48 : vector<8xf32> to vector<8x1xf32>
    %cst_21 = arith.constant 3.200000e+01 : f32
    %50 = vector.broadcast %cst_21 : f32 to vector<8x1xf32>
    %51 = arith.divf %49, %50 : vector<8x1xf32>
    %52 = vector.broadcast %44 : vector<8x1xf32> to vector<8x32xf32>
    %53 = arith.subf %40, %52 : vector<8x32xf32>
    %cst_22 = arith.constant 9.99999974E-6 : f32
    %54 = vector.broadcast %cst_22 : f32 to vector<8x1xf32>
    %55 = arith.addf %51, %54 : vector<8x1xf32>
    %56 = math.rsqrt %55 : vector<8x1xf32>
    %57 = vector.broadcast %56 : vector<8x1xf32> to vector<8x32xf32>
    %58 = arith.mulf %53, %57 : vector<8x32xf32>
    %c0_23 = arith.constant 0 : index
    %c0_24 = arith.constant 0 : index
    %59 = vector.load %arg10[%c0_23, %c0_24] : memref<1x32xf32, #tpu.memory_space<vmem>>, vector<1x32xf32>
    %60 = vector.broadcast %59 : vector<1x32xf32> to vector<8x32xf32>
    %61 = arith.mulf %58, %60 : vector<8x32xf32>
    %c0_25 = arith.constant 0 : index
    %c0_26 = arith.constant 0 : index
    %62 = vector.load %arg11[%c0_25, %c0_26] : memref<1x32xf32, #tpu.memory_space<vmem>>, vector<1x32xf32>
    %63 = vector.broadcast %62 : vector<1x32xf32> to vector<8x32xf32>
    %64 = arith.addf %61, %63 : vector<8x32xf32>
    %65 = arith.truncf %64 : vector<8x32xf32> to vector<8x32xbf16>
    %c0_27 = arith.constant 0 : index
    %c0_28 = arith.constant 0 : index
    %66 = vector.load %arg6[%c0_27, %c0_28] : memref<32x32xbf16, #tpu.memory_space<vmem>>, vector<32x32xbf16>
    %cst_29 = arith.constant dense<0.000000e+00> : vector<8x32xf32>
    %67 = tpu.matmul %65, %66, %cst_29 {dimension_numbers = #tpu.dot_dimension_numbers<[1], [0], [0], [1], [0, 0, 1, 1], [], []>} : vector<8x32xbf16>, vector<32x32xbf16>, vector<8x32xf32> -> vector<8x32xf32>
    %c0_30 = arith.constant 0 : index
    %c0_31 = arith.constant 0 : index
    %68 = vector.load %arg7[%c0_30, %c0_31] : memref<1x32xbf16, #tpu.memory_space<vmem>>, vector<1x32xbf16>
    %69 = arith.extf %68 : vector<1x32xbf16> to vector<1x32xf32>
    %70 = vector.broadcast %69 : vector<1x32xf32> to vector<8x32xf32>
    %71 = arith.addf %67, %70 : vector<8x32xf32>
    %cst_32 = arith.constant 0.00999999977 : f32
    %72 = vector.broadcast %cst_32 : f32 to vector<8x32xf32>
    %73 = arith.mulf %72, %71 : vector<8x32xf32>
    %74 = arith.maximumf %71, %73 : vector<8x32xf32>
    %75 = arith.truncf %74 : vector<8x32xf32> to vector<8x32xbf16>
    %c0_33 = arith.constant 0 : index
    %c0_34 = arith.constant 0 : index
    %76 = vector.load %arg8[%c0_33, %c0_34] : memref<32x32xbf16, #tpu.memory_space<vmem>>, vector<32x32xbf16>
    %cst_35 = arith.constant dense<0.000000e+00> : vector<8x32xf32>
    %77 = tpu.matmul %75, %76, %cst_35 {dimension_numbers = #tpu.dot_dimension_numbers<[1], [0], [0], [1], [0, 0, 1, 1], [], []>} : vector<8x32xbf16>, vector<32x32xbf16>, vector<8x32xf32> -> vector<8x32xf32>
    %c0_36 = arith.constant 0 : index
    %c0_37 = arith.constant 0 : index
    %78 = vector.load %arg9[%c0_36, %c0_37] : memref<1x32xbf16, #tpu.memory_space<vmem>>, vector<1x32xbf16>
    %79 = arith.extf %78 : vector<1x32xbf16> to vector<1x32xf32>
    %80 = vector.broadcast %79 : vector<1x32xf32> to vector<8x32xf32>
    %81 = arith.addf %77, %80 : vector<8x32xf32>
    %82 = arith.addf %81, %64 : vector<8x32xf32>
    %cst_38 = arith.constant dense<0.000000e+00> : vector<8xf32>
    %83 = vector.multi_reduction <add>, %82, %cst_38 [1] : vector<8x32xf32> to vector<8xf32>
    %84 = vector.shape_cast %83 : vector<8xf32> to vector<8x1xf32>
    %cst_39 = arith.constant 3.200000e+01 : f32
    %85 = vector.broadcast %cst_39 : f32 to vector<8x1xf32>
    %86 = arith.divf %84, %85 : vector<8x1xf32>
    %87 = vector.broadcast %86 : vector<8x1xf32> to vector<8x32xf32>
    %88 = arith.subf %82, %87 : vector<8x32xf32>
    %89 = arith.mulf %88, %88 : vector<8x32xf32>
    %cst_40 = arith.constant dense<0.000000e+00> : vector<8xf32>
    %90 = vector.multi_reduction <add>, %89, %cst_40 [1] : vector<8x32xf32> to vector<8xf32>
    %91 = vector.shape_cast %90 : vector<8xf32> to vector<8x1xf32>
    %cst_41 = arith.constant 3.200000e+01 : f32
    %92 = vector.broadcast %cst_41 : f32 to vector<8x1xf32>
    %93 = arith.divf %91, %92 : vector<8x1xf32>
    %94 = vector.broadcast %86 : vector<8x1xf32> to vector<8x32xf32>
    %95 = arith.subf %82, %94 : vector<8x32xf32>
    %cst_42 = arith.constant 9.99999974E-6 : f32
    %96 = vector.broadcast %cst_42 : f32 to vector<8x1xf32>
    %97 = arith.addf %93, %96 : vector<8x1xf32>
    %98 = math.rsqrt %97 : vector<8x1xf32>
    %99 = vector.broadcast %98 : vector<8x1xf32> to vector<8x32xf32>
    %100 = arith.mulf %95, %99 : vector<8x32xf32>
    %c0_43 = arith.constant 0 : index
    %c0_44 = arith.constant 0 : index
    %101 = vector.load %arg12[%c0_43, %c0_44] : memref<1x32xf32, #tpu.memory_space<vmem>>, vector<1x32xf32>
    %102 = vector.broadcast %101 : vector<1x32xf32> to vector<8x32xf32>
    %103 = arith.mulf %100, %102 : vector<8x32xf32>
    %c0_45 = arith.constant 0 : index
    %c0_46 = arith.constant 0 : index
    %104 = vector.load %arg13[%c0_45, %c0_46] : memref<1x32xf32, #tpu.memory_space<vmem>>, vector<1x32xf32>
    %105 = vector.broadcast %104 : vector<1x32xf32> to vector<8x32xf32>
    %106 = arith.addf %103, %105 : vector<8x32xf32>
    %107 = vector.shape_cast %106 : vector<8x32xf32> to vector<1x8x32xf32>
    %108 = arith.truncf %107 : vector<1x8x32xf32> to vector<1x8x32xbf16>
    %c0_47 = arith.constant 0 : index
    %c0_48 = arith.constant 0 : index
    %c0_49 = arith.constant 0 : index
    %109 = vector.load %arg14[%c0_47, %c0_48, %c0_49] : memref<1x8x32xbf16, #tpu.memory_space<vmem>>, vector<1x8x32xbf16>
    tpu.vector_store %arg14[%c0_47, %c0_48, %c0_49], %108 {strides = array<i32>} : memref<1x8x32xbf16, #tpu.memory_space<vmem>>, vector<1x8x32xbf16>,
    return
  }
  func.func @transform_0(%arg0: i32) -> (i32, i32, i32) {
    %c0_i32 = arith.constant 0 : i32
    %c0_i32_0 = arith.constant 0 : i32
    %c0_i32_1 = arith.constant 0 : i32
    return %arg0, %c0_i32, %c0_i32_0 : i32, i32, i32
  }
  func.func @transform_1(%arg0: i32) -> (i32, i32, i32) {
    %c0_i32 = arith.constant 0 : i32
    %c0_i32_0 = arith.constant 0 : i32
    %c0_i32_1 = arith.constant 0 : i32
    %c0_i32_2 = arith.constant 0 : i32
    return %c0_i32, %c0_i32_0, %c0_i32_1 : i32, i32, i32
  }
  func.func @transform_2(%arg0: i32) -> (i32, i32, i32) {
    %c0_i32 = arith.constant 0 : i32
    %c0_i32_0 = arith.constant 0 : i32
    %c0_i32_1 = arith.constant 0 : i32
    %c0_i32_2 = arith.constant 0 : i32
    return %c0_i32, %c0_i32_0, %c0_i32_1 : i32, i32, i32
  }
  func.func @transform_3(%arg0: i32) -> (i32, i32) {
    %c0_i32 = arith.constant 0 : i32
    %c0_i32_0 = arith.constant 0 : i32
    %c0_i32_1 = arith.constant 0 : i32
    return %c0_i32, %c0_i32_0 : i32, i32
  }
  func.func @transform_4(%arg0: i32) -> (i32, i32) {
    %c0_i32 = arith.constant 0 : i32
    %c0_i32_0 = arith.constant 0 : i32
    %c0_i32_1 = arith.constant 0 : i32
    return %c0_i32, %c0_i32_0 : i32, i32
  }
  func.func @transform_5(%arg0: i32) -> (i32, i32) {
    %c0_i32 = arith.constant 0 : i32
    %c0_i32_0 = arith.constant 0 : i32
    %c0_i32_1 = arith.constant 0 : i32
    return %c0_i32, %c0_i32_0 : i32, i32
  }
  func.func @transform_6(%arg0: i32) -> (i32, i32) {
    %c0_i32 = arith.constant 0 : i32
    %c0_i32_0 = arith.constant 0 : i32
    %c0_i32_1 = arith.constant 0 : i32
    return %c0_i32, %c0_i32_0 : i32, i32
  }
  func.func @transform_7(%arg0: i32) -> (i32, i32) {
    %c0_i32 = arith.constant 0 : i32
    %c0_i32_0 = arith.constant 0 : i32
    %c0_i32_1 = arith.constant 0 : i32
    return %c0_i32, %c0_i32_0 : i32, i32
  }
  func.func @transform_8(%arg0: i32) -> (i32, i32) {
    %c0_i32 = arith.constant 0 : i32
    %c0_i32_0 = arith.constant 0 : i32
    %c0_i32_1 = arith.constant 0 : i32
    return %c0_i32, %c0_i32_0 : i32, i32
  }
  func.func @transform_9(%arg0: i32) -> (i32, i32) {
    %c0_i32 = arith.constant 0 : i32
    %c0_i32_0 = arith.constant 0 : i32
    %c0_i32_1 = arith.constant 0 : i32
    return %c0_i32, %c0_i32_0 : i32, i32
  }
  func.func @transform_10(%arg0: i32) -> (i32, i32) {
    %c0_i32 = arith.constant 0 : i32
    %c0_i32_0 = arith.constant 0 : i32
    %c0_i32_1 = arith.constant 0 : i32
    return %c0_i32, %c0_i32_0 : i32, i32
  }
  func.func @transform_11(%arg0: i32) -> (i32, i32) {
    %c0_i32 = arith.constant 0 : i32
    %c0_i32_0 = arith.constant 0 : i32
    %c0_i32_1 = arith.constant 0 : i32
    return %c0_i32, %c0_i32_0 : i32, i32
  }
  func.func @transform_12(%arg0: i32) -> (i32, i32) {
    %c0_i32 = arith.constant 0 : i32
    %c0_i32_0 = arith.constant 0 : i32
    %c0_i32_1 = arith.constant 0 : i32
    return %c0_i32, %c0_i32_0 : i32, i32
  }
  func.func @transform_13(%arg0: i32) -> (i32, i32, i32) {
    %c0_i32 = arith.constant 0 : i32
    %c0_i32_0 = arith.constant 0 : i32
    %c0_i32_1 = arith.constant 0 : i32
    return %arg0, %c0_i32, %c0_i32_0 : i32, i32, i32
  }
}

</mosaic_0001>

<llo_original>
// kernel: tpu_custom_call.1
$region0: #{tpu_custom_call.1}
  #allocation0 [shape = 'u32[]', space=smem, size = 0x4, offset = 0x4, fixed_abs, tag = 'smem constant byte address 0x4 - core index']
  #allocation1 [shape = 'u32[144,128]{1,0:T(1,128)}', space=vmem, size = 0x12000, scoped, tag = 'internal scratch']
  %s0 = inlined_call_operand.vmem [shape: bf16[2,8,32], index: 0, kind: input, shape index: {}]
  %s1 = inlined_call_operand.vmem [shape: bf16[4,32,24], index: 1, kind: input, shape index: {}]
  %s2 = inlined_call_operand.vmem [shape: bf16[4,1,24], index: 2, kind: input, shape index: {}]
  %s3 = inlined_call_operand.vmem [shape: bf16[32,32], index: 3, kind: input, shape index: {}]
  %s4 = inlined_call_operand.vmem [shape: bf16[1,32], index: 4, kind: input, shape index: {}]
  %s5 = inlined_call_operand.vmem [shape: bf16[32,32], index: 5, kind: input, shape index: {}]
  %s6 = inlined_call_operand.vmem [shape: bf16[1,32], index: 6, kind: input, shape index: {}]
  %s7 = inlined_call_operand.vmem [shape: bf16[32,32], index: 7, kind: input, shape index: {}]
  %s8 = inlined_call_operand.vmem [shape: bf16[1,32], index: 8, kind: input, shape index: {}]
  %s9 = inlined_call_operand.vmem [shape: f32[1,32], index: 9, kind: input, shape index: {}]
  %s10 = inlined_call_operand.vmem [shape: f32[1,32], index: 10, kind: input, shape index: {}]
  %s11 = inlined_call_operand.vmem [shape: f32[1,32], index: 11, kind: input, shape index: {}]
  %s12 = inlined_call_operand.vmem [shape: f32[1,32], index: 12, kind: input, shape index: {}]
  %s13 = inlined_call_operand.hbm [shape: bf16[2,8,32], index: 13, kind: output, shape index: {}]
  %s14 = sld [smem:[#allocation0]]
  $region85: #{tpu_custom_call.1} parent=0
    _
  %s16 = ssub.s32 1, %s14
  %s17 = scalar_select 0, %s16, %s14
  $region1: #{tpu_custom_call.1} parent=0
    #allocation2 [shape = 'u8[4096]{0}', space=vmem, size = 0x1000, scoped, tag = 'output window, operand 0']
    #allocation3 [shape = 's32[2]{0}', space=sflag, size = 0x8, scoped, tag = 'scoped memory for tpu_custom_call.1']
    %18 = vsyncpa [#allocation3], 0
    %s19 = scalar_lea.sflag [#allocation3], 1
    %20 = vsyncpa %s19, 0
    loop: start=0, step=1, limit=4
    $region2: #{tpu_custom_call.1} parent=1 // loop_pre_header
      _
    $region3: #{tpu_custom_call.1} parent=1 // loop_header
      %s22 = sphi 0, %s26
      %p23 = scmp.ge.s32.totalorder %s22, 4
      %s32 = sphi 0, %s34
      %s35 = sphi 0, %s32
      %s36 = sphi 0, %s35
      %s52 = sphi 0, %s36
      %s56 = sphi 0, %s56
      %s58 = sphi 0, %s56
      %s59 = sphi 0, %s58
      %s73 = sphi 0, %s59
      %s77 = sphi 0, %s77
      %s79 = sphi 0, %s77
      %s80 = sphi 0, %s79
      %s94 = sphi 0, %s80
      %s98 = sphi 0, %s98
      %s100 = sphi 0, %s98
      %s101 = sphi 0, %s100
      %s115 = sphi 0, %s101
      %s119 = sphi 0, %s119
      %s121 = sphi 0, %s119
      %s122 = sphi 0, %s121
      %s136 = sphi 0, %s122
      %s140 = sphi 0, %s140
      %s142 = sphi 0, %s140
      %s143 = sphi 0, %s142
      %s157 = sphi 0, %s143
      %s161 = sphi 0, %s161
      %s163 = sphi 0, %s161
      %s164 = sphi 0, %s163
      %s178 = sphi 0, %s164
      %s182 = sphi 0, %s182
      %s184 = sphi 0, %s182
      %s185 = sphi 0, %s184
      %s199 = sphi 0, %s185
      %s203 = sphi 0, %s203
      %s205 = sphi 0, %s203
      %s206 = sphi 0, %s205
      %s220 = sphi 0, %s206
      %s224 = sphi 0, %s224
      %s226 = sphi 0, %s224
      %s227 = sphi 0, %s226
      %s241 = sphi 0, %s227
      %s245 = sphi 0, %s245
      %s247 = sphi 0, %s245
      %s248 = sphi 0, %s247
      %s262 = sphi 0, %s248
      %s266 = sphi 0, %s266
      %s268 = sphi 0, %s266
      %s269 = sphi 0, %s268
      %s283 = sphi 0, %s269
      %s287 = sphi 0, %s287
      %s289 = sphi 0, %s287
      %s290 = sphi 0, %s289
      %s304 = sphi 0, %s290
      %s310 = sphi 0, %s312
      %s313 = sphi 0, %s310
      %s314 = sphi 0, %s313
      %s330 = sphi 0, %s314
    $region4: #{tpu_custom_call.1} parent=1 // loop_header_branch
      %25 = sbr.rel (%p23) target = $region8
    $region5: #{tpu_custom_call.1} parent=1 // loop_body
      %s27 = ssub.s32 %s22, 1
      %s28 = ssub.s32 %s22, 2
      %s29 = sadd.s32 %s22, 1
      %s30 = ssub.s32 %s22, %s29
      %p31 = scmp.eq.s32.totalorder %s30, 0
      %s33 = sadd.s32 %s32, 1
      %s34 = scalar_select %p31, %s32, %s33
      %p37 = pneg %p31
      %p38 = scmp.eq.s32.totalorder %s22, 1
      %p39 = por %p37, %p38
      %p40 = scmp.ne.s32.totalorder %s32, %s35
      %p41 = scmp.eq.s32.totalorder %s22, 0
      %p42 = por %p40, %p41
      %p43 = scmp.ne.s32.totalorder %s32, %s35
      %p44 = scmp.eq.s32.totalorder %s27, 1
      %p45 = por %p43, %p44
      %p46 = scmp.ne.s32.totalorder %s35, %s36
      %p47 = scmp.eq.s32.totalorder %s27, 0
      %p48 = por %p46, %p47
      %p49 = scmp.ne.s32.totalorder %s35, %s36
      %p50 = scmp.eq.s32.totalorder %s28, 1
      %p51 = por %p49, %p50
      %p53 = scmp.ne.s32.totalorder %s36, %s52
      %p54 = scmp.eq.s32.totalorder %s28, 0
      %p55 = por %p53, %p54
      %s57 = sadd.s32 %s56, 1
      %p60 = scmp.eq.s32.totalorder %s22, 1
      %p61 = scmp.ne.s32.totalorder %s56, %s58
      %p62 = scmp.eq.s32.totalorder %s22, 0
      %p63 = por %p61, %p62
      %p64 = scmp.ne.s32.totalorder %s56, %s58
      %p65 = scmp.eq.s32.totalorder %s27, 1
      %p66 = por %p64, %p65
      %p67 = scmp.ne.s32.totalorder %s58, %s59
      %p68 = scmp.eq.s32.totalorder %s27, 0
      %p69 = por %p67, %p68
      %p70 = scmp.ne.s32.totalorder %s58, %s59
      %p71 = scmp.eq.s32.totalorder %s28, 1
      %p72 = por %p70, %p71
      %p74 = scmp.ne.s32.totalorder %s59, %s73
      %p75 = scmp.eq.s32.totalorder %s28, 0
      %p76 = por %p74, %p75
      %s78 = sadd.s32 %s77, 1
      %p81 = scmp.eq.s32.totalorder %s22, 1
      %p82 = scmp.ne.s32.totalorder %s77, %s79
      %p83 = scmp.eq.s32.totalorder %s22, 0
      %p84 = por %p82, %p83
      %p85 = scmp.ne.s32.totalorder %s77, %s79
      %p86 = scmp.eq.s32.totalorder %s27, 1
      %p87 = por %p85, %p86
      %p88 = scmp.ne.s32.totalorder %s79, %s80
      %p89 = scmp.eq.s32.totalorder %s27, 0
      %p90 = por %p88, %p89
      %p91 = scmp.ne.s32.totalorder %s79, %s80
      %p92 = scmp.eq.s32.totalorder %s28, 1
      %p93 = por %p91, %p92
      %p95 = scmp.ne.s32.totalorder %s80, %s94
      %p96 = scmp.eq.s32.totalorder %s28, 0
      %p97 = por %p95, %p96
      %s99 = sadd.s32 %s98, 1
      %p102 = scmp.eq.s32.totalorder %s22, 1
      %p103 = scmp.ne.s32.totalorder %s98, %s100
      %p104 = scmp.eq.s32.totalorder %s22, 0
      %p105 = por %p103, %p104
      %p106 = scmp.ne.s32.totalorder %s98, %s100
      %p107 = scmp.eq.s32.totalorder %s27, 1
      %p108 = por %p106, %p107
      %p109 = scmp.ne.s32.totalorder %s100, %s101
      %p110 = scmp.eq.s32.totalorder %s27, 0
      %p111 = por %p109, %p110
      %p112 = scmp.ne.s32.totalorder %s100, %s101
      %p113 = scmp.eq.s32.totalorder %s28, 1
      %p114 = por %p112, %p113
      %p116 = scmp.ne.s32.totalorder %s101, %s115
      %p117 = scmp.eq.s32.totalorder %s28, 0
      %p118 = por %p116, %p117
      %s120 = sadd.s32 %s119, 1
      %p123 = scmp.eq.s32.totalorder %s22, 1
      %p124 = scmp.ne.s32.totalorder %s119, %s121
      %p125 = scmp.eq.s32.totalorder %s22, 0
      %p126 = por %p124, %p125
      %p127 = scmp.ne.s32.totalorder %s119, %s121
      %p128 = scmp.eq.s32.totalorder %s27, 1
      %p129 = por %p127, %p128
      %p130 = scmp.ne.s32.totalorder %s121, %s122
      %p131 = scmp.eq.s32.totalorder %s27, 0
      %p132 = por %p130, %p131
      %p133 = scmp.ne.s32.totalorder %s121, %s122
      %p134 = scmp.eq.s32.totalorder %s28, 1
      %p135 = por %p133, %p134
      %p137 = scmp.ne.s32.totalorder %s122, %s136
      %p138 = scmp.eq.s32.totalorder %s28, 0
      %p139 = por %p137, %p138
      %s141 = sadd.s32 %s140, 1
      %p144 = scmp.eq.s32.totalorder %s22, 1
      %p145 = scmp.ne.s32.totalorder %s140, %s142
      %p146 = scmp.eq.s32.totalorder %s22, 0
      %p147 = por %p145, %p146
      %p148 = scmp.ne.s32.totalorder %s140, %s142
      %p149 = scmp.eq.s32.totalorder %s27, 1
      %p150 = por %p148, %p149
      %p151 = scmp.ne.s32.totalorder %s142, %s143
      %p152 = scmp.eq.s32.totalorder %s27, 0
      %p153 = por %p151, %p152
      %p154 = scmp.ne.s32.totalorder %s142, %s143
      %p155 = scmp.eq.s32.totalorder %s28, 1
      %p156 = por %p154, %p155
      %p158 = scmp.ne.s32.totalorder %s143, %s157
      %p159 = scmp.eq.s32.totalorder %s28, 0
      %p160 = por %p158, %p159
      %s162 = sadd.s32 %s161, 1
      %p165 = scmp.eq.s32.totalorder %s22, 1
      %p166 = scmp.ne.s32.totalorder %s161, %s163
      %p167 = scmp.eq.s32.totalorder %s22, 0
      %p168 = por %p166, %p167
      %p169 = scmp.ne.s32.totalorder %s161, %s163
      %p170 = scmp.eq.s32.totalorder %s27, 1
      %p171 = por %p169, %p170
      %p172 = scmp.ne.s32.totalorder %s163, %s164
      %p173 = scmp.eq.s32.totalorder %s27, 0
      %p174 = por %p172, %p173
      %p175 = scmp.ne.s32.totalorder %s163, %s164
      %p176 = scmp.eq.s32.totalorder %s28, 1
      %p177 = por %p175, %p176
      %p179 = scmp.ne.s32.totalorder %s164, %s178
      %p180 = scmp.eq.s32.totalorder %s28, 0
      %p181 = por %p179, %p180
      %s183 = sadd.s32 %s182, 1
      %p186 = scmp.eq.s32.totalorder %s22, 1
      %p187 = scmp.ne.s32.totalorder %s182, %s184
      %p188 = scmp.eq.s32.totalorder %s22, 0
      %p189 = por %p187, %p188
      %p190 = scmp.ne.s32.totalorder %s182, %s184
      %p191 = scmp.eq.s32.totalorder %s27, 1
      %p192 = por %p190, %p191
      %p193 = scmp.ne.s32.totalorder %s184, %s185
      %p194 = scmp.eq.s32.totalorder %s27, 0
      %p195 = por %p193, %p194
      %p196 = scmp.ne.s32.totalorder %s184, %s185
      %p197 = scmp.eq.s32.totalorder %s28, 1
      %p198 = por %p196, %p197
      %p200 = scmp.ne.s32.totalorder %s185, %s199
      %p201 = scmp.eq.s32.totalorder %s28, 0
      %p202 = por %p200, %p201
      %s204 = sadd.s32 %s203, 1
      %p207 = scmp.eq.s32.totalorder %s22, 1
      %p208 = scmp.ne.s32.totalorder %s203, %s205
      %p209 = scmp.eq.s32.totalorder %s22, 0
      %p210 = por %p208, %p209
      %p211 = scmp.ne.s32.totalorder %s203, %s205
      %p212 = scmp.eq.s32.totalorder %s27, 1
      %p213 = por %p211, %p212
      %p214 = scmp.ne.s32.totalorder %s205, %s206
      %p215 = scmp.eq.s32.totalorder %s27, 0
      %p216 = por %p214, %p215
      %p217 = scmp.ne.s32.totalorder %s205, %s206
      %p218 = scmp.eq.s32.totalorder %s28, 1
      %p219 = por %p217, %p218
      %p221 = scmp.ne.s32.totalorder %s206, %s220
      %p222 = scmp.eq.s32.totalorder %s28, 0
      %p223 = por %p221, %p222
      %s225 = sadd.s32 %s224, 1
      %p228 = scmp.eq.s32.totalorder %s22, 1
      %p229 = scmp.ne.s32.totalorder %s224, %s226
      %p230 = scmp.eq.s32.totalorder %s22, 0
      %p231 = por %p229, %p230
      %p232 = scmp.ne.s32.totalorder %s224, %s226
      %p233 = scmp.eq.s32.totalorder %s27, 1
      %p234 = por %p232, %p233
      %p235 = scmp.ne.s32.totalorder %s226, %s227
      %p236 = scmp.eq.s32.totalorder %s27, 0
      %p237 = por %p235, %p236
      %p238 = scmp.ne.s32.totalorder %s226, %s227
      %p239 = scmp.eq.s32.totalorder %s28, 1
      %p240 = por %p238, %p239
      %p242 = scmp.ne.s32.totalorder %s227, %s241
      %p243 = scmp.eq.s32.totalorder %s28, 0
      %p244 = por %p242, %p243
      %s246 = sadd.s32 %s245, 1
      %p249 = scmp.eq.s32.totalorder %s22, 1
      %p250 = scmp.ne.s32.totalorder %s245, %s247
      %p251 = scmp.eq.s32.totalorder %s22, 0
      %p252 = por %p250, %p251
      %p253 = scmp.ne.s32.totalorder %s245, %s247
      %p254 = scmp.eq.s32.totalorder %s27, 1
      %p255 = por %p253, %p254
      %p256 = scmp.ne.s32.totalorder %s247, %s248
      %p257 = scmp.eq.s32.totalorder %s27, 0
      %p258 = por %p256, %p257
      %p259 = scmp.ne.s32.totalorder %s247, %s248
      %p260 = scmp.eq.s32.totalorder %s28, 1
      %p261 = por %p259, %p260
      %p263 = scmp.ne.s32.totalorder %s248, %s262
      %p264 = scmp.eq.s32.totalorder %s28, 0
      %p265 = por %p263, %p264
      %s267 = sadd.s32 %s266, 1
      %p270 = scmp.eq.s32.totalorder %s22, 1
      %p271 = scmp.ne.s32.totalorder %s266, %s268
      %p272 = scmp.eq.s32.totalorder %s22, 0
      %p273 = por %p271, %p272
      %p274 = scmp.ne.s32.totalorder %s266, %s268
      %p275 = scmp.eq.s32.totalorder %s27, 1
      %p276 = por %p274, %p275
      %p277 = scmp.ne.s32.totalorder %s268, %s269
      %p278 = scmp.eq.s32.totalorder %s27, 0
      %p279 = por %p277, %p278
      %p280 = scmp.ne.s32.totalorder %s268, %s269
      %p281 = scmp.eq.s32.totalorder %s28, 1
      %p282 = por %p280, %p281
      %p284 = scmp.ne.s32.totalorder %s269, %s283
      %p285 = scmp.eq.s32.totalorder %s28, 0
      %p286 = por %p284, %p285
      %s288 = sadd.s32 %s287, 1
      %p291 = scmp.eq.s32.totalorder %s22, 1
      %p292 = scmp.ne.s32.totalorder %s287, %s289
      %p293 = scmp.eq.s32.totalorder %s22, 0
      %p294 = por %p292, %p293
      %p295 = scmp.ne.s32.totalorder %s287, %s289
      %p296 = scmp.eq.s32.totalorder %s27, 1
      %p297 = por %p295, %p296
      %p298 = scmp.ne.s32.totalorder %s289, %s290
      %p299 = scmp.eq.s32.totalorder %s27, 0
      %p300 = por %p298, %p299
      %p301 = scmp.ne.s32.totalorder %s289, %s290
      %p302 = scmp.eq.s32.totalorder %s28, 1
      %p303 = por %p301, %p302
      %p305 = scmp.ne.s32.totalorder %s290, %s304
      %p306 = scmp.eq.s32.totalorder %s28, 0
      %p307 = por %p305, %p306
      %s308 = ssub.s32 %s22, %s29
      %p309 = scmp.eq.s32.totalorder %s308, 0
      %s311 = sadd.s32 %s310, 1
      %s312 = scalar_select %p309, %s310, %s311
      %p315 = pneg %p309
      %p316 = scmp.eq.s32.totalorder %s22, 1
      %p317 = por %p315, %p316
      %p318 = scmp.ne.s32.totalorder %s310, %s313
      %p319 = scmp.eq.s32.totalorder %s22, 0
      %p320 = por %p318, %p319
      %p321 = scmp.ne.s32.totalorder %s310, %s313
      %p322 = scmp.eq.s32.totalorder %s27, 1
      %p323 = por %p321, %p322
      %p324 = scmp.ne.s32.totalorder %s313, %s314
      %p325 = scmp.eq.s32.totalorder %s27, 0
      %p326 = por %p324, %p325
      %p327 = scmp.ne.s32.totalorder %s313, %s314
      %p328 = scmp.eq.s32.totalorder %s28, 1
      %p329 = por %p327, %p328
      %p331 = scmp.ne.s32.totalorder %s314, %s330
      %p332 = scmp.eq.s32.totalorder %s28, 0
      %p333 = por %p331, %p332
      %p334 = scmp.le.s32.totalorder 1, %s22
      %p335 = scmp.lt.s32.totalorder %s22, 3
      %p336 = pnand %p334, %p335
      %p337 = pneg %p336
      // Predicated region
      $region9: #{tpu_custom_call.1} parent=5 // pred_check
        _
      $region10: #{tpu_custom_call.1} parent=5 // pred_check_branch
        %339 = sbr.rel (%p336) target = $region12
      $region11: #{tpu_custom_call.1} parent=5 // pred_region
        %s340 = ssub.s32 %s22, 1
        // Predicated region
        $region13: #{tpu_custom_call.1} parent=11 // pred_check
          %p341 = pneg %p69
        $region14: #{tpu_custom_call.1} parent=11 // pred_check_branch
          %343 = sbr.rel (%p341) target = $region16
        $region15: #{tpu_custom_call.1} parent=11 // pred_region
          _
        $region16: #{tpu_custom_call.1} parent=11 // pred_fallthru
          _
        // Predicated region
        $region17: #{tpu_custom_call.1} parent=11 // pred_check
          %p344 = pneg %p90
        $region18: #{tpu_custom_call.1} parent=11 // pred_check_branch
          %346 = sbr.rel (%p344) target = $region20
        $region19: #{tpu_custom_call.1} parent=11 // pred_region
          _
        $region20: #{tpu_custom_call.1} parent=11 // pred_fallthru
          _
        // Predicated region
        $region21: #{tpu_custom_call.1} parent=11 // pred_check
          %p347 = pneg %p111
        $region22: #{tpu_custom_call.1} parent=11 // pred_check_branch
          %349 = sbr.rel (%p347) target = $region24
        $region23: #{tpu_custom_call.1} parent=11 // pred_region
          _
        $region24: #{tpu_custom_call.1} parent=11 // pred_fallthru
          _
        // Predicated region
        $region25: #{tpu_custom_call.1} parent=11 // pred_check
          %p350 = pneg %p132
        $region26: #{tpu_custom_call.1} parent=11 // pred_check_branch
          %352 = sbr.rel (%p350) target = $region28
        $region27: #{tpu_custom_call.1} parent=11 // pred_region
          _
        $region28: #{tpu_custom_call.1} parent=11 // pred_fallthru
          _
        // Predicated region
        $region29: #{tpu_custom_call.1} parent=11 // pred_check
          %p353 = pneg %p153
        $region30: #{tpu_custom_call.1} parent=11 // pred_check_branch
          %355 = sbr.rel (%p353) target = $region32
        $region31: #{tpu_custom_call.1} parent=11 // pred_region
          _
        $region32: #{tpu_custom_call.1} parent=11 // pred_fallthru
          _
        // Predicated region
        $region33: #{tpu_custom_call.1} parent=11 // pred_check
          %p356 = pneg %p174
        $region34: #{tpu_custom_call.1} parent=11 // pred_check_branch
          %358 = sbr.rel (%p356) target = $region36
        $region35: #{tpu_custom_call.1} parent=11 // pred_region
          _
        $region36: #{tpu_custom_call.1} parent=11 // pred_fallthru
          _
        // Predicated region
        $region37: #{tpu_custom_call.1} parent=11 // pred_check
          %p359 = pneg %p195
        $region38: #{tpu_custom_call.1} parent=11 // pred_check_branch
          %361 = sbr.rel (%p359) target = $region40
        $region39: #{tpu_custom_call.1} parent=11 // pred_region
          _
        $region40: #{tpu_custom_call.1} parent=11 // pred_fallthru
          _
        // Predicated region
        $region41: #{tpu_custom_call.1} parent=11 // pred_check
          %p362 = pneg %p216
        $region42: #{tpu_custom_call.1} parent=11 // pred_check_branch
          %364 = sbr.rel (%p362) target = $region44
        $region43: #{tpu_custom_call.1} parent=11 // pred_region
          _
        $region44: #{tpu_custom_call.1} parent=11 // pred_fallthru
          _
        // Predicated region
        $region45: #{tpu_custom_call.1} parent=11 // pred_check
          %p365 = pneg %p237
        $region46: #{tpu_custom_call.1} parent=11 // pred_check_branch
          %367 = sbr.rel (%p365) target = $region48
        $region47: #{tpu_custom_call.1} parent=11 // pred_region
          _
        $region48: #{tpu_custom_call.1} parent=11 // pred_fallthru
          _
        // Predicated region
        $region49: #{tpu_custom_call.1} parent=11 // pred_check
          %p368 = pneg %p258
        $region50: #{tpu_custom_call.1} parent=11 // pred_check_branch
          %370 = sbr.rel (%p368) target = $region52
        $region51: #{tpu_custom_call.1} parent=11 // pred_region
          _
        $region52: #{tpu_custom_call.1} parent=11 // pred_fallthru
          _
        // Predicated region
        $region53: #{tpu_custom_call.1} parent=11 // pred_check
          %p371 = pneg %p279
        $region54: #{tpu_custom_call.1} parent=11 // pred_check_branch
          %373 = sbr.rel (%p371) target = $region56
        $region55: #{tpu_custom_call.1} parent=11 // pred_region
          _
        $region56: #{tpu_custom_call.1} parent=11 // pred_fallthru
          _
        // Predicated region
        $region57: #{tpu_custom_call.1} parent=11 // pred_check
          %p374 = pneg %p300
        $region58: #{tpu_custom_call.1} parent=11 // pred_check_branch
          %376 = sbr.rel (%p374) target = $region60
        $region59: #{tpu_custom_call.1} parent=11 // pred_region
          _
        $region60: #{tpu_custom_call.1} parent=11 // pred_fallthru
          _
      $region12: #{tpu_custom_call.1} parent=5 // pred_fallthru
        _
      %p377 = scmp.lt.s32.totalorder %s22, 2
      // Predicated region
      $region61: #{tpu_custom_call.1} parent=5 // pred_check
        %p378 = pneg %p377
      $region62: #{tpu_custom_call.1} parent=5 // pred_check_branch
        %380 = sbr.rel (%p378) target = $region64
      $region63: #{tpu_custom_call.1} parent=5 // pred_region
        // Predicated region
        $region65: #{tpu_custom_call.1} parent=63 // pred_check
          %p381 = pneg %p42
        $region66: #{tpu_custom_call.1} parent=63 // pred_check_branch
          %383 = sbr.rel (%p381) target = $region68
        $region67: #{tpu_custom_call.1} parent=63 // pred_region
          %p384 = scmp.lt.s32.totalorder %s22, 1
          %s385 = scalar_select %p384, %s22, 1
          %s386 = smul.addr %s385, 4
          %s387 = scalar_lea.vmem %s0, %s386
        $region68: #{tpu_custom_call.1} parent=63 // pred_fallthru
          _
      $region64: #{tpu_custom_call.1} parent=5 // pred_fallthru
        _
      %p388 = scmp.le.s32.totalorder 1, %s22
      %p389 = scmp.lt.s32.totalorder %s22, 3
      %p390 = pnand %p388, %p389
      %p391 = pneg %p390
      // Predicated region
      $region69: #{tpu_custom_call.1} parent=5 // pred_check
        _
      $region70: #{tpu_custom_call.1} parent=5 // pred_check_branch
        %393 = sbr.rel (%p390) target = $region72
      $region71: #{tpu_custom_call.1} parent=5 // pred_region
        %s394 = ssub.s32 %s22, 1
        %p395 = scmp.lt.s32.totalorder %s27, 1
        %s396 = scalar_select %p395, %s27, 1
        %s397 = smul.addr %s396, 4
        %s398 = scalar_lea.vmem %s0, %s397
        %p399 = pneg %p48
        %p400 = pneg %p45
        %p401 = pneg %p69
        %p402 = pneg %p66
        %p403 = pneg %p90
        %p404 = pneg %p87
        %p405 = pneg %p111
        %p406 = pneg %p108
        %p407 = pneg %p132
        %p408 = pneg %p129
        %p409 = pneg %p153
        %p410 = pneg %p150
        %p411 = pneg %p174
        %p412 = pneg %p171
        %p413 = pneg %p195
        %p414 = pneg %p192
        %p415 = pneg %p216
        %p416 = pneg %p213
        %p417 = pneg %p237
        %p418 = pneg %p234
        %p419 = pneg %p258
        %p420 = pneg %p255
        %p421 = pneg %p279
        %p422 = pneg %p276
        %p423 = pneg %p300
        %p424 = pneg %p297
        %p425 = pneg %p326
        %p426 = pneg %p323
        %s427 = sand.u32 %s313, 1
        %s428 = scalar_lea.sflag [#allocation3], %s427
        %s429 = sand.u32 %s313, 1
        %s430 = smul.addr %s429, 4
        %s431 = scalar_lea.vmem [#allocation2], %s430
        %p432 = scmp.lt.s32.totalorder %s27, 1
        %s433 = scalar_select %p432, %s27, 1
        %s434 = smul.addr %s433, 4
        %s435 = scalar_lea.vmem %s0, %s434
        %v437 = vld [vmem:[%s435] sm:$0xf]
        %v438 = vunpack.c.l.bf16 %v437
        %v439 = vld [vmem:[%s1] sm:$0xf]
        %v440 = vld [vmem:[%s1 + $0x4] sm:$0xf]
        %v441 = vld [vmem:[%s1 + $0x8] sm:$0xf]
        %v442 = vld [vmem:[%s1 + $0xc] sm:$0xf]
        %v443 = vld [vmem:[%s1 + $0x10] sm:$0xf]
        %v444 = vld [vmem:[%s1 + $0x14] sm:$0xf]
        %v445 = vld [vmem:[%s1 + $0x18] sm:$0xf]
        %v446 = vld [vmem:[%s1 + $0x1c] sm:$0xf]
        %v447 = vld [vmem:[%s1 + $0x20] sm:$0xf]
        %v448 = vld [vmem:[%s1 + $0x24] sm:$0xf]
        %v449 = vld [vmem:[%s1 + $0x28] sm:$0xf]
        %v450 = vld [vmem:[%s1 + $0x2c] sm:$0xf]
        %v451 = vld [vmem:[%s1 + $0x30] sm:$0xf]
        %v452 = vld [vmem:[%s1 + $0x34] sm:$0xf]
        %v453 = vld [vmem:[%s1 + $0x38] sm:$0xf]
        %v454 = vld [vmem:[%s1 + $0x3c] sm:$0xf]
        %v455 = vld [vmem:[%s2] sm:$0x1]
        %v456 = vld [vmem:[%s2 + $0x1] sm:$0x1]
        %v457 = vld [vmem:[%s2 + $0x2] sm:$0x1]
        %v458 = vld [vmem:[%s2 + $0x3] sm:$0x1]
        %v459 = vunpack.c.l.bf16 %v455
        %v460 = vunpack.c.l.bf16 %v456
        %v461 = vunpack.c.l.bf16 %v457
        %v462 = vunpack.c.l.bf16 %v458
        %v463 = vlaneseq
        %v464 = vshrl.u32 %v463, 7
        %v465 = vsub.s32 0, %v464
        %v466 = vrot.slane %v459, %v465
        %v467 = vlaneseq
        %v468 = vshrl.u32 %v467, 7
        %v469 = vsub.s32 0, %v468
        %v470 = vrot.slane %v460, %v469
        %v471 = vlaneseq
        %v472 = vshrl.u32 %v471, 7
        %v473 = vsub.s32 0, %v472
        %v474 = vrot.slane %v461, %v473
        %v475 = vlaneseq
        %v476 = vshrl.u32 %v475, 7
        %v477 = vsub.s32 0, %v476
        %v478 = vrot.slane %v462, %v477
        %v483 = vunpack.c.l.b16 %v439
        %v484 = vunpack.c.l.b16 %v440
        %v485 = vunpack.c.l.b16 %v441
        %v486 = vunpack.c.l.b16 %v442
        %v487 = vpack.c.b16 %v484, %v483
        %v488 = vpack.c.b16 %v486, %v485
        %vm491 = vcmask 261120
        %v493 = vsel %vm491, %v437, 0
        %495 = vmatprep.subr.bf16.mxu0 0
        %496 = vmatpush1.bf16.msra.mxu0 %v487
        %497 = vmatprep.subr.bf16.mxu0 0
        %498 = vmatpush1.bf16.msra.mxu0 %v488
        %499 = vmatprep.subr.bf16.mxu0 0
        %500 = vmatpush1.bf16.msra.mxu0 0
        %501 = vmatprep.subr.bf16.mxu0 0
        %502 = vmatpush1.bf16.msra.mxu0 0
        %503 = vmatprep.subr.bf16.mxu0 0
        %504 = vmatpush1.bf16.msra.mxu0 0
        %505 = vmatprep.subr.bf16.mxu0 0
        %506 = vmatpush1.bf16.msra.mxu0 0
        %507 = vmatprep.subr.bf16.mxu0 0
        %508 = vmatpush1.bf16.msra.mxu0 0
        %509 = vmatprep.subr.bf16.mxu0 0
        %510 = vmatpush1.bf16.msra.mxu0 0
        %511 = vmatprep.subr.bf16.mxu0 0
        %512 = vmatpush1.bf16.msra.mxu0 0
        %513 = vmatprep.subr.bf16.mxu0 0
        %514 = vmatpush1.bf16.msra.mxu0 0
        %515 = vmatprep.subr.bf16.mxu0 0
        %516 = vmatpush1.bf16.msra.mxu0 0
        %517 = vmatprep.subr.bf16.mxu0 0
        %518 = vmatpush1.bf16.msra.mxu0 0
        %519 = vmatprep.subr.bf16.mxu0 0
        %520 = vmatpush1.bf16.msra.mxu0 0
        %521 = vmatprep.subr.bf16.mxu0 0
        %522 = vmatpush1.bf16.msra.mxu0 0
        %523 = vmatprep.subr.bf16.mxu0 0
        %524 = vmatpush1.bf16.msra.mxu0 0
        %525 = vmatprep.subr.bf16.mxu0 0
        %526 = vmatpush1.bf16.msra.mxu0 0
        %527 = vmatprep.mubr.bf16.mxu0 0
        %528 = vmatmul.mubr.bf16.gmra.mrb[0].mxu0 %v493
        %v529 = vpop.f32.mrb[0].mxu0
        %v530 = vadd.f32 %v466, %v529
        %v531 = vpop.f32.mrb[0].mxu0
        %v532 = vpop.f32.mrb[0].mxu0
        %v533 = vpop.f32.mrb[0].mxu0
        %534 = vdwg.mxu0
        %v539 = vunpack.c.l.b16 %v443
        %v540 = vunpack.c.l.b16 %v444
        %v541 = vunpack.c.l.b16 %v445
        %v542 = vunpack.c.l.b16 %v446
        %v543 = vpack.c.b16 %v540, %v539
        %v544 = vpack.c.b16 %v542, %v541
        %547 = vmatprep.subr.bf16.mxu0 0
        %548 = vmatpush1.bf16.msra.mxu0 %v543
        %549 = vmatprep.subr.bf16.mxu0 0
        %550 = vmatpush1.bf16.msra.mxu0 %v544
        %551 = vmatprep.subr.bf16.mxu0 0
        %552 = vmatpush1.bf16.msra.mxu0 0
        %553 = vmatprep.subr.bf16.mxu0 0
        %554 = vmatpush1.bf16.msra.mxu0 0
        %555 = vmatprep.subr.bf16.mxu0 0
        %556 = vmatpush1.bf16.msra.mxu0 0
        %557 = vmatprep.subr.bf16.mxu0 0
        %558 = vmatpush1.bf16.msra.mxu0 0
        %559 = vmatprep.subr.bf16.mxu0 0
        %560 = vmatpush1.bf16.msra.mxu0 0
        %561 = vmatprep.subr.bf16.mxu0 0
        %562 = vmatpush1.bf16.msra.mxu0 0
        %563 = vmatprep.subr.bf16.mxu0 0
        %564 = vmatpush1.bf16.msra.mxu0 0
        %565 = vmatprep.subr.bf16.mxu0 0
        %566 = vmatpush1.bf16.msra.mxu0 0
        %567 = vmatprep.subr.bf16.mxu0 0
        %568 = vmatpush1.bf16.msra.mxu0 0
        %569 = vmatprep.subr.bf16.mxu0 0
        %570 = vmatpush1.bf16.msra.mxu0 0
        %571 = vmatprep.subr.bf16.mxu0 0
        %572 = vmatpush1.bf16.msra.mxu0 0
        %573 = vmatprep.subr.bf16.mxu0 0
        %574 = vmatpush1.bf16.msra.mxu0 0
        %575 = vmatprep.subr.bf16.mxu0 0
        %576 = vmatpush1.bf16.msra.mxu0 0
        %577 = vmatprep.subr.bf16.mxu0 0
        %578 = vmatpush1.bf16.msra.mxu0 0
        %579 = vmatprep.mubr.bf16.mxu0 0
        %580 = vmatmul.mubr.bf16.gmra.mrb[0].mxu0 %v493
        %v581 = vpop.f32.mrb[0].mxu0
        %v582 = vadd.f32 %v470, %v581
        %v583 = vpop.f32.mrb[0].mxu0
        %v584 = vpop.f32.mrb[0].mxu0
        %v585 = vpop.f32.mrb[0].mxu0
        %586 = vdwg.mxu0
        %v591 = vunpack.c.l.b16 %v447
        %v592 = vunpack.c.l.b16 %v448
        %v593 = vunpack.c.l.b16 %v449
        %v594 = vunpack.c.l.b16 %v450
        %v595 = vpack.c.b16 %v592, %v591
        %v596 = vpack.c.b16 %v594, %v593
        %599 = vmatprep.subr.bf16.mxu0 0
        %600 = vmatpush1.bf16.msra.mxu0 %v595
        %601 = vmatprep.subr.bf16.mxu0 0
        %602 = vmatpush1.bf16.msra.mxu0 %v596
        %603 = vmatprep.subr.bf16.mxu0 0
        %604 = vmatpush1.bf16.msra.mxu0 0
        %605 = vmatprep.subr.bf16.mxu0 0
        %606 = vmatpush1.bf16.msra.mxu0 0
        %607 = vmatprep.subr.bf16.mxu0 0
        %608 = vmatpush1.bf16.msra.mxu0 0
        %609 = vmatprep.subr.bf16.mxu0 0
        %610 = vmatpush1.bf16.msra.mxu0 0
        %611 = vmatprep.subr.bf16.mxu0 0
        %612 = vmatpush1.bf16.msra.mxu0 0
        %613 = vmatprep.subr.bf16.mxu0 0
        %614 = vmatpush1.bf16.msra.mxu0 0
        %615 = vmatprep.subr.bf16.mxu0 0
        %616 = vmatpush1.bf16.msra.mxu0 0
        %617 = vmatprep.subr.bf16.mxu0 0
        %618 = vmatpush1.bf16.msra.mxu0 0
        %619 = vmatprep.subr.bf16.mxu0 0
        %620 = vmatpush1.bf16.msra.mxu0 0
        %621 = vmatprep.subr.bf16.mxu0 0
        %622 = vmatpush1.bf16.msra.mxu0 0
        %623 = vmatprep.subr.bf16.mxu0 0
        %624 = vmatpush1.bf16.msra.mxu0 0
        %625 = vmatprep.subr.bf16.mxu0 0
        %626 = vmatpush1.bf16.msra.mxu0 0
        %627 = vmatprep.subr.bf16.mxu0 0
        %628 = vmatpush1.bf16.msra.mxu0 0
        %629 = vmatprep.subr.bf16.mxu0 0
        %630 = vmatpush1.bf16.msra.mxu0 0
        %631 = vmatprep.mubr.bf16.mxu0 0
        %632 = vmatmul.mubr.bf16.gmra.mrb[0].mxu0 %v493
        %v633 = vpop.f32.mrb[0].mxu0
        %v634 = vadd.f32 %v474, %v633
        %v635 = vpop.f32.mrb[0].mxu0
        %v636 = vpop.f32.mrb[0].mxu0
        %v637 = vpop.f32.mrb[0].mxu0
        %638 = vdwg.mxu0
        %v643 = vunpack.c.l.b16 %v451
        %v644 = vunpack.c.l.b16 %v452
        %v645 = vunpack.c.l.b16 %v453
        %v646 = vunpack.c.l.b16 %v454
        %v647 = vpack.c.b16 %v644, %v643
        %v648 = vpack.c.b16 %v646, %v645
        %651 = vmatprep.subr.bf16.mxu0 0
        %652 = vmatpush1.bf16.msra.mxu0 %v647
        %653 = vmatprep.subr.bf16.mxu0 0
        %654 = vmatpush1.bf16.msra.mxu0 %v648
        %655 = vmatprep.subr.bf16.mxu0 0
        %656 = vmatpush1.bf16.msra.mxu0 0
        %657 = vmatprep.subr.bf16.mxu0 0
        %658 = vmatpush1.bf16.msra.mxu0 0
        %659 = vmatprep.subr.bf16.mxu0 0
        %660 = vmatpush1.bf16.msra.mxu0 0
        %661 = vmatprep.subr.bf16.mxu0 0
        %662 = vmatpush1.bf16.msra.mxu0 0
        %663 = vmatprep.subr.bf16.mxu0 0
        %664 = vmatpush1.bf16.msra.mxu0 0
        %665 = vmatprep.subr.bf16.mxu0 0
        %666 = vmatpush1.bf16.msra.mxu0 0
        %667 = vmatprep.subr.bf16.mxu0 0
        %668 = vmatpush1.bf16.msra.mxu0 0
        %669 = vmatprep.subr.bf16.mxu0 0
        %670 = vmatpush1.bf16.msra.mxu0 0
        %671 = vmatprep.subr.bf16.mxu0 0
        %672 = vmatpush1.bf16.msra.mxu0 0
        %673 = vmatprep.subr.bf16.mxu0 0
        %674 = vmatpush1.bf16.msra.mxu0 0
        %675 = vmatprep.subr.bf16.mxu0 0
        %676 = vmatpush1.bf16.msra.mxu0 0
        %677 = vmatprep.subr.bf16.mxu0 0
        %678 = vmatpush1.bf16.msra.mxu0 0
        %679 = vmatprep.subr.bf16.mxu0 0
        %680 = vmatpush1.bf16.msra.mxu0 0
        %681 = vmatprep.subr.bf16.mxu0 0
        %682 = vmatpush1.bf16.msra.mxu0 0
        %683 = vmatprep.mubr.bf16.mxu0 0
        %684 = vmatmul.mubr.bf16.gmra.mrb[0].mxu0 %v493
        %v685 = vpop.f32.mrb[0].mxu0
        %v686 = vadd.f32 %v478, %v685
        %v687 = vpop.f32.mrb[0].mxu0
        %v688 = vpop.f32.mrb[0].mxu0
        %v689 = vpop.f32.mrb[0].mxu0
        %690 = vdwg.mxu0
        %v691 = vpack.c.bf16 %v530, %v530
        %v692 = vpack.c.bf16 %v582, %v582
        %v693 = vpack.c.bf16 %v634, %v634
        %v694 = vpack.c.bf16 %v686, %v686
        %696 = vrot.lane.b32.xlu0 %v691, 120
        %v697 = vpop.permute.xlu0 %696
        %vm698 = vcmask 64512
        %v700 = vsel %vm698, %v691, 0
        %v703 = vsel %vm698, %v697, 0
        %705 = vmatprep.subr.bf16.mxu0 0
        %706 = vmatpush1.bf16.xpose.msra.mxu0 %v703
        %707 = vmatprep.subr.bf16.mxu0 0
        %708 = vmatpush1.bf16.xpose.msra.mxu0 0
        %709 = vmatprep.subr.bf16.mxu0 0
        %710 = vmatpush1.bf16.xpose.msra.mxu0 0
        %711 = vmatprep.subr.bf16.mxu0 0
        %712 = vmatpush1.bf16.xpose.msra.mxu0 0
        %713 = vmatprep.subr.bf16.mxu0 0
        %714 = vmatpush1.bf16.xpose.msra.mxu0 0
        %715 = vmatprep.subr.bf16.mxu0 0
        %716 = vmatpush1.bf16.xpose.msra.mxu0 0
        %717 = vmatprep.subr.bf16.mxu0 0
        %718 = vmatpush1.bf16.xpose.msra.mxu0 0
        %719 = vmatprep.subr.bf16.mxu0 0
        %720 = vmatpush1.bf16.xpose.msra.mxu0 0
        %721 = vmatprep.subr.bf16.mxu0 0
        %722 = vmatpush1.bf16.xpose.msra.mxu0 0
        %723 = vmatprep.subr.bf16.mxu0 0
        %724 = vmatpush1.bf16.xpose.msra.mxu0 0
        %725 = vmatprep.subr.bf16.mxu0 0
        %726 = vmatpush1.bf16.xpose.msra.mxu0 0
        %727 = vmatprep.subr.bf16.mxu0 0
        %728 = vmatpush1.bf16.xpose.msra.mxu0 0
        %729 = vmatprep.subr.bf16.mxu0 0
        %730 = vmatpush1.bf16.xpose.msra.mxu0 0
        %731 = vmatprep.subr.bf16.mxu0 0
        %732 = vmatpush1.bf16.xpose.msra.mxu0 0
        %733 = vmatprep.subr.bf16.mxu0 0
        %734 = vmatpush1.bf16.xpose.msra.mxu0 0
        %735 = vmatprep.subr.bf16.mxu0 0
        %736 = vmatpush1.bf16.xpose.msra.mxu0 0
        %737 = vmatprep.mubr.bf16.mxu0 0
        %738 = vmatmul.mubr.bf16.gmra.mrb[0].mxu0 %v700
        %v739 = vpop.f32.mrb[0].mxu0
        %v740 = vadd.f32 0.0, %v739
        %v741 = vpop.f32.mrb[0].mxu0
        %v742 = vpop.f32.mrb[0].mxu0
        %v743 = vpop.f32.mrb[0].mxu0
        %744 = vdwg.mxu0
        %746 = vrot.lane.b32.xlu0 %v692, 120
        %v747 = vpop.permute.xlu0 %746
        %v749 = vsel %vm698, %v692, 0
        %v752 = vsel %vm698, %v747, 0
        %754 = vmatprep.subr.bf16.mxu0 0
        %755 = vmatpush1.bf16.xpose.msra.mxu0 %v752
        %756 = vmatprep.subr.bf16.mxu0 0
        %757 = vmatpush1.bf16.xpose.msra.mxu0 0
        %758 = vmatprep.subr.bf16.mxu0 0
        %759 = vmatpush1.bf16.xpose.msra.mxu0 0
        %760 = vmatprep.subr.bf16.mxu0 0
        %761 = vmatpush1.bf16.xpose.msra.mxu0 0
        %762 = vmatprep.subr.bf16.mxu0 0
        %763 = vmatpush1.bf16.xpose.msra.mxu0 0
        %764 = vmatprep.subr.bf16.mxu0 0
        %765 = vmatpush1.bf16.xpose.msra.mxu0 0
        %766 = vmatprep.subr.bf16.mxu0 0
        %767 = vmatpush1.bf16.xpose.msra.mxu0 0
        %768 = vmatprep.subr.bf16.mxu0 0
        %769 = vmatpush1.bf16.xpose.msra.mxu0 0
        %770 = vmatprep.subr.bf16.mxu0 0
        %771 = vmatpush1.bf16.xpose.msra.mxu0 0
        %772 = vmatprep.subr.bf16.mxu0 0
        %773 = vmatpush1.bf16.xpose.msra.mxu0 0
        %774 = vmatprep.subr.bf16.mxu0 0
        %775 = vmatpush1.bf16.xpose.msra.mxu0 0
        %776 = vmatprep.subr.bf16.mxu0 0
        %777 = vmatpush1.bf16.xpose.msra.mxu0 0
        %778 = vmatprep.subr.bf16.mxu0 0
        %779 = vmatpush1.bf16.xpose.msra.mxu0 0
        %780 = vmatprep.subr.bf16.mxu0 0
        %781 = vmatpush1.bf16.xpose.msra.mxu0 0
        %782 = vmatprep.subr.bf16.mxu0 0
        %783 = vmatpush1.bf16.xpose.msra.mxu0 0
        %784 = vmatprep.subr.bf16.mxu0 0
        %785 = vmatpush1.bf16.xpose.msra.mxu0 0
        %786 = vmatprep.mubr.bf16.mxu0 0
        %787 = vmatmul.mubr.bf16.gmra.mrb[0].mxu0 %v749
        %v788 = vpop.f32.mrb[0].mxu0
        %v789 = vadd.f32 0.0, %v788
        %v790 = vpop.f32.mrb[0].mxu0
        %v791 = vpop.f32.mrb[0].mxu0
        %v792 = vpop.f32.mrb[0].mxu0
        %793 = vdwg.mxu0
        %795 = vrot.lane.b32.xlu0 %v693, 120
        %v796 = vpop.permute.xlu0 %795
        %v798 = vsel %vm698, %v693, 0
        %v801 = vsel %vm698, %v796, 0
        %803 = vmatprep.subr.bf16.mxu0 0
        %804 = vmatpush1.bf16.xpose.msra.mxu0 %v801
        %805 = vmatprep.subr.bf16.mxu0 0
        %806 = vmatpush1.bf16.xpose.msra.mxu0 0
        %807 = vmatprep.subr.bf16.mxu0 0
        %808 = vmatpush1.bf16.xpose.msra.mxu0 0
        %809 = vmatprep.subr.bf16.mxu0 0
        %810 = vmatpush1.bf16.xpose.msra.mxu0 0
        %811 = vmatprep.subr.bf16.mxu0 0
        %812 = vmatpush1.bf16.xpose.msra.mxu0 0
        %813 = vmatprep.subr.bf16.mxu0 0
        %814 = vmatpush1.bf16.xpose.msra.mxu0 0
        %815 = vmatprep.subr.bf16.mxu0 0
        %816 = vmatpush1.bf16.xpose.msra.mxu0 0
        %817 = vmatprep.subr.bf16.mxu0 0
        %818 = vmatpush1.bf16.xpose.msra.mxu0 0
        %819 = vmatprep.subr.bf16.mxu0 0
        %820 = vmatpush1.bf16.xpose.msra.mxu0 0
        %821 = vmatprep.subr.bf16.mxu0 0
        %822 = vmatpush1.bf16.xpose.msra.mxu0 0
        %823 = vmatprep.subr.bf16.mxu0 0
        %824 = vmatpush1.bf16.xpose.msra.mxu0 0
        %825 = vmatprep.subr.bf16.mxu0 0
        %826 = vmatpush1.bf16.xpose.msra.mxu0 0
        %827 = vmatprep.subr.bf16.mxu0 0
        %828 = vmatpush1.bf16.xpose.msra.mxu0 0
        %829 = vmatprep.subr.bf16.mxu0 0
        %830 = vmatpush1.bf16.xpose.msra.mxu0 0
        %831 = vmatprep.subr.bf16.mxu0 0
        %832 = vmatpush1.bf16.xpose.msra.mxu0 0
        %833 = vmatprep.subr.bf16.mxu0 0
        %834 = vmatpush1.bf16.xpose.msra.mxu0 0
        %835 = vmatprep.mubr.bf16.mxu0 0
        %836 = vmatmul.mubr.bf16.gmra.mrb[0].mxu0 %v798
        %v837 = vpop.f32.mrb[0].mxu0
        %v838 = vadd.f32 0.0, %v837
        %v839 = vpop.f32.mrb[0].mxu0
        %v840 = vpop.f32.mrb[0].mxu0
        %v841 = vpop.f32.mrb[0].mxu0
        %842 = vdwg.mxu0
        %844 = vrot.lane.b32.xlu0 %v694, 120
        %v845 = vpop.permute.xlu0 %844
        %v847 = vsel %vm698, %v694, 0
        %v850 = vsel %vm698, %v845, 0
        %852 = vmatprep.subr.bf16.mxu0 0
        %853 = vmatpush1.bf16.xpose.msra.mxu0 %v850
        %854 = vmatprep.subr.bf16.mxu0 0
        %855 = vmatpush1.bf16.xpose.msra.mxu0 0
        %856 = vmatprep.subr.bf16.mxu0 0
        %857 = vmatpush1.bf16.xpose.msra.mxu0 0
        %858 = vmatprep.subr.bf16.mxu0 0
        %859 = vmatpush1.bf16.xpose.msra.mxu0 0
        %860 = vmatprep.subr.bf16.mxu0 0
        %861 = vmatpush1.bf16.xpose.msra.mxu0 0
        %862 = vmatprep.subr.bf16.mxu0 0
        %863 = vmatpush1.bf16.xpose.msra.mxu0 0
        %864 = vmatprep.subr.bf16.mxu0 0
        %865 = vmatpush1.bf16.xpose.msra.mxu0 0
        %866 = vmatprep.subr.bf16.mxu0 0
        %867 = vmatpush1.bf16.xpose.msra.mxu0 0
        %868 = vmatprep.subr.bf16.mxu0 0
        %869 = vmatpush1.bf16.xpose.msra.mxu0 0
        %870 = vmatprep.subr.bf16.mxu0 0
        %871 = vmatpush1.bf16.xpose.msra.mxu0 0
        %872 = vmatprep.subr.bf16.mxu0 0
        %873 = vmatpush1.bf16.xpose.msra.mxu0 0
        %874 = vmatprep.subr.bf16.mxu0 0
        %875 = vmatpush1.bf16.xpose.msra.mxu0 0
        %876 = vmatprep.subr.bf16.mxu0 0
        %877 = vmatpush1.bf16.xpose.msra.mxu0 0
        %878 = vmatprep.subr.bf16.mxu0 0
        %879 = vmatpush1.bf16.xpose.msra.mxu0 0
        %880 = vmatprep.subr.bf16.mxu0 0
        %881 = vmatpush1.bf16.xpose.msra.mxu0 0
        %882 = vmatprep.subr.bf16.mxu0 0
        %883 = vmatpush1.bf16.xpose.msra.mxu0 0
        %884 = vmatprep.mubr.bf16.mxu0 0
        %885 = vmatmul.mubr.bf16.gmra.mrb[0].mxu0 %v847
        %v886 = vpop.f32.mrb[0].mxu0
        %v887 = vadd.f32 0.0, %v886
        %v888 = vpop.f32.mrb[0].mxu0
        %v889 = vpop.f32.mrb[0].mxu0
        %v890 = vpop.f32.mrb[0].mxu0
        %891 = vdwg.mxu0
        %v892 = vsel %vm698, %v740, -inf
        %893 = vmax.xlane.f32.xlu0 %v892
        %v894 = vpop.xlane.xlu0 %893
        %v895 = vsel %vm698, %v789, -inf
        %896 = vmax.xlane.f32.xlu0 %v895
        %v897 = vpop.xlane.xlu0 %896
        %v898 = vsel %vm698, %v838, -inf
        %899 = vmax.xlane.f32.xlu0 %v898
        %v900 = vpop.xlane.xlu0 %899
        %v901 = vsel %vm698, %v887, -inf
        %902 = vmax.xlane.f32.xlu0 %v901
        %v903 = vpop.xlane.xlu0 %902
        %v904 = vsub.f32 %v740, %v894
        %v905 = vsub.f32 %v789, %v897
        %v906 = vsub.f32 %v838, %v900
        %v907 = vsub.f32 %v887, %v903
        %v908 = vmul.f32 %v904, 1.442695
        %v909 = vpow.pop %v908
        %v910 = vmul.f32 %v905, 1.442695
        %v911 = vpow.pop %v910
        %v912 = vmul.f32 %v906, 1.442695
        %v913 = vpow.pop %v912
        %v914 = vmul.f32 %v907, 1.442695
        %v915 = vpow.pop %v914
        %v916 = vsel %vm698, %v909, 0.0
        %917 = vadd.xlane.f32.xlu0 %v916
        %v918 = vpop.xlane.xlu0 %917
        %v919 = vsel %vm698, %v911, 0.0
        %920 = vadd.xlane.f32.xlu0 %v919
        %v921 = vpop.xlane.xlu0 %920
        %v922 = vsel %vm698, %v913, 0.0
        %923 = vadd.xlane.f32.xlu0 %v922
        %v924 = vpop.xlane.xlu0 %923
        %v925 = vsel %vm698, %v915, 0.0
        %926 = vadd.xlane.f32.xlu0 %v925
        %v927 = vpop.xlane.xlu0 %926
        %v928 = vpack.c.bf16 %v909, %v909
        %v929 = vpack.c.bf16 %v911, %v911
        %v930 = vpack.c.bf16 %v913, %v913
        %v931 = vpack.c.bf16 %v915, %v915
        %932 = vrot.lane.b32.xlu0 %v691, 112
        %v933 = vpop.permute.xlu0 %932
        %v935 = vsel %vm698, %v928, 0
        %vm937 = vcmask 1043456
        %v939 = vsel %vm937, %v933, 0
        %941 = vmatprep.subr.bf16.mxu0 0
        %942 = vmatpush1.bf16.msra.mxu0 %v939
        %943 = vmatprep.subr.bf16.mxu0 0
        %944 = vmatpush1.bf16.msra.mxu0 0
        %945 = vmatprep.subr.bf16.mxu0 0
        %946 = vmatpush1.bf16.msra.mxu0 0
        %947 = vmatprep.subr.bf16.mxu0 0
        %948 = vmatpush1.bf16.msra.mxu0 0
        %949 = vmatprep.subr.bf16.mxu0 0
        %950 = vmatpush1.bf16.msra.mxu0 0
        %951 = vmatprep.subr.bf16.mxu0 0
        %952 = vmatpush1.bf16.msra.mxu0 0
        %953 = vmatprep.subr.bf16.mxu0 0
        %954 = vmatpush1.bf16.msra.mxu0 0
        %955 = vmatprep.subr.bf16.mxu0 0
        %956 = vmatpush1.bf16.msra.mxu0 0
        %957 = vmatprep.subr.bf16.mxu0 0
        %958 = vmatpush1.bf16.msra.mxu0 0
        %959 = vmatprep.subr.bf16.mxu0 0
        %960 = vmatpush1.bf16.msra.mxu0 0
        %961 = vmatprep.subr.bf16.mxu0 0
        %962 = vmatpush1.bf16.msra.mxu0 0
        %963 = vmatprep.subr.bf16.mxu0 0
        %964 = vmatpush1.bf16.msra.mxu0 0
        %965 = vmatprep.subr.bf16.mxu0 0
        %966 = vmatpush1.bf16.msra.mxu0 0
        %967 = vmatprep.subr.bf16.mxu0 0
        %968 = vmatpush1.bf16.msra.mxu0 0
        %969 = vmatprep.subr.bf16.mxu0 0
        %970 = vmatpush1.bf16.msra.mxu0 0
        %971 = vmatprep.subr.bf16.mxu0 0
        %972 = vmatpush1.bf16.msra.mxu0 0
        %973 = vmatprep.mubr.bf16.mxu0 0
        %974 = vmatmul.mubr.bf16.gmra.mrb[0].mxu0 %v935
        %v975 = vpop.f32.mrb[0].mxu0
        %v976 = vadd.f32 0.0, %v975
        %v977 = vpop.f32.mrb[0].mxu0
        %v978 = vpop.f32.mrb[0].mxu0
        %v979 = vpop.f32.mrb[0].mxu0
        %980 = vdwg.mxu0
        %981 = vrot.lane.b32.xlu0 %v692, 112
        %v982 = vpop.permute.xlu0 %981
        %v984 = vsel %vm698, %v929, 0
        %v987 = vsel %vm937, %v982, 0
        %989 = vmatprep.subr.bf16.mxu0 0
        %990 = vmatpush1.bf16.msra.mxu0 %v987
        %991 = vmatprep.subr.bf16.mxu0 0
        %992 = vmatpush1.bf16.msra.mxu0 0
        %993 = vmatprep.subr.bf16.mxu0 0
        %994 = vmatpush1.bf16.msra.mxu0 0
        %995 = vmatprep.subr.bf16.mxu0 0
        %996 = vmatpush1.bf16.msra.mxu0 0
        %997 = vmatprep.subr.bf16.mxu0 0
        %998 = vmatpush1.bf16.msra.mxu0 0
        %999 = vmatprep.subr.bf16.mxu0 0
        %1000 = vmatpush1.bf16.msra.mxu0 0
        %1001 = vmatprep.subr.bf16.mxu0 0
        %1002 = vmatpush1.bf16.msra.mxu0 0
        %1003 = vmatprep.subr.bf16.mxu0 0
        %1004 = vmatpush1.bf16.msra.mxu0 0
        %1005 = vmatprep.subr.bf16.mxu0 0
        %1006 = vmatpush1.bf16.msra.mxu0 0
        %1007 = vmatprep.subr.bf16.mxu0 0
        %1008 = vmatpush1.bf16.msra.mxu0 0
        %1009 = vmatprep.subr.bf16.mxu0 0
        %1010 = vmatpush1.bf16.msra.mxu0 0
        %1011 = vmatprep.subr.bf16.mxu0 0
        %1012 = vmatpush1.bf16.msra.mxu0 0
        %1013 = vmatprep.subr.bf16.mxu0 0
        %1014 = vmatpush1.bf16.msra.mxu0 0
        %1015 = vmatprep.subr.bf16.mxu0 0
        %1016 = vmatpush1.bf16.msra.mxu0 0
        %1017 = vmatprep.subr.bf16.mxu0 0
        %1018 = vmatpush1.bf16.msra.mxu0 0
        %1019 = vmatprep.subr.bf16.mxu0 0
        %1020 = vmatpush1.bf16.msra.mxu0 0
        %1021 = vmatprep.mubr.bf16.mxu0 0
        %1022 = vmatmul.mubr.bf16.gmra.mrb[0].mxu0 %v984
        %v1023 = vpop.f32.mrb[0].mxu0
        %v1024 = vadd.f32 0.0, %v1023
        %v1025 = vpop.f32.mrb[0].mxu0
        %v1026 = vpop.f32.mrb[0].mxu0
        %v1027 = vpop.f32.mrb[0].mxu0
        %1028 = vdwg.mxu0
        %1029 = vrot.lane.b32.xlu0 %v693, 112
        %v1030 = vpop.permute.xlu0 %1029
        %v1032 = vsel %vm698, %v930, 0
        %v1035 = vsel %vm937, %v1030, 0
        %1037 = vmatprep.subr.bf16.mxu0 0
        %1038 = vmatpush1.bf16.msra.mxu0 %v1035
        %1039 = vmatprep.subr.bf16.mxu0 0
        %1040 = vmatpush1.bf16.msra.mxu0 0
        %1041 = vmatprep.subr.bf16.mxu0 0
        %1042 = vmatpush1.bf16.msra.mxu0 0
        %1043 = vmatprep.subr.bf16.mxu0 0
        %1044 = vmatpush1.bf16.msra.mxu0 0
        %1045 = vmatprep.subr.bf16.mxu0 0
        %1046 = vmatpush1.bf16.msra.mxu0 0
        %1047 = vmatprep.subr.bf16.mxu0 0
        %1048 = vmatpush1.bf16.msra.mxu0 0
        %1049 = vmatprep.subr.bf16.mxu0 0
        %1050 = vmatpush1.bf16.msra.mxu0 0
        %1051 = vmatprep.subr.bf16.mxu0 0
        %1052 = vmatpush1.bf16.msra.mxu0 0
        %1053 = vmatprep.subr.bf16.mxu0 0
        %1054 = vmatpush1.bf16.msra.mxu0 0
        %1055 = vmatprep.subr.bf16.mxu0 0
        %1056 = vmatpush1.bf16.msra.mxu0 0
        %1057 = vmatprep.subr.bf16.mxu0 0
        %1058 = vmatpush1.bf16.msra.mxu0 0
        %1059 = vmatprep.subr.bf16.mxu0 0
        %1060 = vmatpush1.bf16.msra.mxu0 0
        %1061 = vmatprep.subr.bf16.mxu0 0
        %1062 = vmatpush1.bf16.msra.mxu0 0
        %1063 = vmatprep.subr.bf16.mxu0 0
        %1064 = vmatpush1.bf16.msra.mxu0 0
        %1065 = vmatprep.subr.bf16.mxu0 0
        %1066 = vmatpush1.bf16.msra.mxu0 0
        %1067 = vmatprep.subr.bf16.mxu0 0
        %1068 = vmatpush1.bf16.msra.mxu0 0
        %1069 = vmatprep.mubr.bf16.mxu0 0
        %1070 = vmatmul.mubr.bf16.gmra.mrb[0].mxu0 %v1032
        %v1071 = vpop.f32.mrb[0].mxu0
        %v1072 = vadd.f32 0.0, %v1071
        %v1073 = vpop.f32.mrb[0].mxu0
        %v1074 = vpop.f32.mrb[0].mxu0
        %v1075 = vpop.f32.mrb[0].mxu0
        %1076 = vdwg.mxu0
        %1077 = vrot.lane.b32.xlu0 %v694, 112
        %v1078 = vpop.permute.xlu0 %1077
        %v1080 = vsel %vm698, %v931, 0
        %v1083 = vsel %vm937, %v1078, 0
        %1085 = vmatprep.subr.bf16.mxu0 0
        %1086 = vmatpush1.bf16.msra.mxu0 %v1083
        %1087 = vmatprep.subr.bf16.mxu0 0
        %1088 = vmatpush1.bf16.msra.mxu0 0
        %1089 = vmatprep.subr.bf16.mxu0 0
        %1090 = vmatpush1.bf16.msra.mxu0 0
        %1091 = vmatprep.subr.bf16.mxu0 0
        %1092 = vmatpush1.bf16.msra.mxu0 0
        %1093 = vmatprep.subr.bf16.mxu0 0
        %1094 = vmatpush1.bf16.msra.mxu0 0
        %1095 = vmatprep.subr.bf16.mxu0 0
        %1096 = vmatpush1.bf16.msra.mxu0 0
        %1097 = vmatprep.subr.bf16.mxu0 0
        %1098 = vmatpush1.bf16.msra.mxu0 0
        %1099 = vmatprep.subr.bf16.mxu0 0
        %1100 = vmatpush1.bf16.msra.mxu0 0
        %1101 = vmatprep.subr.bf16.mxu0 0
        %1102 = vmatpush1.bf16.msra.mxu0 0
        %1103 = vmatprep.subr.bf16.mxu0 0
        %1104 = vmatpush1.bf16.msra.mxu0 0
        %1105 = vmatprep.subr.bf16.mxu0 0
        %1106 = vmatpush1.bf16.msra.mxu0 0
        %1107 = vmatprep.subr.bf16.mxu0 0
        %1108 = vmatpush1.bf16.msra.mxu0 0
        %1109 = vmatprep.subr.bf16.mxu0 0
        %1110 = vmatpush1.bf16.msra.mxu0 0
        %1111 = vmatprep.subr.bf16.mxu0 0
        %1112 = vmatpush1.bf16.msra.mxu0 0
        %1113 = vmatprep.subr.bf16.mxu0 0
        %1114 = vmatpush1.bf16.msra.mxu0 0
        %1115 = vmatprep.subr.bf16.mxu0 0
        %1116 = vmatpush1.bf16.msra.mxu0 0
        %1117 = vmatprep.mubr.bf16.mxu0 0
        %1118 = vmatmul.mubr.bf16.gmra.mrb[0].mxu0 %v1080
        %v1119 = vpop.f32.mrb[0].mxu0
        %v1120 = vadd.f32 0.0, %v1119
        %v1121 = vpop.f32.mrb[0].mxu0
        %v1122 = vpop.f32.mrb[0].mxu0
        %v1123 = vpop.f32.mrb[0].mxu0
        %1124 = vdwg.mxu0
        %v1125 = vrcp.pop %v918
        %v1126 = vrcp.pop %v921
        %v1127 = vrcp.pop %v924
        %v1128 = vrcp.pop %v927
        %v1129 = vmul.f32 %v976, %v1125
        %v1130 = vmul.f32 %v1024, %v1126
        %v1131 = vmul.f32 %v1072, %v1127
        %v1132 = vmul.f32 %v1120, %v1128
        %v1133 = vpack.c.bf16 %v1129, %v1129
        %v1134 = vpack.c.bf16 %v1130, %v1130
        %v1135 = vpack.c.bf16 %v1131, %v1131
        %v1136 = vpack.c.bf16 %v1132, %v1132
        %1138 = vrot.lane.b32.xlu0 %v1134, 8
        %v1139 = vpop.permute.xlu0 %1138
        %1141 = vrot.lane.b32.xlu0 %v1135, 16
        %v1142 = vpop.permute.xlu0 %1141
        %1144 = vrot.lane.b32.xlu0 %v1136, 24
        %v1145 = vpop.permute.xlu0 %1144
        %v1148 = vsel %vm698, %v1133, %v1139
        %vm1149 = vcmask 130048
        %v1151 = vsel %vm1149, %v1148, %v1142
        %vm1152 = vcmask 195584
        %v1154 = vsel %vm1152, %v1151, %v1145
        %v1155 = vld [vmem:[%s3] sm:$0xf]
        %v1156 = vld [vmem:[%s3 + $0x4] sm:$0xf]
        %v1157 = vld [vmem:[%s3 + $0x8] sm:$0xf]
        %v1158 = vld [vmem:[%s3 + $0xc] sm:$0xf]
        %v1159 = vld [vmem:[%s4] sm:$0x1]
        %v1160 = vunpack.c.l.bf16 %v1159
        %v1161 = vlaneseq
        %v1162 = vshrl.u32 %v1161, 7
        %v1163 = vsub.s32 0, %v1162
        %v1164 = vrot.slane %v1160, %v1163
        %v1169 = vunpack.c.l.b16 %v1155
        %v1170 = vunpack.c.l.b16 %v1156
        %v1171 = vunpack.c.l.b16 %v1157
        %v1172 = vunpack.c.l.b16 %v1158
        %v1173 = vpack.c.b16 %v1170, %v1169
        %v1174 = vpack.c.b16 %v1172, %v1171
        %v1177 = vsel %vm491, %v1154, 0
        %1179 = vmatprep.subr.bf16.mxu0 0
        %1180 = vmatpush1.bf16.msra.mxu0 %v1173
        %1181 = vmatprep.subr.bf16.mxu0 0
        %1182 = vmatpush1.bf16.msra.mxu0 %v1174
        %1183 = vmatprep.subr.bf16.mxu0 0
        %1184 = vmatpush1.bf16.msra.mxu0 0
        %1185 = vmatprep.subr.bf16.mxu0 0
        %1186 = vmatpush1.bf16.msra.mxu0 0
        %1187 = vmatprep.subr.bf16.mxu0 0
        %1188 = vmatpush1.bf16.msra.mxu0 0
        %1189 = vmatprep.subr.bf16.mxu0 0
        %1190 = vmatpush1.bf16.msra.mxu0 0
        %1191 = vmatprep.subr.bf16.mxu0 0
        %1192 = vmatpush1.bf16.msra.mxu0 0
        %1193 = vmatprep.subr.bf16.mxu0 0
        %1194 = vmatpush1.bf16.msra.mxu0 0
        %1195 = vmatprep.subr.bf16.mxu0 0
        %1196 = vmatpush1.bf16.msra.mxu0 0
        %1197 = vmatprep.subr.bf16.mxu0 0
        %1198 = vmatpush1.bf16.msra.mxu0 0
        %1199 = vmatprep.subr.bf16.mxu0 0
        %1200 = vmatpush1.bf16.msra.mxu0 0
        %1201 = vmatprep.subr.bf16.mxu0 0
        %1202 = vmatpush1.bf16.msra.mxu0 0
        %1203 = vmatprep.subr.bf16.mxu0 0
        %1204 = vmatpush1.bf16.msra.mxu0 0
        %1205 = vmatprep.subr.bf16.mxu0 0
        %1206 = vmatpush1.bf16.msra.mxu0 0
        %1207 = vmatprep.subr.bf16.mxu0 0
        %1208 = vmatpush1.bf16.msra.mxu0 0
        %1209 = vmatprep.subr.bf16.mxu0 0
        %1210 = vmatpush1.bf16.msra.mxu0 0
        %1211 = vmatprep.mubr.bf16.mxu0 0
        %1212 = vmatmul.mubr.bf16.gmra.mrb[0].mxu0 %v1177
        %v1213 = vpop.f32.mrb[0].mxu0
        %v1214 = vadd.f32 %v1164, %v1213
        %v1215 = vpop.f32.mrb[0].mxu0
        %v1216 = vpop.f32.mrb[0].mxu0
        %v1217 = vpop.f32.mrb[0].mxu0
        %1218 = vdwg.mxu0
        %v1219 = vadd.f32 %v1214, %v438
        %v1220 = vsel %vm491, %v1219, 0.0
        %1221 = vadd.xlane.f32.xlu0 %v1220
        %v1222 = vpop.xlane.xlu0 %1221
        %v1223 = vrcp.pop 32.0
        %v1224 = vmul.f32 %v1222, %v1223
        %v1225 = vsub.f32 %v1219, %v1224
        %v1226 = vmul.f32 %v1225, %v1225
        %v1227 = vsel %vm491, %v1226, 0.0
        %1228 = vadd.xlane.f32.xlu0 %v1227
        %v1229 = vpop.xlane.xlu0 %1228
        %v1230 = vmul.f32 %v1229, %v1223
        %v1231 = vadd.f32 %v1230, 1e-05
        %v1232 = vrsqrt.pop %v1231
        %v1233 = vmul.f32 %v1225, %v1232
        %v1234 = vld [vmem:[%s9] sm:$0x1]
        %v1236 = vlaneseq
        %v1237 = vshrl.u32 %v1236, 7
        %v1238 = vsub.s32 0, %v1237
        %v1239 = vrot.slane %v1234, %v1238
        %v1241 = vmul.f32 %v1233, %v1239
        %v1242 = vld [vmem:[%s10] sm:$0x1]
        %v1244 = vlaneseq
        %v1245 = vshrl.u32 %v1244, 7
        %v1246 = vsub.s32 0, %v1245
        %v1247 = vrot.slane %v1242, %v1246
        %v1249 = vadd.f32 %v1241, %v1247
        %v1250 = vpack.c.bf16 %v1249, %v1249
        %v1251 = vld [vmem:[%s5] sm:$0xf]
        %v1252 = vld [vmem:[%s5 + $0x4] sm:$0xf]
        %v1253 = vld [vmem:[%s5 + $0x8] sm:$0xf]
        %v1254 = vld [vmem:[%s5 + $0xc] sm:$0xf]
        %v1255 = vld [vmem:[%s6] sm:$0x1]
        %v1256 = vunpack.c.l.bf16 %v1255
        %v1257 = vlaneseq
        %v1258 = vshrl.u32 %v1257, 7
        %v1259 = vsub.s32 0, %v1258
        %v1260 = vrot.slane %v1256, %v1259
        %v1265 = vunpack.c.l.b16 %v1251
        %v1266 = vunpack.c.l.b16 %v1252
        %v1267 = vunpack.c.l.b16 %v1253
        %v1268 = vunpack.c.l.b16 %v1254
        %v1269 = vpack.c.b16 %v1266, %v1265
        %v1270 = vpack.c.b16 %v1268, %v1267
        %v1274 = vsel %vm491, %v1250, 0
        %1276 = vmatprep.subr.bf16.mxu0 0
        %1277 = vmatpush1.bf16.msra.mxu0 %v1269
        %1278 = vmatprep.subr.bf16.mxu0 0
        %1279 = vmatpush1.bf16.msra.mxu0 %v1270
        %1280 = vmatprep.subr.bf16.mxu0 0
        %1281 = vmatpush1.bf16.msra.mxu0 0
        %1282 = vmatprep.subr.bf16.mxu0 0
        %1283 = vmatpush1.bf16.msra.mxu0 0
        %1284 = vmatprep.subr.bf16.mxu0 0
        %1285 = vmatpush1.bf16.msra.mxu0 0
        %1286 = vmatprep.subr.bf16.mxu0 0
        %1287 = vmatpush1.bf16.msra.mxu0 0
        %1288 = vmatprep.subr.bf16.mxu0 0
        %1289 = vmatpush1.bf16.msra.mxu0 0
        %1290 = vmatprep.subr.bf16.mxu0 0
        %1291 = vmatpush1.bf16.msra.mxu0 0
        %1292 = vmatprep.subr.bf16.mxu0 0
        %1293 = vmatpush1.bf16.msra.mxu0 0
        %1294 = vmatprep.subr.bf16.mxu0 0
        %1295 = vmatpush1.bf16.msra.mxu0 0
        %1296 = vmatprep.subr.bf16.mxu0 0
        %1297 = vmatpush1.bf16.msra.mxu0 0
        %1298 = vmatprep.subr.bf16.mxu0 0
        %1299 = vmatpush1.bf16.msra.mxu0 0
        %1300 = vmatprep.subr.bf16.mxu0 0
        %1301 = vmatpush1.bf16.msra.mxu0 0
        %1302 = vmatprep.subr.bf16.mxu0 0
        %1303 = vmatpush1.bf16.msra.mxu0 0
        %1304 = vmatprep.subr.bf16.mxu0 0
        %1305 = vmatpush1.bf16.msra.mxu0 0
        %1306 = vmatprep.subr.bf16.mxu0 0
        %1307 = vmatpush1.bf16.msra.mxu0 0
        %1308 = vmatprep.mubr.bf16.mxu0 0
        %1309 = vmatmul.mubr.bf16.gmra.mrb[0].mxu0 %v1274
        %v1310 = vpop.f32.mrb[0].mxu0
        %v1311 = vadd.f32 %v1260, %v1310
        %v1312 = vpop.f32.mrb[0].mxu0
        %v1313 = vpop.f32.mrb[0].mxu0
        %v1314 = vpop.f32.mrb[0].mxu0
        %1315 = vdwg.mxu0
        %v1316 = vmul.f32 %v1311, 0.01
        %v1317 = vmax.f32 %v1311, %v1316
        %v1318 = vpack.c.bf16 %v1317, %v1317
        %v1319 = vld [vmem:[%s7] sm:$0xf]
        %v1320 = vld [vmem:[%s7 + $0x4] sm:$0xf]
        %v1321 = vld [vmem:[%s7 + $0x8] sm:$0xf]
        %v1322 = vld [vmem:[%s7 + $0xc] sm:$0xf]
        %v1323 = vld [vmem:[%s8] sm:$0x1]
        %v1324 = vunpack.c.l.bf16 %v1323
        %v1325 = vlaneseq
        %v1326 = vshrl.u32 %v1325, 7
        %v1327 = vsub.s32 0, %v1326
        %v1328 = vrot.slane %v1324, %v1327
        %v1333 = vunpack.c.l.b16 %v1319
        %v1334 = vunpack.c.l.b16 %v1320
        %v1335 = vunpack.c.l.b16 %v1321
        %v1336 = vunpack.c.l.b16 %v1322
        %v1337 = vpack.c.b16 %v1334, %v1333
        %v1338 = vpack.c.b16 %v1336, %v1335
        %v1342 = vsel %vm491, %v1318, 0
        %1344 = vmatprep.subr.bf16.mxu0 0
        %1345 = vmatpush1.bf16.msra.mxu0 %v1337
        %1346 = vmatprep.subr.bf16.mxu0 0
        %1347 = vmatpush1.bf16.msra.mxu0 %v1338
        %1348 = vmatprep.subr.bf16.mxu0 0
        %1349 = vmatpush1.bf16.msra.mxu0 0
        %1350 = vmatprep.subr.bf16.mxu0 0
        %1351 = vmatpush1.bf16.msra.mxu0 0
        %1352 = vmatprep.subr.bf16.mxu0 0
        %1353 = vmatpush1.bf16.msra.mxu0 0
        %1354 = vmatprep.subr.bf16.mxu0 0
        %1355 = vmatpush1.bf16.msra.mxu0 0
        %1356 = vmatprep.subr.bf16.mxu0 0
        %1357 = vmatpush1.bf16.msra.mxu0 0
        %1358 = vmatprep.subr.bf16.mxu0 0
        %1359 = vmatpush1.bf16.msra.mxu0 0
        %1360 = vmatprep.subr.bf16.mxu0 0
        %1361 = vmatpush1.bf16.msra.mxu0 0
        %1362 = vmatprep.subr.bf16.mxu0 0
        %1363 = vmatpush1.bf16.msra.mxu0 0
        %1364 = vmatprep.subr.bf16.mxu0 0
        %1365 = vmatpush1.bf16.msra.mxu0 0
        %1366 = vmatprep.subr.bf16.mxu0 0
        %1367 = vmatpush1.bf16.msra.mxu0 0
        %1368 = vmatprep.subr.bf16.mxu0 0
        %1369 = vmatpush1.bf16.msra.mxu0 0
        %1370 = vmatprep.subr.bf16.mxu0 0
        %1371 = vmatpush1.bf16.msra.mxu0 0
        %1372 = vmatprep.subr.bf16.mxu0 0
        %1373 = vmatpush1.bf16.msra.mxu0 0
        %1374 = vmatprep.subr.bf16.mxu0 0
        %1375 = vmatpush1.bf16.msra.mxu0 0
        %1376 = vmatprep.mubr.bf16.mxu0 0
        %1377 = vmatmul.mubr.bf16.gmra.mrb[0].mxu0 %v1342
        %v1378 = vpop.f32.mrb[0].mxu0
        %v1379 = vadd.f32 %v1328, %v1378
        %v1380 = vpop.f32.mrb[0].mxu0
        %v1381 = vpop.f32.mrb[0].mxu0
        %v1382 = vpop.f32.mrb[0].mxu0
        %1383 = vdwg.mxu0
        %v1384 = vadd.f32 %v1379, %v1249
        %v1385 = vsel %vm491, %v1384, 0.0
        %1386 = vadd.xlane.f32.xlu0 %v1385
        %v1387 = vpop.xlane.xlu0 %1386
        %v1388 = vmul.f32 %v1387, %v1223
        %v1389 = vsub.f32 %v1384, %v1388
        %v1390 = vmul.f32 %v1389, %v1389
        %v1391 = vsel %vm491, %v1390, 0.0
        %1392 = vadd.xlane.f32.xlu0 %v1391
        %v1393 = vpop.xlane.xlu0 %1392
        %v1394 = vmul.f32 %v1393, %v1223
        %v1395 = vadd.f32 %v1394, 1e-05
        %v1396 = vrsqrt.pop %v1395
        %v1397 = vmul.f32 %v1389, %v1396
        %v1398 = vld [vmem:[%s11] sm:$0x1]
        %v1400 = vlaneseq
        %v1401 = vshrl.u32 %v1400, 7
        %v1402 = vsub.s32 0, %v1401
        %v1403 = vrot.slane %v1398, %v1402
        %v1405 = vmul.f32 %v1397, %v1403
        %v1406 = vld [vmem:[%s12] sm:$0x1]
        %v1408 = vlaneseq
        %v1409 = vshrl.u32 %v1408, 7
        %v1410 = vsub.s32 0, %v1409
        %v1411 = vrot.slane %v1406, %v1410
        %v1413 = vadd.f32 %v1405, %v1411
        %v1414 = vpack.c.bf16 %v1413, %v1413
        %vm1415 = vcmask 257024
        %1416 = vst.msk [vmem:[%s431] sm:$0xf] %vm1415, %v1414
        %s1417 = sand.u32 %s313, 1
        %s1418 = scalar_lea.sflag [#allocation3], %s1417
        %s1419 = sand.u32 %s313, 1
        %s1420 = smul.addr %s1419, 4
        %s1421 = scalar_lea.vmem [#allocation2], %s1420
        // Predicated region
        $region73: #{tpu_custom_call.1} parent=71 // pred_check
          %p1422 = pneg %p323
        $region74: #{tpu_custom_call.1} parent=71 // pred_check_branch
          %1424 = sbr.rel (%p1422) target = $region76
        $region75: #{tpu_custom_call.1} parent=71 // pred_region
          %s1426 = ssub.s32 64, 64
          %1427 = vsyncadd %s1418, %s1426
          %s1428 = smul.addr %s27, 64
          %s1429 = scalar_lea.hbm %s13, %s1428
          %s1431 = sshll.u32 %s1421, 4
          %s1432 = int_to_ptr.vmem [resolvable:$true] %s1431
          %1434 = dma.vmem_to_hbm [thread:$0]  %s1432, 64, %s1429, %s1418
        $region76: #{tpu_custom_call.1} parent=71 // pred_fallthru
          _
      $region72: #{tpu_custom_call.1} parent=5 // pred_fallthru
        _
      %p1435 = scmp.le.s32.totalorder 2, %s22
      // Predicated region
      $region77: #{tpu_custom_call.1} parent=5 // pred_check
        %p1436 = pneg %p1435
      $region78: #{tpu_custom_call.1} parent=5 // pred_check_branch
        %1438 = sbr.rel (%p1436) target = $region80
      $region79: #{tpu_custom_call.1} parent=5 // pred_region
        %s1439 = ssub.s32 %s22, 2
        // Predicated region
        $region81: #{tpu_custom_call.1} parent=79 // pred_check
          %p1440 = pneg %p329
        $region82: #{tpu_custom_call.1} parent=79 // pred_check_branch
          %1442 = sbr.rel (%p1440) target = $region84
        $region83: #{tpu_custom_call.1} parent=79 // pred_region
          %s1443 = sand.u32 %s314, 1
          %s1444 = scalar_lea.sflag [#allocation3], %s1443
          %s1445 = sand.u32 %s314, 1
          %s1446 = smul.addr %s1445, 4
          %s1447 = scalar_lea.vmem [#allocation2], %s1446
          %1448 = dma.done %s1444, 64
        $region84: #{tpu_custom_call.1} parent=79 // pred_fallthru
          _
      $region80: #{tpu_custom_call.1} parent=5 // pred_fallthru
        _
    $region6: #{tpu_custom_call.1} parent=1 // loop_footer
      %s26 = sadd.s32 1, %s22
    $region7: #{tpu_custom_call.1} parent=1 // loop_footer_branch
      %21 = sbr.rel target = $region3
    $region8: #{tpu_custom_call.1} parent=1 // loop_exit
      _
    %1449 = vsyncpa [#allocation3], 1
    %s1450 = scalar_lea.sflag [#allocation3], 1
    %1451 = vsyncpa %s1450, 1

// kernel: tpu_custom_call.1
$region0: #{tpu_custom_call.1}
  #allocation0 [shape = 'u32[]', space=smem, size = 0x4, offset = 0x4, fixed_abs, tag = 'smem constant byte address 0x4 - core index']
  #allocation1 [shape = 'u32[144,128]{1,0:T(1,128)}', space=vmem, size = 0x12000, scoped, tag = 'internal scratch']
  %s0 = inlined_call_operand.vmem [shape: bf16[2,8,32], index: 0, kind: input, shape index: {}]
  %s1 = inlined_call_operand.vmem [shape: bf16[4,32,24], index: 1, kind: input, shape index: {}]
  %s2 = inlined_call_operand.vmem [shape: bf16[4,1,24], index: 2, kind: input, shape index: {}]
  %s3 = inlined_call_operand.vmem [shape: bf16[32,32], index: 3, kind: input, shape index: {}]
  %s4 = inlined_call_operand.vmem [shape: bf16[1,32], index: 4, kind: input, shape index: {}]
  %s5 = inlined_call_operand.vmem [shape: bf16[32,32], index: 5, kind: input, shape index: {}]
  %s6 = inlined_call_operand.vmem [shape: bf16[1,32], index: 6, kind: input, shape index: {}]
  %s7 = inlined_call_operand.vmem [shape: bf16[32,32], index: 7, kind: input, shape index: {}]
  %s8 = inlined_call_operand.vmem [shape: bf16[1,32], index: 8, kind: input, shape index: {}]
  %s9 = inlined_call_operand.vmem [shape: f32[1,32], index: 9, kind: input, shape index: {}]
  %s10 = inlined_call_operand.vmem [shape: f32[1,32], index: 10, kind: input, shape index: {}]
  %s11 = inlined_call_operand.vmem [shape: f32[1,32], index: 11, kind: input, shape index: {}]
  %s12 = inlined_call_operand.vmem [shape: f32[1,32], index: 12, kind: input, shape index: {}]
  %s13 = inlined_call_operand.hbm [shape: bf16[2,8,32], index: 13, kind: output, shape index: {}]
  %s14 = sld [smem:[#allocation0]]
  $region85: #{tpu_custom_call.1} parent=0
    _
  %s16 = ssub.s32 1, %s14
  %s17 = scalar_select 0, %s16, %s14
  $region1: #{tpu_custom_call.1} parent=0
    #allocation2 [shape = 'u8[4096]{0}', space=vmem, size = 0x1000, scoped, tag = 'output window, operand 0']
    #allocation3 [shape = 's32[2]{0}', space=sflag, size = 0x8, scoped, tag = 'scoped memory for tpu_custom_call.1']
    %18 = vsyncpa [#allocation3], 0
    %s19 = scalar_lea.sflag [#allocation3], 1
    %20 = vsyncpa %s19, 0
    loop: start=0, step=1, limit=4
    $region2: #{tpu_custom_call.1} parent=1 // loop_pre_header
      _
    $region3: #{tpu_custom_call.1} parent=1 // loop_header
      %s22 = sphi 0, %s26
      %p23 = scmp.ge.s32.totalorder %s22, 4
      %s32 = sphi 0, %s34
      %s35 = sphi 0, %s32
      %s36 = sphi 0, %s35
      %s52 = sphi 0, %s36
      %s56 = sphi 0, %s56
      %s58 = sphi 0, %s56
      %s59 = sphi 0, %s58
      %s73 = sphi 0, %s59
      %s77 = sphi 0, %s77
      %s79 = sphi 0, %s77
      %s80 = sphi 0, %s79
      %s94 = sphi 0, %s80
      %s98 = sphi 0, %s98
      %s100 = sphi 0, %s98
      %s101 = sphi 0, %s100
      %s115 = sphi 0, %s101
      %s119 = sphi 0, %s119
      %s121 = sphi 0, %s119
      %s122 = sphi 0, %s121
      %s136 = sphi 0, %s122
      %s140 = sphi 0, %s140
      %s142 = sphi 0, %s140
      %s143 = sphi 0, %s142
      %s157 = sphi 0, %s143
      %s161 = sphi 0, %s161
      %s163 = sphi 0, %s161
      %s164 = sphi 0, %s163
      %s178 = sphi 0, %s164
      %s182 = sphi 0, %s182
      %s184 = sphi 0, %s182
      %s185 = sphi 0, %s184
      %s199 = sphi 0, %s185
      %s203 = sphi 0, %s203
      %s205 = sphi 0, %s203
      %s206 = sphi 0, %s205
      %s220 = sphi 0, %s206
      %s224 = sphi 0, %s224
      %s226 = sphi 0, %s224
      %s227 = sphi 0, %s226
      %s241 = sphi 0, %s227
      %s245 = sphi 0, %s245
      %s247 = sphi 0, %s245
      %s248 = sphi 0, %s247
      %s262 = sphi 0, %s248
      %s266 = sphi 0, %s266
      %s268 = sphi 0, %s266
      %s269 = sphi 0, %s268
      %s283 = sphi 0, %s269
      %s287 = sphi 0, %s287
      %s289 = sphi 0, %s287
      %s290 = sphi 0, %s289
      %s304 = sphi 0, %s290
      %s310 = sphi 0, %s312
      %s313 = sphi 0, %s310
      %s314 = sphi 0, %s313
      %s330 = sphi 0, %s314
    $region4: #{tpu_custom_call.1} parent=1 // loop_header_branch
      %25 = sbr.rel (%p23) target = $region8
    $region5: #{tpu_custom_call.1} parent=1 // loop_body
      %s27 = ssub.s32 %s22, 1
      %s28 = ssub.s32 %s22, 2
      %s29 = sadd.s32 %s22, 1
      %s30 = ssub.s32 %s22, %s29
      %p31 = scmp.eq.s32.totalorder %s30, 0
      %s33 = sadd.s32 %s32, 1
      %s34 = scalar_select %p31, %s32, %s33
      %p37 = pneg %p31
      %p38 = scmp.eq.s32.totalorder %s22, 1
      %p39 = por %p37, %p38
      %p40 = scmp.ne.s32.totalorder %s32, %s35
      %p41 = scmp.eq.s32.totalorder %s22, 0
      %p42 = por %p40, %p41
      %p43 = scmp.ne.s32.totalorder %s32, %s35
      %p44 = scmp.eq.s32.totalorder %s27, 1
      %p45 = por %p43, %p44
      %p46 = scmp.ne.s32.totalorder %s35, %s36
      %p47 = scmp.eq.s32.totalorder %s27, 0
      %p48 = por %p46, %p47
      %p49 = scmp.ne.s32.totalorder %s35, %s36
      %p50 = scmp.eq.s32.totalorder %s28, 1
      %p51 = por %p49, %p50
      %p53 = scmp.ne.s32.totalorder %s36, %s52
      %p54 = scmp.eq.s32.totalorder %s28, 0
      %p55 = por %p53, %p54
      %s57 = sadd.s32 %s56, 1
      %p60 = scmp.eq.s32.totalorder %s22, 1
      %p61 = scmp.ne.s32.totalorder %s56, %s58
      %p62 = scmp.eq.s32.totalorder %s22, 0
      %p63 = por %p61, %p62
      %p64 = scmp.ne.s32.totalorder %s56, %s58
      %p65 = scmp.eq.s32.totalorder %s27, 1
      %p66 = por %p64, %p65
      %p67 = scmp.ne.s32.totalorder %s58, %s59
      %p68 = scmp.eq.s32.totalorder %s27, 0
      %p69 = por %p67, %p68
      %p70 = scmp.ne.s32.totalorder %s58, %s59
      %p71 = scmp.eq.s32.totalorder %s28, 1
      %p72 = por %p70, %p71
      %p74 = scmp.ne.s32.totalorder %s59, %s73
      %p75 = scmp.eq.s32.totalorder %s28, 0
      %p76 = por %p74, %p75
      %s78 = sadd.s32 %s77, 1
      %p81 = scmp.eq.s32.totalorder %s22, 1
      %p82 = scmp.ne.s32.totalorder %s77, %s79
      %p83 = scmp.eq.s32.totalorder %s22, 0
      %p84 = por %p82, %p83
      %p85 = scmp.ne.s32.totalorder %s77, %s79
      %p86 = scmp.eq.s32.totalorder %s27, 1
      %p87 = por %p85, %p86
      %p88 = scmp.ne.s32.totalorder %s79, %s80
      %p89 = scmp.eq.s32.totalorder %s27, 0
      %p90 = por %p88, %p89
      %p91 = scmp.ne.s32.totalorder %s79, %s80
      %p92 = scmp.eq.s32.totalorder %s28, 1
      %p93 = por %p91, %p92
      %p95 = scmp.ne.s32.totalorder %s80, %s94
      %p96 = scmp.eq.s32.totalorder %s28, 0
      %p97 = por %p95, %p96
      %s99 = sadd.s32 %s98, 1
      %p102 = scmp.eq.s32.totalorder %s22, 1
      %p103 = scmp.ne.s32.totalorder %s98, %s100
      %p104 = scmp.eq.s32.totalorder %s22, 0
      %p105 = por %p103, %p104
      %p106 = scmp.ne.s32.totalorder %s98, %s100
      %p107 = scmp.eq.s32.totalorder %s27, 1
      %p108 = por %p106, %p107
      %p109 = scmp.ne.s32.totalorder %s100, %s101
      %p110 = scmp.eq.s32.totalorder %s27, 0
      %p111 = por %p109, %p110
      %p112 = scmp.ne.s32.totalorder %s100, %s101
      %p113 = scmp.eq.s32.totalorder %s28, 1
      %p114 = por %p112, %p113
      %p116 = scmp.ne.s32.totalorder %s101, %s115
      %p117 = scmp.eq.s32.totalorder %s28, 0
      %p118 = por %p116, %p117
      %s120 = sadd.s32 %s119, 1
      %p123 = scmp.eq.s32.totalorder %s22, 1
      %p124 = scmp.ne.s32.totalorder %s119, %s121
      %p125 = scmp.eq.s32.totalorder %s22, 0
      %p126 = por %p124, %p125
      %p127 = scmp.ne.s32.totalorder %s119, %s121
      %p128 = scmp.eq.s32.totalorder %s27, 1
      %p129 = por %p127, %p128
      %p130 = scmp.ne.s32.totalorder %s121, %s122
      %p131 = scmp.eq.s32.totalorder %s27, 0
      %p132 = por %p130, %p131
      %p133 = scmp.ne.s32.totalorder %s121, %s122
      %p134 = scmp.eq.s32.totalorder %s28, 1
      %p135 = por %p133, %p134
      %p137 = scmp.ne.s32.totalorder %s122, %s136
      %p138 = scmp.eq.s32.totalorder %s28, 0
      %p139 = por %p137, %p138
      %s141 = sadd.s32 %s140, 1
      %p144 = scmp.eq.s32.totalorder %s22, 1
      %p145 = scmp.ne.s32.totalorder %s140, %s142
      %p146 = scmp.eq.s32.totalorder %s22, 0
      %p147 = por %p145, %p146
      %p148 = scmp.ne.s32.totalorder %s140, %s142
      %p149 = scmp.eq.s32.totalorder %s27, 1
      %p150 = por %p148, %p149
      %p151 = scmp.ne.s32.totalorder %s142, %s143
      %p152 = scmp.eq.s32.totalorder %s27, 0
      %p153 = por %p151, %p152
      %p154 = scmp.ne.s32.totalorder %s142, %s143
      %p155 = scmp.eq.s32.totalorder %s28, 1
      %p156 = por %p154, %p155
      %p158 = scmp.ne.s32.totalorder %s143, %s157
      %p159 = scmp.eq.s32.totalorder %s28, 0
      %p160 = por %p158, %p159
      %s162 = sadd.s32 %s161, 1
      %p165 = scmp.eq.s32.totalorder %s22, 1
      %p166 = scmp.ne.s32.totalorder %s161, %s163
      %p167 = scmp.eq.s32.totalorder %s22, 0
      %p168 = por %p166, %p167
      %p169 = scmp.ne.s32.totalorder %s161, %s163
      %p170 = scmp.eq.s32.totalorder %s27, 1
      %p171 = por %p169, %p170
      %p172 = scmp.ne.s32.totalorder %s163, %s164
      %p173 = scmp.eq.s32.totalorder %s27, 0
      %p174 = por %p172, %p173
      %p175 = scmp.ne.s32.totalorder %s163, %s164
      %p176 = scmp.eq.s32.totalorder %s28, 1
      %p177 = por %p175, %p176
      %p179 = scmp.ne.s32.totalorder %s164, %s178
      %p180 = scmp.eq.s32.totalorder %s28, 0
      %p181 = por %p179, %p180
      %s183 = sadd.s32 %s182, 1
      %p186 = scmp.eq.s32.totalorder %s22, 1
      %p187 = scmp.ne.s32.totalorder %s182, %s184
      %p188 = scmp.eq.s32.totalorder %s22, 0
      %p189 = por %p187, %p188
      %p190 = scmp.ne.s32.totalorder %s182, %s184
      %p191 = scmp.eq.s32.totalorder %s27, 1
      %p192 = por %p190, %p191
      %p193 = scmp.ne.s32.totalorder %s184, %s185
      %p194 = scmp.eq.s32.totalorder %s27, 0
      %p195 = por %p193, %p194
      %p196 = scmp.ne.s32.totalorder %s184, %s185
      %p197 = scmp.eq.s32.totalorder %s28, 1
      %p198 = por %p196, %p197
      %p200 = scmp.ne.s32.totalorder %s185, %s199
      %p201 = scmp.eq.s32.totalorder %s28, 0
      %p202 = por %p200, %p201
      %s204 = sadd.s32 %s203, 1
      %p207 = scmp.eq.s32.totalorder %s22, 1
      %p208 = scmp.ne.s32.totalorder %s203, %s205
      %p209 = scmp.eq.s32.totalorder %s22, 0
      %p210 = por %p208, %p209
      %p211 = scmp.ne.s32.totalorder %s203, %s205
      %p212 = scmp.eq.s32.totalorder %s27, 1
      %p213 = por %p211, %p212
      %p214 = scmp.ne.s32.totalorder %s205, %s206
      %p215 = scmp.eq.s32.totalorder %s27, 0
      %p216 = por %p214, %p215
      %p217 = scmp.ne.s32.totalorder %s205, %s206
      %p218 = scmp.eq.s32.totalorder %s28, 1
      %p219 = por %p217, %p218
      %p221 = scmp.ne.s32.totalorder %s206, %s220
      %p222 = scmp.eq.s32.totalorder %s28, 0
      %p223 = por %p221, %p222
      %s225 = sadd.s32 %s224, 1
      %p228 = scmp.eq.s32.totalorder %s22, 1
      %p229 = scmp.ne.s32.totalorder %s224, %s226
      %p230 = scmp.eq.s32.totalorder %s22, 0
      %p231 = por %p229, %p230
      %p232 = scmp.ne.s32.totalorder %s224, %s226
      %p233 = scmp.eq.s32.totalorder %s27, 1
      %p234 = por %p232, %p233
      %p235 = scmp.ne.s32.totalorder %s226, %s227
      %p236 = scmp.eq.s32.totalorder %s27, 0
      %p237 = por %p235, %p236
      %p238 = scmp.ne.s32.totalorder %s226, %s227
      %p239 = scmp.eq.s32.totalorder %s28, 1
      %p240 = por %p238, %p239
      %p242 = scmp.ne.s32.totalorder %s227, %s241
      %p243 = scmp.eq.s32.totalorder %s28, 0
      %p244 = por %p242, %p243
      %s246 = sadd.s32 %s245, 1
      %p249 = scmp.eq.s32.totalorder %s22, 1
      %p250 = scmp.ne.s32.totalorder %s245, %s247
      %p251 = scmp.eq.s32.totalorder %s22, 0
      %p252 = por %p250, %p251
      %p253 = scmp.ne.s32.totalorder %s245, %s247
      %p254 = scmp.eq.s32.totalorder %s27, 1
      %p255 = por %p253, %p254
      %p256 = scmp.ne.s32.totalorder %s247, %s248
      %p257 = scmp.eq.s32.totalorder %s27, 0
      %p258 = por %p256, %p257
      %p259 = scmp.ne.s32.totalorder %s247, %s248
      %p260 = scmp.eq.s32.totalorder %s28, 1
      %p261 = por %p259, %p260
      %p263 = scmp.ne.s32.totalorder %s248, %s262
      %p264 = scmp.eq.s32.totalorder %s28, 0
      %p265 = por %p263, %p264
      %s267 = sadd.s32 %s266, 1
      %p270 = scmp.eq.s32.totalorder %s22, 1
      %p271 = scmp.ne.s32.totalorder %s266, %s268
      %p272 = scmp.eq.s32.totalorder %s22, 0
      %p273 = por %p271, %p272
      %p274 = scmp.ne.s32.totalorder %s266, %s268
      %p275 = scmp.eq.s32.totalorder %s27, 1
      %p276 = por %p274, %p275
      %p277 = scmp.ne.s32.totalorder %s268, %s269
      %p278 = scmp.eq.s32.totalorder %s27, 0
      %p279 = por %p277, %p278
      %p280 = scmp.ne.s32.totalorder %s268, %s269
      %p281 = scmp.eq.s32.totalorder %s28, 1
      %p282 = por %p280, %p281
      %p284 = scmp.ne.s32.totalorder %s269, %s283
      %p285 = scmp.eq.s32.totalorder %s28, 0
      %p286 = por %p284, %p285
      %s288 = sadd.s32 %s287, 1
      %p291 = scmp.eq.s32.totalorder %s22, 1
      %p292 = scmp.ne.s32.totalorder %s287, %s289
      %p293 = scmp.eq.s32.totalorder %s22, 0
      %p294 = por %p292, %p293
      %p295 = scmp.ne.s32.totalorder %s287, %s289
      %p296 = scmp.eq.s32.totalorder %s27, 1
      %p297 = por %p295, %p296
      %p298 = scmp.ne.s32.totalorder %s289, %s290
      %p299 = scmp.eq.s32.totalorder %s27, 0
      %p300 = por %p298, %p299
      %p301 = scmp.ne.s32.totalorder %s289, %s290
      %p302 = scmp.eq.s32.totalorder %s28, 1
      %p303 = por %p301, %p302
      %p305 = scmp.ne.s32.totalorder %s290, %s304
      %p306 = scmp.eq.s32.totalorder %s28, 0
      %p307 = por %p305, %p306
      %s308 = ssub.s32 %s22, %s29
      %p309 = scmp.eq.s32.totalorder %s308, 0
      %s311 = sadd.s32 %s310, 1
      %s312 = scalar_select %p309, %s310, %s311
      %p315 = pneg %p309
      %p316 = scmp.eq.s32.totalorder %s22, 1
      %p317 = por %p315, %p316
      %p318 = scmp.ne.s32.totalorder %s310, %s313
      %p319 = scmp.eq.s32.totalorder %s22, 0
      %p320 = por %p318, %p319
      %p321 = scmp.ne.s32.totalorder %s310, %s313
      %p322 = scmp.eq.s32.totalorder %s27, 1
      %p323 = por %p321, %p322
      %p324 = scmp.ne.s32.totalorder %s313, %s314
      %p325 = scmp.eq.s32.totalorder %s27, 0
      %p326 = por %p324, %p325
      %p327 = scmp.ne.s32.totalorder %s313, %s314
      %p328 = scmp.eq.s32.totalorder %s28, 1
      %p329 = por %p327, %p328
      %p331 = scmp.ne.s32.totalorder %s314, %s330
      %p332 = scmp.eq.s32.totalorder %s28, 0
      %p333 = por %p331, %p332
      %p334 = scmp.le.s32.totalorder 1, %s22
      %p335 = scmp.lt.s32.totalorder %s22, 3
      %p336 = pnand %p334, %p335
      %p337 = pneg %p336
      // Predicated region
      $region9: #{tpu_custom_call.1} parent=5 // pred_check
        _
      $region10: #{tpu_custom_call.1} parent=5 // pred_check_branch
        %339 = sbr.rel (%p336) target = $region12
      $region11: #{tpu_custom_call.1} parent=5 // pred_region
        %s340 = ssub.s32 %s22, 1
        // Predicated region
        $region13: #{tpu_custom_call.1} parent=11 // pred_check
          %p341 = pneg %p69
        $region14: #{tpu_custom_call.1} parent=11 // pred_check_branch
          %343 = sbr.rel (%p341) target = $region16
        $region15: #{tpu_custom_call.1} parent=11 // pred_region
          _
        $region16: #{tpu_custom_call.1} parent=11 // pred_fallthru
          _
        // Predicated region
        $region17: #{tpu_custom_call.1} parent=11 // pred_check
          %p344 = pneg %p90
        $region18: #{tpu_custom_call.1} parent=11 // pred_check_branch
          %346 = sbr.rel (%p344) target = $region20
        $region19: #{tpu_custom_call.1} parent=11 // pred_region
          _
        $region20: #{tpu_custom_call.1} parent=11 // pred_fallthru
          _
        // Predicated region
        $region21: #{tpu_custom_call.1} parent=11 // pred_check
          %p347 = pneg %p111
        $region22: #{tpu_custom_call.1} parent=11 // pred_check_branch
          %349 = sbr.rel (%p347) target = $region24
        $region23: #{tpu_custom_call.1} parent=11 // pred_region
          _
        $region24: #{tpu_custom_call.1} parent=11 // pred_fallthru
          _
        // Predicated region
        $region25: #{tpu_custom_call.1} parent=11 // pred_check
          %p350 = pneg %p132
        $region26: #{tpu_custom_call.1} parent=11 // pred_check_branch
          %352 = sbr.rel (%p350) target = $region28
        $region27: #{tpu_custom_call.1} parent=11 // pred_region
          _
        $region28: #{tpu_custom_call.1} parent=11 // pred_fallthru
          _
        // Predicated region
        $region29: #{tpu_custom_call.1} parent=11 // pred_check
          %p353 = pneg %p153
        $region30: #{tpu_custom_call.1} parent=11 // pred_check_branch
          %355 = sbr.rel (%p353) target = $region32
        $region31: #{tpu_custom_call.1} parent=11 // pred_region
          _
        $region32: #{tpu_custom_call.1} parent=11 // pred_fallthru
          _
        // Predicated region
        $region33: #{tpu_custom_call.1} parent=11 // pred_check
          %p356 = pneg %p174
        $region34: #{tpu_custom_call.1} parent=11 // pred_check_branch
          %358 = sbr.rel (%p356) target = $region36
        $region35: #{tpu_custom_call.1} parent=11 // pred_region
          _
        $region36: #{tpu_custom_call.1} parent=11 // pred_fallthru
          _
        // Predicated region
        $region37: #{tpu_custom_call.1} parent=11 // pred_check
          %p359 = pneg %p195
        $region38: #{tpu_custom_call.1} parent=11 // pred_check_branch
          %361 = sbr.rel (%p359) target = $region40
        $region39: #{tpu_custom_call.1} parent=11 // pred_region
          _
        $region40: #{tpu_custom_call.1} parent=11 // pred_fallthru
          _
        // Predicated region
        $region41: #{tpu_custom_call.1} parent=11 // pred_check
          %p362 = pneg %p216
        $region42: #{tpu_custom_call.1} parent=11 // pred_check_branch
          %364 = sbr.rel (%p362) target = $region44
        $region43: #{tpu_custom_call.1} parent=11 // pred_region
          _
        $region44: #{tpu_custom_call.1} parent=11 // pred_fallthru
          _
        // Predicated region
        $region45: #{tpu_custom_call.1} parent=11 // pred_check
          %p365 = pneg %p237
        $region46: #{tpu_custom_call.1} parent=11 // pred_check_branch
          %367 = sbr.rel (%p365) target = $region48
        $region47: #{tpu_custom_call.1} parent=11 // pred_region
          _
        $region48: #{tpu_custom_call.1} parent=11 // pred_fallthru
          _
        // Predicated region
        $region49: #{tpu_custom_call.1} parent=11 // pred_check
          %p368 = pneg %p258
        $region50: #{tpu_custom_call.1} parent=11 // pred_check_branch
          %370 = sbr.rel (%p368) target = $region52
        $region51: #{tpu_custom_call.1} parent=11 // pred_region
          _
        $region52: #{tpu_custom_call.1} parent=11 // pred_fallthru
          _
        // Predicated region
        $region53: #{tpu_custom_call.1} parent=11 // pred_check
          %p371 = pneg %p279
        $region54: #{tpu_custom_call.1} parent=11 // pred_check_branch
          %373 = sbr.rel (%p371) target = $region56
        $region55: #{tpu_custom_call.1} parent=11 // pred_region
          _
        $region56: #{tpu_custom_call.1} parent=11 // pred_fallthru
          _
        // Predicated region
        $region57: #{tpu_custom_call.1} parent=11 // pred_check
          %p374 = pneg %p300
        $region58: #{tpu_custom_call.1} parent=11 // pred_check_branch
          %376 = sbr.rel (%p374) target = $region60
        $region59: #{tpu_custom_call.1} parent=11 // pred_region
          _
        $region60: #{tpu_custom_call.1} parent=11 // pred_fallthru
          _
      $region12: #{tpu_custom_call.1} parent=5 // pred_fallthru
        _
      %p377 = scmp.lt.s32.totalorder %s22, 2
      // Predicated region
      $region61: #{tpu_custom_call.1} parent=5 // pred_check
        %p378 = pneg %p377
      $region62: #{tpu_custom_call.1} parent=5 // pred_check_branch
        %380 = sbr.rel (%p378) target = $region64
      $region63: #{tpu_custom_call.1} parent=5 // pred_region
        // Predicated region
        $region65: #{tpu_custom_call.1} parent=63 // pred_check
          %p381 = pneg %p42
        $region66: #{tpu_custom_call.1} parent=63 // pred_check_branch
          %383 = sbr.rel (%p381) target = $region68
        $region67: #{tpu_custom_call.1} parent=63 // pred_region
          %p384 = scmp.lt.s32.totalorder %s22, 1
          %s385 = scalar_select %p384, %s22, 1
          %s386 = smul.addr %s385, 4
          %s387 = scalar_lea.vmem %s0, %s386
        $region68: #{tpu_custom_call.1} parent=63 // pred_fallthru
          _
      $region64: #{tpu_custom_call.1} parent=5 // pred_fallthru
        _
      %p388 = scmp.le.s32.totalorder 1, %s22
      %p389 = scmp.lt.s32.totalorder %s22, 3
      %p390 = pnand %p388, %p389
      %p391 = pneg %p390
      // Predicated region
      $region69: #{tpu_custom_call.1} parent=5 // pred_check
        _
      $region70: #{tpu_custom_call.1} parent=5 // pred_check_branch
        %393 = sbr.rel (%p390) target = $region72
      $region71: #{tpu_custom_call.1} parent=5 // pred_region
        %s394 = ssub.s32 %s22, 1
        %p395 = scmp.lt.s32.totalorder %s27, 1
        %s396 = scalar_select %p395, %s27, 1
        %s397 = smul.addr %s396, 4
        %s398 = scalar_lea.vmem %s0, %s397
        %p399 = pneg %p48
        %p400 = pneg %p45
        %p401 = pneg %p69
        %p402 = pneg %p66
        %p403 = pneg %p90
        %p404 = pneg %p87
        %p405 = pneg %p111
        %p406 = pneg %p108
        %p407 = pneg %p132
        %p408 = pneg %p129
        %p409 = pneg %p153
        %p410 = pneg %p150
        %p411 = pneg %p174
        %p412 = pneg %p171
        %p413 = pneg %p195
        %p414 = pneg %p192
        %p415 = pneg %p216
        %p416 = pneg %p213
        %p417 = pneg %p237
        %p418 = pneg %p234
        %p419 = pneg %p258
        %p420 = pneg %p255
        %p421 = pneg %p279
        %p422 = pneg %p276
        %p423 = pneg %p300
        %p424 = pneg %p297
        %p425 = pneg %p326
        %p426 = pneg %p323
        %s427 = sand.u32 %s313, 1
        %s428 = scalar_lea.sflag [#allocation3], %s427
        %s429 = sand.u32 %s313, 1
        %s430 = smul.addr %s429, 4
        %s431 = scalar_lea.vmem [#allocation2], %s430
        %p432 = scmp.lt.s32.totalorder %s27, 1
        %s433 = scalar_select %p432, %s27, 1
        %s434 = smul.addr %s433, 4
        %s435 = scalar_lea.vmem %s0, %s434
        %v437 = vld [vmem:[%s435] sm:$0xf]
        %v438 = vunpack.c.l.bf16 %v437
        %v439 = vld [vmem:[%s1] sm:$0xf]
        %v440 = vld [vmem:[%s1 + $0x4] sm:$0xf]
        %v441 = vld [vmem:[%s1 + $0x8] sm:$0xf]
        %v442 = vld [vmem:[%s1 + $0xc] sm:$0xf]
        %v443 = vld [vmem:[%s1 + $0x10] sm:$0xf]
        %v444 = vld [vmem:[%s1 + $0x14] sm:$0xf]
        %v445 = vld [vmem:[%s1 + $0x18] sm:$0xf]
        %v446 = vld [vmem:[%s1 + $0x1c] sm:$0xf]
        %v447 = vld [vmem:[%s1 + $0x20] sm:$0xf]
        %v448 = vld [vmem:[%s1 + $0x24] sm:$0xf]
        %v449 = vld [vmem:[%s1 + $0x28] sm:$0xf]
        %v450 = vld [vmem:[%s1 + $0x2c] sm:$0xf]
        %v451 = vld [vmem:[%s1 + $0x30] sm:$0xf]
        %v452 = vld [vmem:[%s1 + $0x34] sm:$0xf]
        %v453 = vld [vmem:[%s1 + $0x38] sm:$0xf]
        %v454 = vld [vmem:[%s1 + $0x3c] sm:$0xf]
        %v455 = vld [vmem:[%s2] sm:$0x1]
        %v456 = vld [vmem:[%s2 + $0x1] sm:$0x1]
        %v457 = vld [vmem:[%s2 + $0x2] sm:$0x1]
        %v458 = vld [vmem:[%s2 + $0x3] sm:$0x1]
        %v459 = vunpack.c.l.bf16 %v455
        %v460 = vunpack.c.l.bf16 %v456
        %v461 = vunpack.c.l.bf16 %v457
        %v462 = vunpack.c.l.bf16 %v458
        %v463 = vlaneseq
        %v464 = vshrl.u32 %v463, 7
        %v465 = vsub.s32 0, %v464
        %v466 = vrot.slane %v459, %v465
        %v467 = vlaneseq
        %v468 = vshrl.u32 %v467, 7
        %v469 = vsub.s32 0, %v468
        %v470 = vrot.slane %v460, %v469
        %v471 = vlaneseq
        %v472 = vshrl.u32 %v471, 7
        %v473 = vsub.s32 0, %v472
        %v474 = vrot.slane %v461, %v473
        %v475 = vlaneseq
        %v476 = vshrl.u32 %v475, 7
        %v477 = vsub.s32 0, %v476
        %v478 = vrot.slane %v462, %v477
        %v483 = vunpack.c.l.b16 %v439
        %v484 = vunpack.c.l.b16 %v440
        %v485 = vunpack.c.l.b16 %v441
        %v486 = vunpack.c.l.b16 %v442
        %v487 = vpack.c.b16 %v484, %v483
        %v488 = vpack.c.b16 %v486, %v485
        %vm491 = vcmask 261120
        %v493 = vsel %vm491, %v437, 0
        %495 = vmatprep.subr.bf16.mxu0 0
        %496 = vmatpush1.bf16.msra.mxu0 %v487
        %497 = vmatprep.subr.bf16.mxu0 0
        %498 = vmatpush1.bf16.msra.mxu0 %v488
        %499 = vmatprep.subr.bf16.mxu0 0
        %500 = vmatpush1.bf16.msra.mxu0 0
        %501 = vmatprep.subr.bf16.mxu0 0
        %502 = vmatpush1.bf16.msra.mxu0 0
        %503 = vmatprep.subr.bf16.mxu0 0
        %504 = vmatpush1.bf16.msra.mxu0 0
        %505 = vmatprep.subr.bf16.mxu0 0
        %506 = vmatpush1.bf16.msra.mxu0 0
        %507 = vmatprep.subr.bf16.mxu0 0
        %508 = vmatpush1.bf16.msra.mxu0 0
        %509 = vmatprep.subr.bf16.mxu0 0
        %510 = vmatpush1.bf16.msra.mxu0 0
        %511 = vmatprep.subr.bf16.mxu0 0
        %512 = vmatpush1.bf16.msra.mxu0 0
        %513 = vmatprep.subr.bf16.mxu0 0
        %514 = vmatpush1.bf16.msra.mxu0 0
        %515 = vmatprep.subr.bf16.mxu0 0
        %516 = vmatpush1.bf16.msra.mxu0 0
        %517 = vmatprep.subr.bf16.mxu0 0
        %518 = vmatpush1.bf16.msra.mxu0 0
        %519 = vmatprep.subr.bf16.mxu0 0
        %520 = vmatpush1.bf16.msra.mxu0 0
        %521 = vmatprep.subr.bf16.mxu0 0
        %522 = vmatpush1.bf16.msra.mxu0 0
        %523 = vmatprep.subr.bf16.mxu0 0
        %524 = vmatpush1.bf16.msra.mxu0 0
        %525 = vmatprep.subr.bf16.mxu0 0
        %526 = vmatpush1.bf16.msra.mxu0 0
        %527 = vmatprep.mubr.bf16.mxu0 0
        %528 = vmatmul.mubr.bf16.gmra.mrb[0].mxu0 %v493
        %v529 = vpop.f32.mrb[0].mxu0
        %v530 = vadd.f32 %v466, %v529
        %v531 = vpop.f32.mrb[0].mxu0
        %v532 = vpop.f32.mrb[0].mxu0
        %v533 = vpop.f32.mrb[0].mxu0
        %534 = vdwg.mxu0
        %v539 = vunpack.c.l.b16 %v443
        %v540 = vunpack.c.l.b16 %v444
        %v541 = vunpack.c.l.b16 %v445
        %v542 = vunpack.c.l.b16 %v446
        %v543 = vpack.c.b16 %v540, %v539
        %v544 = vpack.c.b16 %v542, %v541
        %547 = vmatprep.subr.bf16.mxu0 0
        %548 = vmatpush1.bf16.msra.mxu0 %v543
        %549 = vmatprep.subr.bf16.mxu0 0
        %550 = vmatpush1.bf16.msra.mxu0 %v544
        %551 = vmatprep.subr.bf16.mxu0 0
        %552 = vmatpush1.bf16.msra.mxu0 0
        %553 = vmatprep.subr.bf16.mxu0 0
        %554 = vmatpush1.bf16.msra.mxu0 0
        %555 = vmatprep.subr.bf16.mxu0 0
        %556 = vmatpush1.bf16.msra.mxu0 0
        %557 = vmatprep.subr.bf16.mxu0 0
        %558 = vmatpush1.bf16.msra.mxu0 0
        %559 = vmatprep.subr.bf16.mxu0 0
        %560 = vmatpush1.bf16.msra.mxu0 0
        %561 = vmatprep.subr.bf16.mxu0 0
        %562 = vmatpush1.bf16.msra.mxu0 0
        %563 = vmatprep.subr.bf16.mxu0 0
        %564 = vmatpush1.bf16.msra.mxu0 0
        %565 = vmatprep.subr.bf16.mxu0 0
        %566 = vmatpush1.bf16.msra.mxu0 0
        %567 = vmatprep.subr.bf16.mxu0 0
        %568 = vmatpush1.bf16.msra.mxu0 0
        %569 = vmatprep.subr.bf16.mxu0 0
        %570 = vmatpush1.bf16.msra.mxu0 0
        %571 = vmatprep.subr.bf16.mxu0 0
        %572 = vmatpush1.bf16.msra.mxu0 0
        %573 = vmatprep.subr.bf16.mxu0 0
        %574 = vmatpush1.bf16.msra.mxu0 0
        %575 = vmatprep.subr.bf16.mxu0 0
        %576 = vmatpush1.bf16.msra.mxu0 0
        %577 = vmatprep.subr.bf16.mxu0 0
        %578 = vmatpush1.bf16.msra.mxu0 0
        %579 = vmatprep.mubr.bf16.mxu0 0
        %580 = vmatmul.mubr.bf16.gmra.mrb[0].mxu0 %v493
        %v581 = vpop.f32.mrb[0].mxu0
        %v582 = vadd.f32 %v470, %v581
        %v583 = vpop.f32.mrb[0].mxu0
        %v584 = vpop.f32.mrb[0].mxu0
        %v585 = vpop.f32.mrb[0].mxu0
        %586 = vdwg.mxu0
        %v591 = vunpack.c.l.b16 %v447
        %v592 = vunpack.c.l.b16 %v448
        %v593 = vunpack.c.l.b16 %v449
        %v594 = vunpack.c.l.b16 %v450
        %v595 = vpack.c.b16 %v592, %v591
        %v596 = vpack.c.b16 %v594, %v593
        %599 = vmatprep.subr.bf16.mxu0 0
        %600 = vmatpush1.bf16.msra.mxu0 %v595
        %601 = vmatprep.subr.bf16.mxu0 0
        %602 = vmatpush1.bf16.msra.mxu0 %v596
        %603 = vmatprep.subr.bf16.mxu0 0
        %604 = vmatpush1.bf16.msra.mxu0 0
        %605 = vmatprep.subr.bf16.mxu0 0
        %606 = vmatpush1.bf16.msra.mxu0 0
        %607 = vmatprep.subr.bf16.mxu0 0
        %608 = vmatpush1.bf16.msra.mxu0 0
        %609 = vmatprep.subr.bf16.mxu0 0
        %610 = vmatpush1.bf16.msra.mxu0 0
        %611 = vmatprep.subr.bf16.mxu0 0
        %612 = vmatpush1.bf16.msra.mxu0 0
        %613 = vmatprep.subr.bf16.mxu0 0
        %614 = vmatpush1.bf16.msra.mxu0 0
        %615 = vmatprep.subr.bf16.mxu0 0
        %616 = vmatpush1.bf16.msra.mxu0 0
        %617 = vmatprep.subr.bf16.mxu0 0
        %618 = vmatpush1.bf16.msra.mxu0 0
        %619 = vmatprep.subr.bf16.mxu0 0
        %620 = vmatpush1.bf16.msra.mxu0 0
        %621 = vmatprep.subr.bf16.mxu0 0
        %622 = vmatpush1.bf16.msra.mxu0 0
        %623 = vmatprep.subr.bf16.mxu0 0
        %624 = vmatpush1.bf16.msra.mxu0 0
        %625 = vmatprep.subr.bf16.mxu0 0
        %626 = vmatpush1.bf16.msra.mxu0 0
        %627 = vmatprep.subr.bf16.mxu0 0
        %628 = vmatpush1.bf16.msra.mxu0 0
        %629 = vmatprep.subr.bf16.mxu0 0
        %630 = vmatpush1.bf16.msra.mxu0 0
        %631 = vmatprep.mubr.bf16.mxu0 0
        %632 = vmatmul.mubr.bf16.gmra.mrb[0].mxu0 %v493
        %v633 = vpop.f32.mrb[0].mxu0
        %v634 = vadd.f32 %v474, %v633
        %v635 = vpop.f32.mrb[0].mxu0
        %v636 = vpop.f32.mrb[0].mxu0
        %v637 = vpop.f32.mrb[0].mxu0
        %638 = vdwg.mxu0
        %v643 = vunpack.c.l.b16 %v451
        %v644 = vunpack.c.l.b16 %v452
        %v645 = vunpack.c.l.b16 %v453
        %v646 = vunpack.c.l.b16 %v454
        %v647 = vpack.c.b16 %v644, %v643
        %v648 = vpack.c.b16 %v646, %v645
        %651 = vmatprep.subr.bf16.mxu0 0
        %652 = vmatpush1.bf16.msra.mxu0 %v647
        %653 = vmatprep.subr.bf16.mxu0 0
        %654 = vmatpush1.bf16.msra.mxu0 %v648
        %655 = vmatprep.subr.bf16.mxu0 0
        %656 = vmatpush1.bf16.msra.mxu0 0
        %657 = vmatprep.subr.bf16.mxu0 0
        %658 = vmatpush1.bf16.msra.mxu0 0
        %659 = vmatprep.subr.bf16.mxu0 0
        %660 = vmatpush1.bf16.msra.mxu0 0
        %661 = vmatprep.subr.bf16.mxu0 0
        %662 = vmatpush1.bf16.msra.mxu0 0
        %663 = vmatprep.subr.bf16.mxu0 0
        %664 = vmatpush1.bf16.msra.mxu0 0
        %665 = vmatprep.subr.bf16.mxu0 0
        %666 = vmatpush1.bf16.msra.mxu0 0
        %667 = vmatprep.subr.bf16.mxu0 0
        %668 = vmatpush1.bf16.msra.mxu0 0
        %669 = vmatprep.subr.bf16.mxu0 0
        %670 = vmatpush1.bf16.msra.mxu0 0
        %671 = vmatprep.subr.bf16.mxu0 0
        %672 = vmatpush1.bf16.msra.mxu0 0
        %673 = vmatprep.subr.bf16.mxu0 0
        %674 = vmatpush1.bf16.msra.mxu0 0
        %675 = vmatprep.subr.bf16.mxu0 0
        %676 = vmatpush1.bf16.msra.mxu0 0
        %677 = vmatprep.subr.bf16.mxu0 0
        %678 = vmatpush1.bf16.msra.mxu0 0
        %679 = vmatprep.subr.bf16.mxu0 0
        %680 = vmatpush1.bf16.msra.mxu0 0
        %681 = vmatprep.subr.bf16.mxu0 0
        %682 = vmatpush1.bf16.msra.mxu0 0
        %683 = vmatprep.mubr.bf16.mxu0 0
        %684 = vmatmul.mubr.bf16.gmra.mrb[0].mxu0 %v493
        %v685 = vpop.f32.mrb[0].mxu0
        %v686 = vadd.f32 %v478, %v685
        %v687 = vpop.f32.mrb[0].mxu0
        %v688 = vpop.f32.mrb[0].mxu0
        %v689 = vpop.f32.mrb[0].mxu0
        %690 = vdwg.mxu0
        %v691 = vpack.c.bf16 %v530, %v530
        %v692 = vpack.c.bf16 %v582, %v582
        %v693 = vpack.c.bf16 %v634, %v634
        %v694 = vpack.c.bf16 %v686, %v686
        %696 = vrot.lane.b32.xlu0 %v691, 120
        %v697 = vpop.permute.xlu0 %696
        %vm698 = vcmask 64512
        %v700 = vsel %vm698, %v691, 0
        %v703 = vsel %vm698, %v697, 0
        %705 = vmatprep.subr.bf16.mxu0 0
        %706 = vmatpush1.bf16.xpose.msra.mxu0 %v703
        %707 = vmatprep.subr.bf16.mxu0 0
        %708 = vmatpush1.bf16.xpose.msra.mxu0 0
        %709 = vmatprep.subr.bf16.mxu0 0
        %710 = vmatpush1.bf16.xpose.msra.mxu0 0
        %711 = vmatprep.subr.bf16.mxu0 0
        %712 = vmatpush1.bf16.xpose.msra.mxu0 0
        %713 = vmatprep.subr.bf16.mxu0 0
        %714 = vmatpush1.bf16.xpose.msra.mxu0 0
        %715 = vmatprep.subr.bf16.mxu0 0
        %716 = vmatpush1.bf16.xpose.msra.mxu0 0
        %717 = vmatprep.subr.bf16.mxu0 0
        %718 = vmatpush1.bf16.xpose.msra.mxu0 0
        %719 = vmatprep.subr.bf16.mxu0 0
        %720 = vmatpush1.bf16.xpose.msra.mxu0 0
        %721 = vmatprep.subr.bf16.mxu0 0
        %722 = vmatpush1.bf16.xpose.msra.mxu0 0
        %723 = vmatprep.subr.bf16.mxu0 0
        %724 = vmatpush1.bf16.xpose.msra.mxu0 0
        %725 = vmatprep.subr.bf16.mxu0 0
        %726 = vmatpush1.bf16.xpose.msra.mxu0 0
        %727 = vmatprep.subr.bf16.mxu0 0
        %728 = vmatpush1.bf16.xpose.msra.mxu0 0
        %729 = vmatprep.subr.bf16.mxu0 0
        %730 = vmatpush1.bf16.xpose.msra.mxu0 0
        %731 = vmatprep.subr.bf16.mxu0 0
        %732 = vmatpush1.bf16.xpose.msra.mxu0 0
        %733 = vmatprep.subr.bf16.mxu0 0
        %734 = vmatpush1.bf16.xpose.msra.mxu0 0
        %735 = vmatprep.subr.bf16.mxu0 0
        %736 = vmatpush1.bf16.xpose.msra.mxu0 0
        %737 = vmatprep.mubr.bf16.mxu0 0
        %738 = vmatmul.mubr.bf16.gmra.mrb[0].mxu0 %v700
        %v739 = vpop.f32.mrb[0].mxu0
        %v740 = vadd.f32 0.0, %v739
        %v741 = vpop.f32.mrb[0].mxu0
        %v742 = vpop.f32.mrb[0].mxu0
        %v743 = vpop.f32.mrb[0].mxu0
        %744 = vdwg.mxu0
        %746 = vrot.lane.b32.xlu0 %v692, 120
        %v747 = vpop.permute.xlu0 %746
        %v749 = vsel %vm698, %v692, 0
        %v752 = vsel %vm698, %v747, 0
        %754 = vmatprep.subr.bf16.mxu0 0
        %755 = vmatpush1.bf16.xpose.msra.mxu0 %v752
        %756 = vmatprep.subr.bf16.mxu0 0
        %757 = vmatpush1.bf16.xpose.msra.mxu0 0
        %758 = vmatprep.subr.bf16.mxu0 0
        %759 = vmatpush1.bf16.xpose.msra.mxu0 0
        %760 = vmatprep.subr.bf16.mxu0 0
        %761 = vmatpush1.bf16.xpose.msra.mxu0 0
        %762 = vmatprep.subr.bf16.mxu0 0
        %763 = vmatpush1.bf16.xpose.msra.mxu0 0
        %764 = vmatprep.subr.bf16.mxu0 0
        %765 = vmatpush1.bf16.xpose.msra.mxu0 0
        %766 = vmatprep.subr.bf16.mxu0 0
        %767 = vmatpush1.bf16.xpose.msra.mxu0 0
        %768 = vmatprep.subr.bf16.mxu0 0
        %769 = vmatpush1.bf16.xpose.msra.mxu0 0
        %770 = vmatprep.subr.bf16.mxu0 0
        %771 = vmatpush1.bf16.xpose.msra.mxu0 0
        %772 = vmatprep.subr.bf16.mxu0 0
        %773 = vmatpush1.bf16.xpose.msra.mxu0 0
        %774 = vmatprep.subr.bf16.mxu0 0
        %775 = vmatpush1.bf16.xpose.msra.mxu0 0
        %776 = vmatprep.subr.bf16.mxu0 0
        %777 = vmatpush1.bf16.xpose.msra.mxu0 0
        %778 = vmatprep.subr.bf16.mxu0 0
        %779 = vmatpush1.bf16.xpose.msra.mxu0 0
        %780 = vmatprep.subr.bf16.mxu0 0
        %781 = vmatpush1.bf16.xpose.msra.mxu0 0
        %782 = vmatprep.subr.bf16.mxu0 0
        %783 = vmatpush1.bf16.xpose.msra.mxu0 0
        %784 = vmatprep.subr.bf16.mxu0 0
        %785 = vmatpush1.bf16.xpose.msra.mxu0 0
        %786 = vmatprep.mubr.bf16.mxu0 0
        %787 = vmatmul.mubr.bf16.gmra.mrb[0].mxu0 %v749
        %v788 = vpop.f32.mrb[0].mxu0
        %v789 = vadd.f32 0.0, %v788
        %v790 = vpop.f32.mrb[0].mxu0
        %v791 = vpop.f32.mrb[0].mxu0
        %v792 = vpop.f32.mrb[0].mxu0
        %793 = vdwg.mxu0
        %795 = vrot.lane.b32.xlu0 %v693, 120
        %v796 = vpop.permute.xlu0 %795
        %v798 = vsel %vm698, %v693, 0
        %v801 = vsel %vm698, %v796, 0
        %803 = vmatprep.subr.bf16.mxu0 0
        %804 = vmatpush1.bf16.xpose.msra.mxu0 %v801
        %805 = vmatprep.subr.bf16.mxu0 0
        %806 = vmatpush1.bf16.xpose.msra.mxu0 0
        %807 = vmatprep.subr.bf16.mxu0 0
        %808 = vmatpush1.bf16.xpose.msra.mxu0 0
        %809 = vmatprep.subr.bf16.mxu0 0
        %810 = vmatpush1.bf16.xpose.msra.mxu0 0
        %811 = vmatprep.subr.bf16.mxu0 0
        %812 = vmatpush1.bf16.xpose.msra.mxu0 0
        %813 = vmatprep.subr.bf16.mxu0 0
        %814 = vmatpush1.bf16.xpose.msra.mxu0 0
        %815 = vmatprep.subr.bf16.mxu0 0
        %816 = vmatpush1.bf16.xpose.msra.mxu0 0
        %817 = vmatprep.subr.bf16.mxu0 0
        %818 = vmatpush1.bf16.xpose.msra.mxu0 0
        %819 = vmatprep.subr.bf16.mxu0 0
        %820 = vmatpush1.bf16.xpose.msra.mxu0 0
        %821 = vmatprep.subr.bf16.mxu0 0
        %822 = vmatpush1.bf16.xpose.msra.mxu0 0
        %823 = vmatprep.subr.bf16.mxu0 0
        %824 = vmatpush1.bf16.xpose.msra.mxu0 0
        %825 = vmatprep.subr.bf16.mxu0 0
        %826 = vmatpush1.bf16.xpose.msra.mxu0 0
        %827 = vmatprep.subr.bf16.mxu0 0
        %828 = vmatpush1.bf16.xpose.msra.mxu0 0
        %829 = vmatprep.subr.bf16.mxu0 0
        %830 = vmatpush1.bf16.xpose.msra.mxu0 0
        %831 = vmatprep.subr.bf16.mxu0 0
        %832 = vmatpush1.bf16.xpose.msra.mxu0 0
        %833 = vmatprep.subr.bf16.mxu0 0
        %834 = vmatpush1.bf16.xpose.msra.mxu0 0
        %835 = vmatprep.mubr.bf16.mxu0 0
        %836 = vmatmul.mubr.bf16.gmra.mrb[0].mxu0 %v798
        %v837 = vpop.f32.mrb[0].mxu0
        %v838 = vadd.f32 0.0, %v837
        %v839 = vpop.f32.mrb[0].mxu0
        %v840 = vpop.f32.mrb[0].mxu0
        %v841 = vpop.f32.mrb[0].mxu0
        %842 = vdwg.mxu0
        %844 = vrot.lane.b32.xlu0 %v694, 120
        %v845 = vpop.permute.xlu0 %844
        %v847 = vsel %vm698, %v694, 0
        %v850 = vsel %vm698, %v845, 0
        %852 = vmatprep.subr.bf16.mxu0 0
        %853 = vmatpush1.bf16.xpose.msra.mxu0 %v850
        %854 = vmatprep.subr.bf16.mxu0 0
        %855 = vmatpush1.bf16.xpose.msra.mxu0 0
        %856 = vmatprep.subr.bf16.mxu0 0
        %857 = vmatpush1.bf16.xpose.msra.mxu0 0
        %858 = vmatprep.subr.bf16.mxu0 0
        %859 = vmatpush1.bf16.xpose.msra.mxu0 0
        %860 = vmatprep.subr.bf16.mxu0 0
        %861 = vmatpush1.bf16.xpose.msra.mxu0 0
        %862 = vmatprep.subr.bf16.mxu0 0
        %863 = vmatpush1.bf16.xpose.msra.mxu0 0
        %864 = vmatprep.subr.bf16.mxu0 0
        %865 = vmatpush1.bf16.xpose.msra.mxu0 0
        %866 = vmatprep.subr.bf16.mxu0 0
        %867 = vmatpush1.bf16.xpose.msra.mxu0 0
        %868 = vmatprep.subr.bf16.mxu0 0
        %869 = vmatpush1.bf16.xpose.msra.mxu0 0
        %870 = vmatprep.subr.bf16.mxu0 0
        %871 = vmatpush1.bf16.xpose.msra.mxu0 0
        %872 = vmatprep.subr.bf16.mxu0 0
        %873 = vmatpush1.bf16.xpose.msra.mxu0 0
        %874 = vmatprep.subr.bf16.mxu0 0
        %875 = vmatpush1.bf16.xpose.msra.mxu0 0
        %876 = vmatprep.subr.bf16.mxu0 0
        %877 = vmatpush1.bf16.xpose.msra.mxu0 0
        %878 = vmatprep.subr.bf16.mxu0 0
        %879 = vmatpush1.bf16.xpose.msra.mxu0 0
        %880 = vmatprep.subr.bf16.mxu0 0
        %881 = vmatpush1.bf16.xpose.msra.mxu0 0
        %882 = vmatprep.subr.bf16.mxu0 0
        %883 = vmatpush1.bf16.xpose.msra.mxu0 0
        %884 = vmatprep.mubr.bf16.mxu0 0
        %885 = vmatmul.mubr.bf16.gmra.mrb[0].mxu0 %v847
        %v886 = vpop.f32.mrb[0].mxu0
        %v887 = vadd.f32 0.0, %v886
        %v888 = vpop.f32.mrb[0].mxu0
        %v889 = vpop.f32.mrb[0].mxu0
        %v890 = vpop.f32.mrb[0].mxu0
        %891 = vdwg.mxu0
        %v892 = vsel %vm698, %v740, -inf
        %893 = vmax.xlane.f32.xlu0 %v892
        %v894 = vpop.xlane.xlu0 %893
        %v895 = vsel %vm698, %v789, -inf
        %896 = vmax.xlane.f32.xlu0 %v895
        %v897 = vpop.xlane.xlu0 %896
        %v898 = vsel %vm698, %v838, -inf
        %899 = vmax.xlane.f32.xlu0 %v898
        %v900 = vpop.xlane.xlu0 %899
        %v901 = vsel %vm698, %v887, -inf
        %902 = vmax.xlane.f32.xlu0 %v901
        %v903 = vpop.xlane.xlu0 %902
        %v904 = vsub.f32 %v740, %v894
        %v905 = vsub.f32 %v789, %v897
        %v906 = vsub.f32 %v838, %v900
        %v907 = vsub.f32 %v887, %v903
        %v908 = vmul.f32 %v904, 1.442695
        %v909 = vpow.pop %v908
        %v910 = vmul.f32 %v905, 1.442695
        %v911 = vpow.pop %v910
        %v912 = vmul.f32 %v906, 1.442695
        %v913 = vpow.pop %v912
        %v914 = vmul.f32 %v907, 1.442695
        %v915 = vpow.pop %v914
        %v916 = vsel %vm698, %v909, 0.0
        %917 = vadd.xlane.f32.xlu0 %v916
        %v918 = vpop.xlane.xlu0 %917
        %v919 = vsel %vm698, %v911, 0.0
        %920 = vadd.xlane.f32.xlu0 %v919
        %v921 = vpop.xlane.xlu0 %920
        %v922 = vsel %vm698, %v913, 0.0
        %923 = vadd.xlane.f32.xlu0 %v922
        %v924 = vpop.xlane.xlu0 %923
        %v925 = vsel %vm698, %v915, 0.0
        %926 = vadd.xlane.f32.xlu0 %v925
        %v927 = vpop.xlane.xlu0 %926
        %v928 = vpack.c.bf16 %v909, %v909
        %v929 = vpack.c.bf16 %v911, %v911
        %v930 = vpack.c.bf16 %v913, %v913
        %v931 = vpack.c.bf16 %v915, %v915
        %932 = vrot.lane.b32.xlu0 %v691, 112
        %v933 = vpop.permute.xlu0 %932
        %v935 = vsel %vm698, %v928, 0
        %vm937 = vcmask 1043456
        %v939 = vsel %vm937, %v933, 0
        %941 = vmatprep.subr.bf16.mxu0 0
        %942 = vmatpush1.bf16.msra.mxu0 %v939
        %943 = vmatprep.subr.bf16.mxu0 0
        %944 = vmatpush1.bf16.msra.mxu0 0
        %945 = vmatprep.subr.bf16.mxu0 0
        %946 = vmatpush1.bf16.msra.mxu0 0
        %947 = vmatprep.subr.bf16.mxu0 0
        %948 = vmatpush1.bf16.msra.mxu0 0
        %949 = vmatprep.subr.bf16.mxu0 0
        %950 = vmatpush1.bf16.msra.mxu0 0
        %951 = vmatprep.subr.bf16.mxu0 0
        %952 = vmatpush1.bf16.msra.mxu0 0
        %953 = vmatprep.subr.bf16.mxu0 0
        %954 = vmatpush1.bf16.msra.mxu0 0
        %955 = vmatprep.subr.bf16.mxu0 0
        %956 = vmatpush1.bf16.msra.mxu0 0
        %957 = vmatprep.subr.bf16.mxu0 0
        %958 = vmatpush1.bf16.msra.mxu0 0
        %959 = vmatprep.subr.bf16.mxu0 0
        %960 = vmatpush1.bf16.msra.mxu0 0
        %961 = vmatprep.subr.bf16.mxu0 0
        %962 = vmatpush1.bf16.msra.mxu0 0
        %963 = vmatprep.subr.bf16.mxu0 0
        %964 = vmatpush1.bf16.msra.mxu0 0
        %965 = vmatprep.subr.bf16.mxu0 0
        %966 = vmatpush1.bf16.msra.mxu0 0
        %967 = vmatprep.subr.bf16.mxu0 0
        %968 = vmatpush1.bf16.msra.mxu0 0
        %969 = vmatprep.subr.bf16.mxu0 0
        %970 = vmatpush1.bf16.msra.mxu0 0
        %971 = vmatprep.subr.bf16.mxu0 0
        %972 = vmatpush1.bf16.msra.mxu0 0
        %973 = vmatprep.mubr.bf16.mxu0 0
        %974 = vmatmul.mubr.bf16.gmra.mrb[0].mxu0 %v935
        %v975 = vpop.f32.mrb[0].mxu0
        %v976 = vadd.f32 0.0, %v975
        %v977 = vpop.f32.mrb[0].mxu0
        %v978 = vpop.f32.mrb[0].mxu0
        %v979 = vpop.f32.mrb[0].mxu0
        %980 = vdwg.mxu0
        %981 = vrot.lane.b32.xlu0 %v692, 112
        %v982 = vpop.permute.xlu0 %981
        %v984 = vsel %vm698, %v929, 0
        %v987 = vsel %vm937, %v982, 0
        %989 = vmatprep.subr.bf16.mxu0 0
        %990 = vmatpush1.bf16.msra.mxu0 %v987
        %991 = vmatprep.subr.bf16.mxu0 0
        %992 = vmatpush1.bf16.msra.mxu0 0
        %993 = vmatprep.subr.bf16.mxu0 0
        %994 = vmatpush1.bf16.msra.mxu0 0
        %995 = vmatprep.subr.bf16.mxu0 0
        %996 = vmatpush1.bf16.msra.mxu0 0
        %997 = vmatprep.subr.bf16.mxu0 0
        %998 = vmatpush1.bf16.msra.mxu0 0
        %999 = vmatprep.subr.bf16.mxu0 0
        %1000 = vmatpush1.bf16.msra.mxu0 0
        %1001 = vmatprep.subr.bf16.mxu0 0
        %1002 = vmatpush1.bf16.msra.mxu0 0
        %1003 = vmatprep.subr.bf16.mxu0 0
        %1004 = vmatpush1.bf16.msra.mxu0 0
        %1005 = vmatprep.subr.bf16.mxu0 0
        %1006 = vmatpush1.bf16.msra.mxu0 0
        %1007 = vmatprep.subr.bf16.mxu0 0
        %1008 = vmatpush1.bf16.msra.mxu0 0
        %1009 = vmatprep.subr.bf16.mxu0 0
        %1010 = vmatpush1.bf16.msra.mxu0 0
        %1011 = vmatprep.subr.bf16.mxu0 0
        %1012 = vmatpush1.bf16.msra.mxu0 0
        %1013 = vmatprep.subr.bf16.mxu0 0
        %1014 = vmatpush1.bf16.msra.mxu0 0
        %1015 = vmatprep.subr.bf16.mxu0 0
        %1016 = vmatpush1.bf16.msra.mxu0 0
        %1017 = vmatprep.subr.bf16.mxu0 0
        %1018 = vmatpush1.bf16.msra.mxu0 0
        %1019 = vmatprep.subr.bf16.mxu0 0
        %1020 = vmatpush1.bf16.msra.mxu0 0
        %1021 = vmatprep.mubr.bf16.mxu0 0
        %1022 = vmatmul.mubr.bf16.gmra.mrb[0].mxu0 %v984
        %v1023 = vpop.f32.mrb[0].mxu0
        %v1024 = vadd.f32 0.0, %v1023
        %v1025 = vpop.f32.mrb[0].mxu0
        %v1026 = vpop.f32.mrb[0].mxu0
        %v1027 = vpop.f32.mrb[0].mxu0
        %1028 = vdwg.mxu0
        %1029 = vrot.lane.b32.xlu0 %v693, 112
        %v1030 = vpop.permute.xlu0 %1029
        %v1032 = vsel %vm698, %v930, 0
        %v1035 = vsel %vm937, %v1030, 0
        %1037 = vmatprep.subr.bf16.mxu0 0
        %1038 = vmatpush1.bf16.msra.mxu0 %v1035
        %1039 = vmatprep.subr.bf16.mxu0 0
        %1040 = vmatpush1.bf16.msra.mxu0 0
        %1041 = vmatprep.subr.bf16.mxu0 0
        %1042 = vmatpush1.bf16.msra.mxu0 0
        %1043 = vmatprep.subr.bf16.mxu0 0
        %1044 = vmatpush1.bf16.msra.mxu0 0
        %1045 = vmatprep.subr.bf16.mxu0 0
        %1046 = vmatpush1.bf16.msra.mxu0 0
        %1047 = vmatprep.subr.bf16.mxu0 0
        %1048 = vmatpush1.bf16.msra.mxu0 0
        %1049 = vmatprep.subr.bf16.mxu0 0
        %1050 = vmatpush1.bf16.msra.mxu0 0
        %1051 = vmatprep.subr.bf16.mxu0 0
        %1052 = vmatpush1.bf16.msra.mxu0 0
        %1053 = vmatprep.subr.bf16.mxu0 0
        %1054 = vmatpush1.bf16.msra.mxu0 0
        %1055 = vmatprep.subr.bf16.mxu0 0
        %1056 = vmatpush1.bf16.msra.mxu0 0
        %1057 = vmatprep.subr.bf16.mxu0 0
        %1058 = vmatpush1.bf16.msra.mxu0 0
        %1059 = vmatprep.subr.bf16.mxu0 0
        %1060 = vmatpush1.bf16.msra.mxu0 0
        %1061 = vmatprep.subr.bf16.mxu0 0
        %1062 = vmatpush1.bf16.msra.mxu0 0
        %1063 = vmatprep.subr.bf16.mxu0 0
        %1064 = vmatpush1.bf16.msra.mxu0 0
        %1065 = vmatprep.subr.bf16.mxu0 0
        %1066 = vmatpush1.bf16.msra.mxu0 0
        %1067 = vmatprep.subr.bf16.mxu0 0
        %1068 = vmatpush1.bf16.msra.mxu0 0
        %1069 = vmatprep.mubr.bf16.mxu0 0
        %1070 = vmatmul.mubr.bf16.gmra.mrb[0].mxu0 %v1032
        %v1071 = vpop.f32.mrb[0].mxu0
        %v1072 = vadd.f32 0.0, %v1071
        %v1073 = vpop.f32.mrb[0].mxu0
        %v1074 = vpop.f32.mrb[0].mxu0
        %v1075 = vpop.f32.mrb[0].mxu0
        %1076 = vdwg.mxu0
        %1077 = vrot.lane.b32.xlu0 %v694, 112
        %v1078 = vpop.permute.xlu0 %1077
        %v1080 = vsel %vm698, %v931, 0
        %v1083 = vsel %vm937, %v1078, 0
        %1085 = vmatprep.subr.bf16.mxu0 0
        %1086 = vmatpush1.bf16.msra.mxu0 %v1083
        %1087 = vmatprep.subr.bf16.mxu0 0
        %1088 = vmatpush1.bf16.msra.mxu0 0
        %1089 = vmatprep.subr.bf16.mxu0 0
        %1090 = vmatpush1.bf16.msra.mxu0 0
        %1091 = vmatprep.subr.bf16.mxu0 0
        %1092 = vmatpush1.bf16.msra.mxu0 0
        %1093 = vmatprep.subr.bf16.mxu0 0
        %1094 = vmatpush1.bf16.msra.mxu0 0
        %1095 = vmatprep.subr.bf16.mxu0 0
        %1096 = vmatpush1.bf16.msra.mxu0 0
        %1097 = vmatprep.subr.bf16.mxu0 0
        %1098 = vmatpush1.bf16.msra.mxu0 0
        %1099 = vmatprep.subr.bf16.mxu0 0
        %1100 = vmatpush1.bf16.msra.mxu0 0
        %1101 = vmatprep.subr.bf16.mxu0 0
        %1102 = vmatpush1.bf16.msra.mxu0 0
        %1103 = vmatprep.subr.bf16.mxu0 0
        %1104 = vmatpush1.bf16.msra.mxu0 0
        %1105 = vmatprep.subr.bf16.mxu0 0
        %1106 = vmatpush1.bf16.msra.mxu0 0
        %1107 = vmatprep.subr.bf16.mxu0 0
        %1108 = vmatpush1.bf16.msra.mxu0 0
        %1109 = vmatprep.subr.bf16.mxu0 0
        %1110 = vmatpush1.bf16.msra.mxu0 0
        %1111 = vmatprep.subr.bf16.mxu0 0
        %1112 = vmatpush1.bf16.msra.mxu0 0
        %1113 = vmatprep.subr.bf16.mxu0 0
        %1114 = vmatpush1.bf16.msra.mxu0 0
        %1115 = vmatprep.subr.bf16.mxu0 0
        %1116 = vmatpush1.bf16.msra.mxu0 0
        %1117 = vmatprep.mubr.bf16.mxu0 0
        %1118 = vmatmul.mubr.bf16.gmra.mrb[0].mxu0 %v1080
        %v1119 = vpop.f32.mrb[0].mxu0
        %v1120 = vadd.f32 0.0, %v1119
        %v1121 = vpop.f32.mrb[0].mxu0
        %v1122 = vpop.f32.mrb[0].mxu0
        %v1123 = vpop.f32.mrb[0].mxu0
        %1124 = vdwg.mxu0
        %v1125 = vrcp.pop %v918
        %v1126 = vrcp.pop %v921
        %v1127 = vrcp.pop %v924
        %v1128 = vrcp.pop %v927
        %v1129 = vmul.f32 %v976, %v1125
        %v1130 = vmul.f32 %v1024, %v1126
        %v1131 = vmul.f32 %v1072, %v1127
        %v1132 = vmul.f32 %v1120, %v1128
        %v1133 = vpack.c.bf16 %v1129, %v1129
        %v1134 = vpack.c.bf16 %v1130, %v1130
        %v1135 = vpack.c.bf16 %v1131, %v1131
        %v1136 = vpack.c.bf16 %v1132, %v1132
        %1138 = vrot.lane.b32.xlu0 %v1134, 8
        %v1139 = vpop.permute.xlu0 %1138
        %1141 = vrot.lane.b32.xlu0 %v1135, 16
        %v1142 = vpop.permute.xlu0 %1141
        %1144 = vrot.lane.b32.xlu0 %v1136, 24
        %v1145 = vpop.permute.xlu0 %1144
        %v1148 = vsel %vm698, %v1133, %v1139
        %vm1149 = vcmask 130048
        %v1151 = vsel %vm1149, %v1148, %v1142
        %vm1152 = vcmask 195584
        %v1154 = vsel %vm1152, %v1151, %v1145
        %v1155 = vld [vmem:[%s3] sm:$0xf]
        %v1156 = vld [vmem:[%s3 + $0x4] sm:$0xf]
        %v1157 = vld [vmem:[%s3 + $0x8] sm:$0xf]
        %v1158 = vld [vmem:[%s3 + $0xc] sm:$0xf]
        %v1159 = vld [vmem:[%s4] sm:$0x1]
        %v1160 = vunpack.c.l.bf16 %v1159
        %v1161 = vlaneseq
        %v1162 = vshrl.u32 %v1161, 7
        %v1163 = vsub.s32 0, %v1162
        %v1164 = vrot.slane %v1160, %v1163
        %v1169 = vunpack.c.l.b16 %v1155
        %v1170 = vunpack.c.l.b16 %v1156
        %v1171 = vunpack.c.l.b16 %v1157
        %v1172 = vunpack.c.l.b16 %v1158
        %v1173 = vpack.c.b16 %v1170, %v1169
        %v1174 = vpack.c.b16 %v1172, %v1171
        %v1177 = vsel %vm491, %v1154, 0
        %1179 = vmatprep.subr.bf16.mxu0 0
        %1180 = vmatpush1.bf16.msra.mxu0 %v1173
        %1181 = vmatprep.subr.bf16.mxu0 0
        %1182 = vmatpush1.bf16.msra.mxu0 %v1174
        %1183 = vmatprep.subr.bf16.mxu0 0
        %1184 = vmatpush1.bf16.msra.mxu0 0
        %1185 = vmatprep.subr.bf16.mxu0 0
        %1186 = vmatpush1.bf16.msra.mxu0 0
        %1187 = vmatprep.subr.bf16.mxu0 0
        %1188 = vmatpush1.bf16.msra.mxu0 0
        %1189 = vmatprep.subr.bf16.mxu0 0
        %1190 = vmatpush1.bf16.msra.mxu0 0
        %1191 = vmatprep.subr.bf16.mxu0 0
        %1192 = vmatpush1.bf16.msra.mxu0 0
        %1193 = vmatprep.subr.bf16.mxu0 0
        %1194 = vmatpush1.bf16.msra.mxu0 0
        %1195 = vmatprep.subr.bf16.mxu0 0
        %1196 = vmatpush1.bf16.msra.mxu0 0
        %1197 = vmatprep.subr.bf16.mxu0 0
        %1198 = vmatpush1.bf16.msra.mxu0 0
        %1199 = vmatprep.subr.bf16.mxu0 0
        %1200 = vmatpush1.bf16.msra.mxu0 0
        %1201 = vmatprep.subr.bf16.mxu0 0
        %1202 = vmatpush1.bf16.msra.mxu0 0
        %1203 = vmatprep.subr.bf16.mxu0 0
        %1204 = vmatpush1.bf16.msra.mxu0 0
        %1205 = vmatprep.subr.bf16.mxu0 0
        %1206 = vmatpush1.bf16.msra.mxu0 0
        %1207 = vmatprep.subr.bf16.mxu0 0
        %1208 = vmatpush1.bf16.msra.mxu0 0
        %1209 = vmatprep.subr.bf16.mxu0 0
        %1210 = vmatpush1.bf16.msra.mxu0 0
        %1211 = vmatprep.mubr.bf16.mxu0 0
        %1212 = vmatmul.mubr.bf16.gmra.mrb[0].mxu0 %v1177
        %v1213 = vpop.f32.mrb[0].mxu0
        %v1214 = vadd.f32 %v1164, %v1213
        %v1215 = vpop.f32.mrb[0].mxu0
        %v1216 = vpop.f32.mrb[0].mxu0
        %v1217 = vpop.f32.mrb[0].mxu0
        %1218 = vdwg.mxu0
        %v1219 = vadd.f32 %v1214, %v438
        %v1220 = vsel %vm491, %v1219, 0.0
        %1221 = vadd.xlane.f32.xlu0 %v1220
        %v1222 = vpop.xlane.xlu0 %1221
        %v1223 = vrcp.pop 32.0
        %v1224 = vmul.f32 %v1222, %v1223
        %v1225 = vsub.f32 %v1219, %v1224
        %v1226 = vmul.f32 %v1225, %v1225
        %v1227 = vsel %vm491, %v1226, 0.0
        %1228 = vadd.xlane.f32.xlu0 %v1227
        %v1229 = vpop.xlane.xlu0 %1228
        %v1230 = vmul.f32 %v1229, %v1223
        %v1231 = vadd.f32 %v1230, 1e-05
        %v1232 = vrsqrt.pop %v1231
        %v1233 = vmul.f32 %v1225, %v1232
        %v1234 = vld [vmem:[%s9] sm:$0x1]
        %v1236 = vlaneseq
        %v1237 = vshrl.u32 %v1236, 7
        %v1238 = vsub.s32 0, %v1237
        %v1239 = vrot.slane %v1234, %v1238
        %v1241 = vmul.f32 %v1233, %v1239
        %v1242 = vld [vmem:[%s10] sm:$0x1]
        %v1244 = vlaneseq
        %v1245 = vshrl.u32 %v1244, 7
        %v1246 = vsub.s32 0, %v1245
        %v1247 = vrot.slane %v1242, %v1246
        %v1249 = vadd.f32 %v1241, %v1247
        %v1250 = vpack.c.bf16 %v1249, %v1249
        %v1251 = vld [vmem:[%s5] sm:$0xf]
        %v1252 = vld [vmem:[%s5 + $0x4] sm:$0xf]
        %v1253 = vld [vmem:[%s5 + $0x8] sm:$0xf]
        %v1254 = vld [vmem:[%s5 + $0xc] sm:$0xf]
        %v1255 = vld [vmem:[%s6] sm:$0x1]
        %v1256 = vunpack.c.l.bf16 %v1255
        %v1257 = vlaneseq
        %v1258 = vshrl.u32 %v1257, 7
        %v1259 = vsub.s32 0, %v1258
        %v1260 = vrot.slane %v1256, %v1259
        %v1265 = vunpack.c.l.b16 %v1251
        %v1266 = vunpack.c.l.b16 %v1252
        %v1267 = vunpack.c.l.b16 %v1253
        %v1268 = vunpack.c.l.b16 %v1254
        %v1269 = vpack.c.b16 %v1266, %v1265
        %v1270 = vpack.c.b16 %v1268, %v1267
        %v1274 = vsel %vm491, %v1250, 0
        %1276 = vmatprep.subr.bf16.mxu0 0
        %1277 = vmatpush1.bf16.msra.mxu0 %v1269
        %1278 = vmatprep.subr.bf16.mxu0 0
        %1279 = vmatpush1.bf16.msra.mxu0 %v1270
        %1280 = vmatprep.subr.bf16.mxu0 0
        %1281 = vmatpush1.bf16.msra.mxu0 0
        %1282 = vmatprep.subr.bf16.mxu0 0
        %1283 = vmatpush1.bf16.msra.mxu0 0
        %1284 = vmatprep.subr.bf16.mxu0 0
        %1285 = vmatpush1.bf16.msra.mxu0 0
        %1286 = vmatprep.subr.bf16.mxu0 0
        %1287 = vmatpush1.bf16.msra.mxu0 0
        %1288 = vmatprep.subr.bf16.mxu0 0
        %1289 = vmatpush1.bf16.msra.mxu0 0
        %1290 = vmatprep.subr.bf16.mxu0 0
        %1291 = vmatpush1.bf16.msra.mxu0 0
        %1292 = vmatprep.subr.bf16.mxu0 0
        %1293 = vmatpush1.bf16.msra.mxu0 0
        %1294 = vmatprep.subr.bf16.mxu0 0
        %1295 = vmatpush1.bf16.msra.mxu0 0
        %1296 = vmatprep.subr.bf16.mxu0 0
        %1297 = vmatpush1.bf16.msra.mxu0 0
        %1298 = vmatprep.subr.bf16.mxu0 0
        %1299 = vmatpush1.bf16.msra.mxu0 0
        %1300 = vmatprep.subr.bf16.mxu0 0
        %1301 = vmatpush1.bf16.msra.mxu0 0
        %1302 = vmatprep.subr.bf16.mxu0 0
        %1303 = vmatpush1.bf16.msra.mxu0 0
        %1304 = vmatprep.subr.bf16.mxu0 0
        %1305 = vmatpush1.bf16.msra.mxu0 0
        %1306 = vmatprep.subr.bf16.mxu0 0
        %1307 = vmatpush1.bf16.msra.mxu0 0
        %1308 = vmatprep.mubr.bf16.mxu0 0
        %1309 = vmatmul.mubr.bf16.gmra.mrb[0].mxu0 %v1274
        %v1310 = vpop.f32.mrb[0].mxu0
        %v1311 = vadd.f32 %v1260, %v1310
        %v1312 = vpop.f32.mrb[0].mxu0
        %v1313 = vpop.f32.mrb[0].mxu0
        %v1314 = vpop.f32.mrb[0].mxu0
        %1315 = vdwg.mxu0
        %v1316 = vmul.f32 %v1311, 0.01
        %v1317 = vmax.f32 %v1311, %v1316
        %v1318 = vpack.c.bf16 %v1317, %v1317
        %v1319 = vld [vmem:[%s7] sm:$0xf]
        %v1320 = vld [vmem:[%s7 + $0x4] sm:$0xf]
        %v1321 = vld [vmem:[%s7 + $0x8] sm:$0xf]
        %v1322 = vld [vmem:[%s7 + $0xc] sm:$0xf]
        %v1323 = vld [vmem:[%s8] sm:$0x1]
        %v1324 = vunpack.c.l.bf16 %v1323
        %v1325 = vlaneseq
        %v1326 = vshrl.u32 %v1325, 7
        %v1327 = vsub.s32 0, %v1326
        %v1328 = vrot.slane %v1324, %v1327
        %v1333 = vunpack.c.l.b16 %v1319
        %v1334 = vunpack.c.l.b16 %v1320
        %v1335 = vunpack.c.l.b16 %v1321
        %v1336 = vunpack.c.l.b16 %v1322
        %v1337 = vpack.c.b16 %v1334, %v1333
        %v1338 = vpack.c.b16 %v1336, %v1335
        %v1342 = vsel %vm491, %v1318, 0
        %1344 = vmatprep.subr.bf16.mxu0 0
        %1345 = vmatpush1.bf16.msra.mxu0 %v1337
        %1346 = vmatprep.subr.bf16.mxu0 0
        %1347 = vmatpush1.bf16.msra.mxu0 %v1338
        %1348 = vmatprep.subr.bf16.mxu0 0
        %1349 = vmatpush1.bf16.msra.mxu0 0
        %1350 = vmatprep.subr.bf16.mxu0 0
        %1351 = vmatpush1.bf16.msra.mxu0 0
        %1352 = vmatprep.subr.bf16.mxu0 0
        %1353 = vmatpush1.bf16.msra.mxu0 0
        %1354 = vmatprep.subr.bf16.mxu0 0
        %1355 = vmatpush1.bf16.msra.mxu0 0
        %1356 = vmatprep.subr.bf16.mxu0 0
        %1357 = vmatpush1.bf16.msra.mxu0 0
        %1358 = vmatprep.subr.bf16.mxu0 0
        %1359 = vmatpush1.bf16.msra.mxu0 0
        %1360 = vmatprep.subr.bf16.mxu0 0
        %1361 = vmatpush1.bf16.msra.mxu0 0
        %1362 = vmatprep.subr.bf16.mxu0 0
        %1363 = vmatpush1.bf16.msra.mxu0 0
        %1364 = vmatprep.subr.bf16.mxu0 0
        %1365 = vmatpush1.bf16.msra.mxu0 0
        %1366 = vmatprep.subr.bf16.mxu0 0
        %1367 = vmatpush1.bf16.msra.mxu0 0
        %1368 = vmatprep.subr.bf16.mxu0 0
        %1369 = vmatpush1.bf16.msra.mxu0 0
        %1370 = vmatprep.subr.bf16.mxu0 0
        %1371 = vmatpush1.bf16.msra.mxu0 0
        %1372 = vmatprep.subr.bf16.mxu0 0
        %1373 = vmatpush1.bf16.msra.mxu0 0
        %1374 = vmatprep.subr.bf16.mxu0 0
        %1375 = vmatpush1.bf16.msra.mxu0 0
        %1376 = vmatprep.mubr.bf16.mxu0 0
        %1377 = vmatmul.mubr.bf16.gmra.mrb[0].mxu0 %v1342
        %v1378 = vpop.f32.mrb[0].mxu0
        %v1379 = vadd.f32 %v1328, %v1378
        %v1380 = vpop.f32.mrb[0].mxu0
        %v1381 = vpop.f32.mrb[0].mxu0
        %v1382 = vpop.f32.mrb[0].mxu0
        %1383 = vdwg.mxu0
        %v1384 = vadd.f32 %v1379, %v1249
        %v1385 = vsel %vm491, %v1384, 0.0
        %1386 = vadd.xlane.f32.xlu0 %v1385
        %v1387 = vpop.xlane.xlu0 %1386
        %v1388 = vmul.f32 %v1387, %v1223
        %v1389 = vsub.f32 %v1384, %v1388
        %v1390 = vmul.f32 %v1389, %v1389
        %v1391 = vsel %vm491, %v1390, 0.0
        %1392 = vadd.xlane.f32.xlu0 %v1391
        %v1393 = vpop.xlane.xlu0 %1392
        %v1394 = vmul.f32 %v1393, %v1223
        %v1395 = vadd.f32 %v1394, 1e-05
        %v1396 = vrsqrt.pop %v1395
        %v1397 = vmul.f32 %v1389, %v1396
        %v1398 = vld [vmem:[%s11] sm:$0x1]
        %v1400 = vlaneseq
        %v1401 = vshrl.u32 %v1400, 7
        %v1402 = vsub.s32 0, %v1401
        %v1403 = vrot.slane %v1398, %v1402
        %v1405 = vmul.f32 %v1397, %v1403
        %v1406 = vld [vmem:[%s12] sm:$0x1]
        %v1408 = vlaneseq
        %v1409 = vshrl.u32 %v1408, 7
        %v1410 = vsub.s32 0, %v1409
        %v1411 = vrot.slane %v1406, %v1410
        %v1413 = vadd.f32 %v1405, %v1411
        %v1414 = vpack.c.bf16 %v1413, %v1413
        %vm1415 = vcmask 257024
        %1416 = vst.msk [vmem:[%s431] sm:$0xf] %vm1415, %v1414
        %s1417 = sand.u32 %s313, 1
        %s1418 = scalar_lea.sflag [#allocation3], %s1417
        %s1419 = sand.u32 %s313, 1
        %s1420 = smul.addr %s1419, 4
        %s1421 = scalar_lea.vmem [#allocation2], %s1420
        // Predicated region
        $region73: #{tpu_custom_call.1} parent=71 // pred_check
          %p1422 = pneg %p323
        $region74: #{tpu_custom_call.1} parent=71 // pred_check_branch
          %1424 = sbr.rel (%p1422) target = $region76
        $region75: #{tpu_custom_call.1} parent=71 // pred_region
          %s1426 = ssub.s32 64, 64
          %1427 = vsyncadd %s1418, %s1426
          %s1428 = smul.addr %s27, 64
          %s1429 = scalar_lea.hbm %s13, %s1428
          %s1431 = sshll.u32 %s1421, 4
          %s1432 = int_to_ptr.vmem [resolvable:$true] %s1431
          %1434 = dma.vmem_to_hbm [thread:$0]  %s1432, 64, %s1429, %s1418
        $region76: #{tpu_custom_call.1} parent=71 // pred_fallthru
          _
      $region72: #{tpu_custom_call.1} parent=5 // pred_fallthru
        _
      %p1435 = scmp.le.s32.totalorder 2, %s22
      // Predicated region
      $region77: #{tpu_custom_call.1} parent=5 // pred_check
        %p1436 = pneg %p1435
      $region78: #{tpu_custom_call.1} parent=5 // pred_check_branch
        %1438 = sbr.rel (%p1436) target = $region80
      $region79: #{tpu_custom_call.1} parent=5 // pred_region
        %s1439 = ssub.s32 %s22, 2
        // Predicated region
        $region81: #{tpu_custom_call.1} parent=79 // pred_check
          %p1440 = pneg %p329
        $region82: #{tpu_custom_call.1} parent=79 // pred_check_branch
          %1442 = sbr.rel (%p1440) target = $region84
        $region83: #{tpu_custom_call.1} parent=79 // pred_region
          %s1443 = sand.u32 %s314, 1
          %s1444 = scalar_lea.sflag [#allocation3], %s1443
          %s1445 = sand.u32 %s314, 1
          %s1446 = smul.addr %s1445, 4
          %s1447 = scalar_lea.vmem [#allocation2], %s1446
          %1448 = dma.done %s1444, 64
        $region84: #{tpu_custom_call.1} parent=79 // pred_fallthru
          _
      $region80: #{tpu_custom_call.1} parent=5 // pred_fallthru
        _
    $region6: #{tpu_custom_call.1} parent=1 // loop_footer
      %s26 = sadd.s32 1, %s22
    $region7: #{tpu_custom_call.1} parent=1 // loop_footer_branch
      %21 = sbr.rel target = $region3
    $region8: #{tpu_custom_call.1} parent=1 // loop_exit
      _
    %1449 = vsyncpa [#allocation3], 1
    %s1450 = scalar_lea.sflag [#allocation3], 1
    %1451 = vsyncpa %s1450, 1

// kernel: tpu_custom_call.1
$region0: #{tpu_custom_call.1}
  #allocation0 [shape = 'u32[]', space=smem, size = 0x4, offset = 0x4, fixed_abs, tag = 'smem constant byte address 0x4 - core index']
  #allocation1 [shape = 'u32[144,128]{1,0:T(1,128)}', space=vmem, size = 0x12000, scoped, tag = 'internal scratch']
  %s0 = inlined_call_operand.vmem [shape: bf16[2,8,32], index: 0, kind: input, shape index: {}]
  %s1 = inlined_call_operand.vmem [shape: bf16[4,32,24], index: 1, kind: input, shape index: {}]
  %s2 = inlined_call_operand.vmem [shape: bf16[4,1,24], index: 2, kind: input, shape index: {}]
  %s3 = inlined_call_operand.vmem [shape: bf16[32,32], index: 3, kind: input, shape index: {}]
  %s4 = inlined_call_operand.vmem [shape: bf16[1,32], index: 4, kind: input, shape index: {}]
  %s5 = inlined_call_operand.vmem [shape: bf16[32,32], index: 5, kind: input, shape index: {}]
  %s6 = inlined_call_operand.vmem [shape: bf16[1,32], index: 6, kind: input, shape index: {}]
  %s7 = inlined_call_operand.vmem [shape: bf16[32,32], index: 7, kind: input, shape index: {}]
  %s8 = inlined_call_operand.vmem [shape: bf16[1,32], index: 8, kind: input, shape index: {}]
  %s9 = inlined_call_operand.vmem [shape: f32[1,32], index: 9, kind: input, shape index: {}]
  %s10 = inlined_call_operand.vmem [shape: f32[1,32], index: 10, kind: input, shape index: {}]
  %s11 = inlined_call_operand.vmem [shape: f32[1,32], index: 11, kind: input, shape index: {}]
  %s12 = inlined_call_operand.vmem [shape: f32[1,32], index: 12, kind: input, shape index: {}]
  %s13 = inlined_call_operand.hbm [shape: bf16[2,8,32], index: 13, kind: output, shape index: {}]
  %s14 = sld [smem:[#allocation0]]
  $region85: #{tpu_custom_call.1} parent=0
    _
  %s16 = ssub.s32 1, %s14
  %s17 = scalar_select 0, %s16, %s14
  $region1: #{tpu_custom_call.1} parent=0
    #allocation2 [shape = 'u8[4096]{0}', space=vmem, size = 0x1000, scoped, tag = 'output window, operand 0']
    #allocation3 [shape = 's32[2]{0}', space=sflag, size = 0x8, scoped, tag = 'scoped memory for tpu_custom_call.1']
    %18 = vsyncpa [#allocation3], 0
    %s19 = scalar_lea.sflag [#allocation3], 1
    %20 = vsyncpa %s19, 0
    loop: start=0, step=1, limit=4
    $region2: #{tpu_custom_call.1} parent=1 // loop_pre_header
      _
    $region3: #{tpu_custom_call.1} parent=1 // loop_header
      %s22 = sphi 0, %s26
      %p23 = scmp.ge.s32.totalorder %s22, 4
      %s32 = sphi 0, %s34
      %s35 = sphi 0, %s32
      %s36 = sphi 0, %s35
      %s52 = sphi 0, %s36
      %s56 = sphi 0, %s56
      %s58 = sphi 0, %s56
      %s59 = sphi 0, %s58
      %s73 = sphi 0, %s59
      %s77 = sphi 0, %s77
      %s79 = sphi 0, %s77
      %s80 = sphi 0, %s79
      %s94 = sphi 0, %s80
      %s98 = sphi 0, %s98
      %s100 = sphi 0, %s98
      %s101 = sphi 0, %s100
      %s115 = sphi 0, %s101
      %s119 = sphi 0, %s119
      %s121 = sphi 0, %s119
      %s122 = sphi 0, %s121
      %s136 = sphi 0, %s122
      %s140 = sphi 0, %s140
      %s142 = sphi 0, %s140
      %s143 = sphi 0, %s142
      %s157 = sphi 0, %s143
      %s161 = sphi 0, %s161
      %s163 = sphi 0, %s161
      %s164 = sphi 0, %s163
      %s178 = sphi 0, %s164
      %s182 = sphi 0, %s182
      %s184 = sphi 0, %s182
      %s185 = sphi 0, %s184
      %s199 = sphi 0, %s185
      %s203 = sphi 0, %s203
      %s205 = sphi 0, %s203
      %s206 = sphi 0, %s205
      %s220 = sphi 0, %s206
      %s224 = sphi 0, %s224
      %s226 = sphi 0, %s224
      %s227 = sphi 0, %s226
      %s241 = sphi 0, %s227
      %s245 = sphi 0, %s245
      %s247 = sphi 0, %s245
      %s248 = sphi 0, %s247
      %s262 = sphi 0, %s248
      %s266 = sphi 0, %s266
      %s268 = sphi 0, %s266
      %s269 = sphi 0, %s268
      %s283 = sphi 0, %s269
      %s287 = sphi 0, %s287
      %s289 = sphi 0, %s287
      %s290 = sphi 0, %s289
      %s304 = sphi 0, %s290
      %s310 = sphi 0, %s312
      %s313 = sphi 0, %s310
      %s314 = sphi 0, %s313
      %s330 = sphi 0, %s314
    $region4: #{tpu_custom_call.1} parent=1 // loop_header_branch
      %25 = sbr.rel (%p23) target = $region8
    $region5: #{tpu_custom_call.1} parent=1 // loop_body
      %s27 = ssub.s32 %s22, 1
      %s28 = ssub.s32 %s22, 2
      %s29 = sadd.s32 %s22, 1
      %s30 = ssub.s32 %s22, %s29
      %p31 = scmp.eq.s32.totalorder %s30, 0
      %s33 = sadd.s32 %s32, 1
      %s34 = scalar_select %p31, %s32, %s33
      %p37 = pneg %p31
      %p38 = scmp.eq.s32.totalorder %s22, 1
      %p39 = por %p37, %p38
      %p40 = scmp.ne.s32.totalorder %s32, %s35
      %p41 = scmp.eq.s32.totalorder %s22, 0
      %p42 = por %p40, %p41
      %p43 = scmp.ne.s32.totalorder %s32, %s35
      %p44 = scmp.eq.s32.totalorder %s27, 1
      %p45 = por %p43, %p44
      %p46 = scmp.ne.s32.totalorder %s35, %s36
      %p47 = scmp.eq.s32.totalorder %s27, 0
      %p48 = por %p46, %p47
      %p49 = scmp.ne.s32.totalorder %s35, %s36
      %p50 = scmp.eq.s32.totalorder %s28, 1
      %p51 = por %p49, %p50
      %p53 = scmp.ne.s32.totalorder %s36, %s52
      %p54 = scmp.eq.s32.totalorder %s28, 0
      %p55 = por %p53, %p54
      %s57 = sadd.s32 %s56, 1
      %p60 = scmp.eq.s32.totalorder %s22, 1
      %p61 = scmp.ne.s32.totalorder %s56, %s58
      %p62 = scmp.eq.s32.totalorder %s22, 0
      %p63 = por %p61, %p62
      %p64 = scmp.ne.s32.totalorder %s56, %s58
      %p65 = scmp.eq.s32.totalorder %s27, 1
      %p66 = por %p64, %p65
      %p67 = scmp.ne.s32.totalorder %s58, %s59
      %p68 = scmp.eq.s32.totalorder %s27, 0
      %p69 = por %p67, %p68
      %p70 = scmp.ne.s32.totalorder %s58, %s59
      %p71 = scmp.eq.s32.totalorder %s28, 1
      %p72 = por %p70, %p71
      %p74 = scmp.ne.s32.totalorder %s59, %s73
      %p75 = scmp.eq.s32.totalorder %s28, 0
      %p76 = por %p74, %p75
      %s78 = sadd.s32 %s77, 1
      %p81 = scmp.eq.s32.totalorder %s22, 1
      %p82 = scmp.ne.s32.totalorder %s77, %s79
      %p83 = scmp.eq.s32.totalorder %s22, 0
      %p84 = por %p82, %p83
      %p85 = scmp.ne.s32.totalorder %s77, %s79
      %p86 = scmp.eq.s32.totalorder %s27, 1
      %p87 = por %p85, %p86
      %p88 = scmp.ne.s32.totalorder %s79, %s80
      %p89 = scmp.eq.s32.totalorder %s27, 0
      %p90 = por %p88, %p89
      %p91 = scmp.ne.s32.totalorder %s79, %s80
      %p92 = scmp.eq.s32.totalorder %s28, 1
      %p93 = por %p91, %p92
      %p95 = scmp.ne.s32.totalorder %s80, %s94
      %p96 = scmp.eq.s32.totalorder %s28, 0
      %p97 = por %p95, %p96
      %s99 = sadd.s32 %s98, 1
      %p102 = scmp.eq.s32.totalorder %s22, 1
      %p103 = scmp.ne.s32.totalorder %s98, %s100
      %p104 = scmp.eq.s32.totalorder %s22, 0
      %p105 = por %p103, %p104
      %p106 = scmp.ne.s32.totalorder %s98, %s100
      %p107 = scmp.eq.s32.totalorder %s27, 1
      %p108 = por %p106, %p107
      %p109 = scmp.ne.s32.totalorder %s100, %s101
      %p110 = scmp.eq.s32.totalorder %s27, 0
      %p111 = por %p109, %p110
      %p112 = scmp.ne.s32.totalorder %s100, %s101
      %p113 = scmp.eq.s32.totalorder %s28, 1
      %p114 = por %p112, %p113
      %p116 = scmp.ne.s32.totalorder %s101, %s115
      %p117 = scmp.eq.s32.totalorder %s28, 0
      %p118 = por %p116, %p117
      %s120 = sadd.s32 %s119, 1
      %p123 = scmp.eq.s32.totalorder %s22, 1
      %p124 = scmp.ne.s32.totalorder %s119, %s121
      %p125 = scmp.eq.s32.totalorder %s22, 0
      %p126 = por %p124, %p125
      %p127 = scmp.ne.s32.totalorder %s119, %s121
      %p128 = scmp.eq.s32.totalorder %s27, 1
      %p129 = por %p127, %p128
      %p130 = scmp.ne.s32.totalorder %s121, %s122
      %p131 = scmp.eq.s32.totalorder %s27, 0
      %p132 = por %p130, %p131
      %p133 = scmp.ne.s32.totalorder %s121, %s122
      %p134 = scmp.eq.s32.totalorder %s28, 1
      %p135 = por %p133, %p134
      %p137 = scmp.ne.s32.totalorder %s122, %s136
      %p138 = scmp.eq.s32.totalorder %s28, 0
      %p139 = por %p137, %p138
      %s141 = sadd.s32 %s140, 1
      %p144 = scmp.eq.s32.totalorder %s22, 1
      %p145 = scmp.ne.s32.totalorder %s140, %s142
      %p146 = scmp.eq.s32.totalorder %s22, 0
      %p147 = por %p145, %p146
      %p148 = scmp.ne.s32.totalorder %s140, %s142
      %p149 = scmp.eq.s32.totalorder %s27, 1
      %p150 = por %p148, %p149
      %p151 = scmp.ne.s32.totalorder %s142, %s143
      %p152 = scmp.eq.s32.totalorder %s27, 0
      %p153 = por %p151, %p152
      %p154 = scmp.ne.s32.totalorder %s142, %s143
      %p155 = scmp.eq.s32.totalorder %s28, 1
      %p156 = por %p154, %p155
      %p158 = scmp.ne.s32.totalorder %s143, %s157
      %p159 = scmp.eq.s32.totalorder %s28, 0
      %p160 = por %p158, %p159
      %s162 = sadd.s32 %s161, 1
      %p165 = scmp.eq.s32.totalorder %s22, 1
      %p166 = scmp.ne.s32.totalorder %s161, %s163
      %p167 = scmp.eq.s32.totalorder %s22, 0
      %p168 = por %p166, %p167
      %p169 = scmp.ne.s32.totalorder %s161, %s163
      %p170 = scmp.eq.s32.totalorder %s27, 1
      %p171 = por %p169, %p170
      %p172 = scmp.ne.s32.totalorder %s163, %s164
      %p173 = scmp.eq.s32.totalorder %s27, 0
      %p174 = por %p172, %p173
      %p175 = scmp.ne.s32.totalorder %s163, %s164
      %p176 = scmp.eq.s32.totalorder %s28, 1
      %p177 = por %p175, %p176
      %p179 = scmp.ne.s32.totalorder %s164, %s178
      %p180 = scmp.eq.s32.totalorder %s28, 0
      %p181 = por %p179, %p180
      %s183 = sadd.s32 %s182, 1
      %p186 = scmp.eq.s32.totalorder %s22, 1
      %p187 = scmp.ne.s32.totalorder %s182, %s184
      %p188 = scmp.eq.s32.totalorder %s22, 0
      %p189 = por %p187, %p188
      %p190 = scmp.ne.s32.totalorder %s182, %s184
      %p191 = scmp.eq.s32.totalorder %s27, 1
      %p192 = por %p190, %p191
      %p193 = scmp.ne.s32.totalorder %s184, %s185
      %p194 = scmp.eq.s32.totalorder %s27, 0
      %p195 = por %p193, %p194
      %p196 = scmp.ne.s32.totalorder %s184, %s185
      %p197 = scmp.eq.s32.totalorder %s28, 1
      %p198 = por %p196, %p197
      %p200 = scmp.ne.s32.totalorder %s185, %s199
      %p201 = scmp.eq.s32.totalorder %s28, 0
      %p202 = por %p200, %p201
      %s204 = sadd.s32 %s203, 1
      %p207 = scmp.eq.s32.totalorder %s22, 1
      %p208 = scmp.ne.s32.totalorder %s203, %s205
      %p209 = scmp.eq.s32.totalorder %s22, 0
      %p210 = por %p208, %p209
      %p211 = scmp.ne.s32.totalorder %s203, %s205
      %p212 = scmp.eq.s32.totalorder %s27, 1
      %p213 = por %p211, %p212
      %p214 = scmp.ne.s32.totalorder %s205, %s206
      %p215 = scmp.eq.s32.totalorder %s27, 0
      %p216 = por %p214, %p215
      %p217 = scmp.ne.s32.totalorder %s205, %s206
      %p218 = scmp.eq.s32.totalorder %s28, 1
      %p219 = por %p217, %p218
      %p221 = scmp.ne.s32.totalorder %s206, %s220
      %p222 = scmp.eq.s32.totalorder %s28, 0
      %p223 = por %p221, %p222
      %s225 = sadd.s32 %s224, 1
      %p228 = scmp.eq.s32.totalorder %s22, 1
      %p229 = scmp.ne.s32.totalorder %s224, %s226
      %p230 = scmp.eq.s32.totalorder %s22, 0
      %p231 = por %p229, %p230
      %p232 = scmp.ne.s32.totalorder %s224, %s226
      %p233 = scmp.eq.s32.totalorder %s27, 1
      %p234 = por %p232, %p233
      %p235 = scmp.ne.s32.totalorder %s226, %s227
      %p236 = scmp.eq.s32.totalorder %s27, 0
      %p237 = por %p235, %p236
      %p238 = scmp.ne.s32.totalorder %s226, %s227
      %p239 = scmp.eq.s32.totalorder %s28, 1
      %p240 = por %p238, %p239
      %p242 = scmp.ne.s32.totalorder %s227, %s241
      %p243 = scmp.eq.s32.totalorder %s28, 0
      %p244 = por %p242, %p243
      %s246 = sadd.s32 %s245, 1
      %p249 = scmp.eq.s32.totalorder %s22, 1
      %p250 = scmp.ne.s32.totalorder %s245, %s247
      %p251 = scmp.eq.s32.totalorder %s22, 0
      %p252 = por %p250, %p251
      %p253 = scmp.ne.s32.totalorder %s245, %s247
      %p254 = scmp.eq.s32.totalorder %s27, 1
      %p255 = por %p253, %p254
      %p256 = scmp.ne.s32.totalorder %s247, %s248
      %p257 = scmp.eq.s32.totalorder %s27, 0
      %p258 = por %p256, %p257
      %p259 = scmp.ne.s32.totalorder %s247, %s248
      %p260 = scmp.eq.s32.totalorder %s28, 1
      %p261 = por %p259, %p260
      %p263 = scmp.ne.s32.totalorder %s248, %s262
      %p264 = scmp.eq.s32.totalorder %s28, 0
      %p265 = por %p263, %p264
      %s267 = sadd.s32 %s266, 1
      %p270 = scmp.eq.s32.totalorder %s22, 1
      %p271 = scmp.ne.s32.totalorder %s266, %s268
      %p272 = scmp.eq.s32.totalorder %s22, 0
      %p273 = por %p271, %p272
      %p274 = scmp.ne.s32.totalorder %s266, %s268
      %p275 = scmp.eq.s32.totalorder %s27, 1
      %p276 = por %p274, %p275
      %p277 = scmp.ne.s32.totalorder %s268, %s269
      %p278 = scmp.eq.s32.totalorder %s27, 0
      %p279 = por %p277, %p278
      %p280 = scmp.ne.s32.totalorder %s268, %s269
      %p281 = scmp.eq.s32.totalorder %s28, 1
      %p282 = por %p280, %p281
      %p284 = scmp.ne.s32.totalorder %s269, %s283
      %p285 = scmp.eq.s32.totalorder %s28, 0
      %p286 = por %p284, %p285
      %s288 = sadd.s32 %s287, 1
      %p291 = scmp.eq.s32.totalorder %s22, 1
      %p292 = scmp.ne.s32.totalorder %s287, %s289
      %p293 = scmp.eq.s32.totalorder %s22, 0
      %p294 = por %p292, %p293
      %p295 = scmp.ne.s32.totalorder %s287, %s289
      %p296 = scmp.eq.s32.totalorder %s27, 1
      %p297 = por %p295, %p296
      %p298 = scmp.ne.s32.totalorder %s289, %s290
      %p299 = scmp.eq.s32.totalorder %s27, 0
      %p300 = por %p298, %p299
      %p301 = scmp.ne.s32.totalorder %s289, %s290
      %p302 = scmp.eq.s32.totalorder %s28, 1
      %p303 = por %p301, %p302
      %p305 = scmp.ne.s32.totalorder %s290, %s304
      %p306 = scmp.eq.s32.totalorder %s28, 0
      %p307 = por %p305, %p306
      %s308 = ssub.s32 %s22, %s29
      %p309 = scmp.eq.s32.totalorder %s308, 0
      %s311 = sadd.s32 %s310, 1
      %s312 = scalar_select %p309, %s310, %s311
      %p315 = pneg %p309
      %p316 = scmp.eq.s32.totalorder %s22, 1
      %p317 = por %p315, %p316
      %p318 = scmp.ne.s32.totalorder %s310, %s313
      %p319 = scmp.eq.s32.totalorder %s22, 0
      %p320 = por %p318, %p319
      %p321 = scmp.ne.s32.totalorder %s310, %s313
      %p322 = scmp.eq.s32.totalorder %s27, 1
      %p323 = por %p321, %p322
      %p324 = scmp.ne.s32.totalorder %s313, %s314
      %p325 = scmp.eq.s32.totalorder %s27, 0
      %p326 = por %p324, %p325
      %p327 = scmp.ne.s32.totalorder %s313, %s314
      %p328 = scmp.eq.s32.totalorder %s28, 1
      %p329 = por %p327, %p328
      %p331 = scmp.ne.s32.totalorder %s314, %s330
      %p332 = scmp.eq.s32.totalorder %s28, 0
      %p333 = por %p331, %p332
      %p334 = scmp.le.s32.totalorder 1, %s22
      %p335 = scmp.lt.s32.totalorder %s22, 3
      %p336 = pnand %p334, %p335
      %p337 = pneg %p336
      // Predicated region
      $region9: #{tpu_custom_call.1} parent=5 // pred_check
        _
      $region10: #{tpu_custom_call.1} parent=5 // pred_check_branch
        %339 = sbr.rel (%p336) target = $region12
      $region11: #{tpu_custom_call.1} parent=5 // pred_region
        %s340 = ssub.s32 %s22, 1
        // Predicated region
        $region13: #{tpu_custom_call.1} parent=11 // pred_check
          %p341 = pneg %p69
        $region14: #{tpu_custom_call.1} parent=11 // pred_check_branch
          %343 = sbr.rel (%p341) target = $region16
        $region15: #{tpu_custom_call.1} parent=11 // pred_region
          _
        $region16: #{tpu_custom_call.1} parent=11 // pred_fallthru
          _
        // Predicated region
        $region17: #{tpu_custom_call.1} parent=11 // pred_check
          %p344 = pneg %p90
        $region18: #{tpu_custom_call.1} parent=11 // pred_check_branch
          %346 = sbr.rel (%p344) target = $region20
        $region19: #{tpu_custom_call.1} parent=11 // pred_region
          _
        $region20: #{tpu_custom_call.1} parent=11 // pred_fallthru
          _
        // Predicated region
        $region21: #{tpu_custom_call.1} parent=11 // pred_check
          %p347 = pneg %p111
        $region22: #{tpu_custom_call.1} parent=11 // pred_check_branch
          %349 = sbr.rel (%p347) target = $region24
        $region23: #{tpu_custom_call.1} parent=11 // pred_region
          _
        $region24: #{tpu_custom_call.1} parent=11 // pred_fallthru
          _
        // Predicated region
        $region25: #{tpu_custom_call.1} parent=11 // pred_check
          %p350 = pneg %p132
        $region26: #{tpu_custom_call.1} parent=11 // pred_check_branch
          %352 = sbr.rel (%p350) target = $region28
        $region27: #{tpu_custom_call.1} parent=11 // pred_region
          _
        $region28: #{tpu_custom_call.1} parent=11 // pred_fallthru
          _
        // Predicated region
        $region29: #{tpu_custom_call.1} parent=11 // pred_check
          %p353 = pneg %p153
        $region30: #{tpu_custom_call.1} parent=11 // pred_check_branch
          %355 = sbr.rel (%p353) target = $region32
        $region31: #{tpu_custom_call.1} parent=11 // pred_region
          _
        $region32: #{tpu_custom_call.1} parent=11 // pred_fallthru
          _
        // Predicated region
        $region33: #{tpu_custom_call.1} parent=11 // pred_check
          %p356 = pneg %p174
        $region34: #{tpu_custom_call.1} parent=11 // pred_check_branch
          %358 = sbr.rel (%p356) target = $region36
        $region35: #{tpu_custom_call.1} parent=11 // pred_region
          _
        $region36: #{tpu_custom_call.1} parent=11 // pred_fallthru
          _
        // Predicated region
        $region37: #{tpu_custom_call.1} parent=11 // pred_check
          %p359 = pneg %p195
        $region38: #{tpu_custom_call.1} parent=11 // pred_check_branch
          %361 = sbr.rel (%p359) target = $region40
        $region39: #{tpu_custom_call.1} parent=11 // pred_region
          _
        $region40: #{tpu_custom_call.1} parent=11 // pred_fallthru
          _
        // Predicated region
        $region41: #{tpu_custom_call.1} parent=11 // pred_check
          %p362 = pneg %p216
        $region42: #{tpu_custom_call.1} parent=11 // pred_check_branch
          %364 = sbr.rel (%p362) target = $region44
        $region43: #{tpu_custom_call.1} parent=11 // pred_region
          _
        $region44: #{tpu_custom_call.1} parent=11 // pred_fallthru
          _
        // Predicated region
        $region45: #{tpu_custom_call.1} parent=11 // pred_check
          %p365 = pneg %p237
        $region46: #{tpu_custom_call.1} parent=11 // pred_check_branch
          %367 = sbr.rel (%p365) target = $region48
        $region47: #{tpu_custom_call.1} parent=11 // pred_region
          _
        $region48: #{tpu_custom_call.1} parent=11 // pred_fallthru
          _
        // Predicated region
        $region49: #{tpu_custom_call.1} parent=11 // pred_check
          %p368 = pneg %p258
        $region50: #{tpu_custom_call.1} parent=11 // pred_check_branch
          %370 = sbr.rel (%p368) target = $region52
        $region51: #{tpu_custom_call.1} parent=11 // pred_region
          _
        $region52: #{tpu_custom_call.1} parent=11 // pred_fallthru
          _
        // Predicated region
        $region53: #{tpu_custom_call.1} parent=11 // pred_check
          %p371 = pneg %p279
        $region54: #{tpu_custom_call.1} parent=11 // pred_check_branch
          %373 = sbr.rel (%p371) target = $region56
        $region55: #{tpu_custom_call.1} parent=11 // pred_region
          _
        $region56: #{tpu_custom_call.1} parent=11 // pred_fallthru
          _
        // Predicated region
        $region57: #{tpu_custom_call.1} parent=11 // pred_check
          %p374 = pneg %p300
        $region58: #{tpu_custom_call.1} parent=11 // pred_check_branch
          %376 = sbr.rel (%p374) target = $region60
        $region59: #{tpu_custom_call.1} parent=11 // pred_region
          _
        $region60: #{tpu_custom_call.1} parent=11 // pred_fallthru
          _
      $region12: #{tpu_custom_call.1} parent=5 // pred_fallthru
        _
      %p377 = scmp.lt.s32.totalorder %s22, 2
      // Predicated region
      $region61: #{tpu_custom_call.1} parent=5 // pred_check
        %p378 = pneg %p377
      $region62: #{tpu_custom_call.1} parent=5 // pred_check_branch
        %380 = sbr.rel (%p378) target = $region64
      $region63: #{tpu_custom_call.1} parent=5 // pred_region
        // Predicated region
        $region65: #{tpu_custom_call.1} parent=63 // pred_check
          %p381 = pneg %p42
        $region66: #{tpu_custom_call.1} parent=63 // pred_check_branch
          %383 = sbr.rel (%p381) target = $region68
        $region67: #{tpu_custom_call.1} parent=63 // pred_region
          %p384 = scmp.lt.s32.totalorder %s22, 1
          %s385 = scalar_select %p384, %s22, 1
          %s386 = smul.addr %s385, 4
          %s387 = scalar_lea.vmem %s0, %s386
        $region68: #{tpu_custom_call.1} parent=63 // pred_fallthru
          _
      $region64: #{tpu_custom_call.1} parent=5 // pred_fallthru
        _
      %p388 = scmp.le.s32.totalorder 1, %s22
      %p389 = scmp.lt.s32.totalorder %s22, 3
      %p390 = pnand %p388, %p389
      %p391 = pneg %p390
      // Predicated region
      $region69: #{tpu_custom_call.1} parent=5 // pred_check
        _
      $region70: #{tpu_custom_call.1} parent=5 // pred_check_branch
        %393 = sbr.rel (%p390) target = $region72
      $region71: #{tpu_custom_call.1} parent=5 // pred_region
        %s394 = ssub.s32 %s22, 1
        %p395 = scmp.lt.s32.totalorder %s27, 1
        %s396 = scalar_select %p395, %s27, 1
        %s397 = smul.addr %s396, 4
        %s398 = scalar_lea.vmem %s0, %s397
        %p399 = pneg %p48
        %p400 = pneg %p45
        %p401 = pneg %p69
        %p402 = pneg %p66
        %p403 = pneg %p90
        %p404 = pneg %p87
        %p405 = pneg %p111
        %p406 = pneg %p108
        %p407 = pneg %p132
        %p408 = pneg %p129
        %p409 = pneg %p153
        %p410 = pneg %p150
        %p411 = pneg %p174
        %p412 = pneg %p171
        %p413 = pneg %p195
        %p414 = pneg %p192
        %p415 = pneg %p216
        %p416 = pneg %p213
        %p417 = pneg %p237
        %p418 = pneg %p234
        %p419 = pneg %p258
        %p420 = pneg %p255
        %p421 = pneg %p279
        %p422 = pneg %p276
        %p423 = pneg %p300
        %p424 = pneg %p297
        %p425 = pneg %p326
        %p426 = pneg %p323
        %s427 = sand.u32 %s313, 1
        %s428 = scalar_lea.sflag [#allocation3], %s427
        %s429 = sand.u32 %s313, 1
        %s430 = smul.addr %s429, 4
        %s431 = scalar_lea.vmem [#allocation2], %s430
        %p432 = scmp.lt.s32.totalorder %s27, 1
        %s433 = scalar_select %p432, %s27, 1
        %s434 = smul.addr %s433, 4
        %s435 = scalar_lea.vmem %s0, %s434
        %v437 = vld [vmem:[%s435] sm:$0xf]
        %v438 = vunpack.c.l.bf16 %v437
        %v439 = vld [vmem:[%s1] sm:$0xf]
        %v440 = vld [vmem:[%s1 + $0x4] sm:$0xf]
        %v441 = vld [vmem:[%s1 + $0x8] sm:$0xf]
        %v442 = vld [vmem:[%s1 + $0xc] sm:$0xf]
        %v443 = vld [vmem:[%s1 + $0x10] sm:$0xf]
        %v444 = vld [vmem:[%s1 + $0x14] sm:$0xf]
        %v445 = vld [vmem:[%s1 + $0x18] sm:$0xf]
        %v446 = vld [vmem:[%s1 + $0x1c] sm:$0xf]
        %v447 = vld [vmem:[%s1 + $0x20] sm:$0xf]
        %v448 = vld [vmem:[%s1 + $0x24] sm:$0xf]
        %v449 = vld [vmem:[%s1 + $0x28] sm:$0xf]
        %v450 = vld [vmem:[%s1 + $0x2c] sm:$0xf]
        %v451 = vld [vmem:[%s1 + $0x30] sm:$0xf]
        %v452 = vld [vmem:[%s1 + $0x34] sm:$0xf]
        %v453 = vld [vmem:[%s1 + $0x38] sm:$0xf]
        %v454 = vld [vmem:[%s1 + $0x3c] sm:$0xf]
        %v455 = vld [vmem:[%s2] sm:$0x1]
        %v456 = vld [vmem:[%s2 + $0x1] sm:$0x1]
        %v457 = vld [vmem:[%s2 + $0x2] sm:$0x1]
        %v458 = vld [vmem:[%s2 + $0x3] sm:$0x1]
        %v459 = vunpack.c.l.bf16 %v455
        %v460 = vunpack.c.l.bf16 %v456
        %v461 = vunpack.c.l.bf16 %v457
        %v462 = vunpack.c.l.bf16 %v458
        %v463 = vlaneseq
        %v464 = vshrl.u32 %v463, 7
        %v465 = vsub.s32 0, %v464
        %v466 = vrot.slane %v459, %v465
        %v467 = vlaneseq
        %v468 = vshrl.u32 %v467, 7
        %v469 = vsub.s32 0, %v468
        %v470 = vrot.slane %v460, %v469
        %v471 = vlaneseq
        %v472 = vshrl.u32 %v471, 7
        %v473 = vsub.s32 0, %v472
        %v474 = vrot.slane %v461, %v473
        %v475 = vlaneseq
        %v476 = vshrl.u32 %v475, 7
        %v477 = vsub.s32 0, %v476
        %v478 = vrot.slane %v462, %v477
        %v483 = vunpack.c.l.b16 %v439
        %v484 = vunpack.c.l.b16 %v440
        %v485 = vunpack.c.l.b16 %v441
        %v486 = vunpack.c.l.b16 %v442
        %v487 = vpack.c.b16 %v484, %v483
        %v488 = vpack.c.b16 %v486, %v485
        %vm491 = vcmask 261120
        %v493 = vsel %vm491, %v437, 0
        %495 = vmatprep.subr.bf16.mxu0 0
        %496 = vmatpush1.bf16.msra.mxu0 %v487
        %497 = vmatprep.subr.bf16.mxu0 0
        %498 = vmatpush1.bf16.msra.mxu0 %v488
        %499 = vmatprep.subr.bf16.mxu0 0
        %500 = vmatpush1.bf16.msra.mxu0 0
        %501 = vmatprep.subr.bf16.mxu0 0
        %502 = vmatpush1.bf16.msra.mxu0 0
        %503 = vmatprep.subr.bf16.mxu0 0
        %504 = vmatpush1.bf16.msra.mxu0 0
        %505 = vmatprep.subr.bf16.mxu0 0
        %506 = vmatpush1.bf16.msra.mxu0 0
        %507 = vmatprep.subr.bf16.mxu0 0
        %508 = vmatpush1.bf16.msra.mxu0 0
        %509 = vmatprep.subr.bf16.mxu0 0
        %510 = vmatpush1.bf16.msra.mxu0 0
        %511 = vmatprep.subr.bf16.mxu0 0
        %512 = vmatpush1.bf16.msra.mxu0 0
        %513 = vmatprep.subr.bf16.mxu0 0
        %514 = vmatpush1.bf16.msra.mxu0 0
        %515 = vmatprep.subr.bf16.mxu0 0
        %516 = vmatpush1.bf16.msra.mxu0 0
        %517 = vmatprep.subr.bf16.mxu0 0
        %518 = vmatpush1.bf16.msra.mxu0 0
        %519 = vmatprep.subr.bf16.mxu0 0
        %520 = vmatpush1.bf16.msra.mxu0 0
        %521 = vmatprep.subr.bf16.mxu0 0
        %522 = vmatpush1.bf16.msra.mxu0 0
        %523 = vmatprep.subr.bf16.mxu0 0
        %524 = vmatpush1.bf16.msra.mxu0 0
        %525 = vmatprep.subr.bf16.mxu0 0
        %526 = vmatpush1.bf16.msra.mxu0 0
        %527 = vmatprep.mubr.bf16.mxu0 0
        %528 = vmatmul.mubr.bf16.gmra.mrb[0].mxu0 %v493
        %v529 = vpop.f32.mrb[0].mxu0
        %v530 = vadd.f32 %v466, %v529
        %v531 = vpop.f32.mrb[0].mxu0
        %v532 = vpop.f32.mrb[0].mxu0
        %v533 = vpop.f32.mrb[0].mxu0
        %534 = vdwg.mxu0
        %v539 = vunpack.c.l.b16 %v443
        %v540 = vunpack.c.l.b16 %v444
        %v541 = vunpack.c.l.b16 %v445
        %v542 = vunpack.c.l.b16 %v446
        %v543 = vpack.c.b16 %v540, %v539
        %v544 = vpack.c.b16 %v542, %v541
        %547 = vmatprep.subr.bf16.mxu0 0
        %548 = vmatpush1.bf16.msra.mxu0 %v543
        %549 = vmatprep.subr.bf16.mxu0 0
        %550 = vmatpush1.bf16.msra.mxu0 %v544
        %551 = vmatprep.subr.bf16.mxu0 0
        %552 = vmatpush1.bf16.msra.mxu0 0
        %553 = vmatprep.subr.bf16.mxu0 0
        %554 = vmatpush1.bf16.msra.mxu0 0
        %555 = vmatprep.subr.bf16.mxu0 0
        %556 = vmatpush1.bf16.msra.mxu0 0
        %557 = vmatprep.subr.bf16.mxu0 0
        %558 = vmatpush1.bf16.msra.mxu0 0
        %559 = vmatprep.subr.bf16.mxu0 0
        %560 = vmatpush1.bf16.msra.mxu0 0
        %561 = vmatprep.subr.bf16.mxu0 0
        %562 = vmatpush1.bf16.msra.mxu0 0
        %563 = vmatprep.subr.bf16.mxu0 0
        %564 = vmatpush1.bf16.msra.mxu0 0
        %565 = vmatprep.subr.bf16.mxu0 0
        %566 = vmatpush1.bf16.msra.mxu0 0
        %567 = vmatprep.subr.bf16.mxu0 0
        %568 = vmatpush1.bf16.msra.mxu0 0
        %569 = vmatprep.subr.bf16.mxu0 0
        %570 = vmatpush1.bf16.msra.mxu0 0
        %571 = vmatprep.subr.bf16.mxu0 0
        %572 = vmatpush1.bf16.msra.mxu0 0
        %573 = vmatprep.subr.bf16.mxu0 0
        %574 = vmatpush1.bf16.msra.mxu0 0
        %575 = vmatprep.subr.bf16.mxu0 0
        %576 = vmatpush1.bf16.msra.mxu0 0
        %577 = vmatprep.subr.bf16.mxu0 0
        %578 = vmatpush1.bf16.msra.mxu0 0
        %579 = vmatprep.mubr.bf16.mxu0 0
        %580 = vmatmul.mubr.bf16.gmra.mrb[0].mxu0 %v493
        %v581 = vpop.f32.mrb[0].mxu0
        %v582 = vadd.f32 %v470, %v581
        %v583 = vpop.f32.mrb[0].mxu0
        %v584 = vpop.f32.mrb[0].mxu0
        %v585 = vpop.f32.mrb[0].mxu0
        %586 = vdwg.mxu0
        %v591 = vunpack.c.l.b16 %v447
        %v592 = vunpack.c.l.b16 %v448
        %v593 = vunpack.c.l.b16 %v449
        %v594 = vunpack.c.l.b16 %v450
        %v595 = vpack.c.b16 %v592, %v591
        %v596 = vpack.c.b16 %v594, %v593
        %599 = vmatprep.subr.bf16.mxu0 0
        %600 = vmatpush1.bf16.msra.mxu0 %v595
        %601 = vmatprep.subr.bf16.mxu0 0
        %602 = vmatpush1.bf16.msra.mxu0 %v596
        %603 = vmatprep.subr.bf16.mxu0 0
        %604 = vmatpush1.bf16.msra.mxu0 0
        %605 = vmatprep.subr.bf16.mxu0 0
        %606 = vmatpush1.bf16.msra.mxu0 0
        %607 = vmatprep.subr.bf16.mxu0 0
        %608 = vmatpush1.bf16.msra.mxu0 0
        %609 = vmatprep.subr.bf16.mxu0 0
        %610 = vmatpush1.bf16.msra.mxu0 0
        %611 = vmatprep.subr.bf16.mxu0 0
        %612 = vmatpush1.bf16.msra.mxu0 0
        %613 = vmatprep.subr.bf16.mxu0 0
        %614 = vmatpush1.bf16.msra.mxu0 0
        %615 = vmatprep.subr.bf16.mxu0 0
        %616 = vmatpush1.bf16.msra.mxu0 0
        %617 = vmatprep.subr.bf16.mxu0 0
        %618 = vmatpush1.bf16.msra.mxu0 0
        %619 = vmatprep.subr.bf16.mxu0 0
        %620 = vmatpush1.bf16.msra.mxu0 0
        %621 = vmatprep.subr.bf16.mxu0 0
        %622 = vmatpush1.bf16.msra.mxu0 0
        %623 = vmatprep.subr.bf16.mxu0 0
        %624 = vmatpush1.bf16.msra.mxu0 0
        %625 = vmatprep.subr.bf16.mxu0 0
        %626 = vmatpush1.bf16.msra.mxu0 0
        %627 = vmatprep.subr.bf16.mxu0 0
        %628 = vmatpush1.bf16.msra.mxu0 0
        %629 = vmatprep.subr.bf16.mxu0 0
        %630 = vmatpush1.bf16.msra.mxu0 0
        %631 = vmatprep.mubr.bf16.mxu0 0
        %632 = vmatmul.mubr.bf16.gmra.mrb[0].mxu0 %v493
        %v633 = vpop.f32.mrb[0].mxu0
        %v634 = vadd.f32 %v474, %v633
        %v635 = vpop.f32.mrb[0].mxu0
        %v636 = vpop.f32.mrb[0].mxu0
        %v637 = vpop.f32.mrb[0].mxu0
        %638 = vdwg.mxu0
        %v643 = vunpack.c.l.b16 %v451
        %v644 = vunpack.c.l.b16 %v452
        %v645 = vunpack.c.l.b16 %v453
        %v646 = vunpack.c.l.b16 %v454
        %v647 = vpack.c.b16 %v644, %v643
        %v648 = vpack.c.b16 %v646, %v645
        %651 = vmatprep.subr.bf16.mxu0 0
        %652 = vmatpush1.bf16.msra.mxu0 %v647
        %653 = vmatprep.subr.bf16.mxu0 0
        %654 = vmatpush1.bf16.msra.mxu0 %v648
        %655 = vmatprep.subr.bf16.mxu0 0
        %656 = vmatpush1.bf16.msra.mxu0 0
        %657 = vmatprep.subr.bf16.mxu0 0
        %658 = vmatpush1.bf16.msra.mxu0 0
        %659 = vmatprep.subr.bf16.mxu0 0
        %660 = vmatpush1.bf16.msra.mxu0 0
        %661 = vmatprep.subr.bf16.mxu0 0
        %662 = vmatpush1.bf16.msra.mxu0 0
        %663 = vmatprep.subr.bf16.mxu0 0
        %664 = vmatpush1.bf16.msra.mxu0 0
        %665 = vmatprep.subr.bf16.mxu0 0
        %666 = vmatpush1.bf16.msra.mxu0 0
        %667 = vmatprep.subr.bf16.mxu0 0
        %668 = vmatpush1.bf16.msra.mxu0 0
        %669 = vmatprep.subr.bf16.mxu0 0
        %670 = vmatpush1.bf16.msra.mxu0 0
        %671 = vmatprep.subr.bf16.mxu0 0
        %672 = vmatpush1.bf16.msra.mxu0 0
        %673 = vmatprep.subr.bf16.mxu0 0
        %674 = vmatpush1.bf16.msra.mxu0 0
        %675 = vmatprep.subr.bf16.mxu0 0
        %676 = vmatpush1.bf16.msra.mxu0 0
        %677 = vmatprep.subr.bf16.mxu0 0
        %678 = vmatpush1.bf16.msra.mxu0 0
        %679 = vmatprep.subr.bf16.mxu0 0
        %680 = vmatpush1.bf16.msra.mxu0 0
        %681 = vmatprep.subr.bf16.mxu0 0
        %682 = vmatpush1.bf16.msra.mxu0 0
        %683 = vmatprep.mubr.bf16.mxu0 0
        %684 = vmatmul.mubr.bf16.gmra.mrb[0].mxu0 %v493
        %v685 = vpop.f32.mrb[0].mxu0
        %v686 = vadd.f32 %v478, %v685
        %v687 = vpop.f32.mrb[0].mxu0
        %v688 = vpop.f32.mrb[0].mxu0
        %v689 = vpop.f32.mrb[0].mxu0
        %690 = vdwg.mxu0
        %v691 = vpack.c.bf16 %v530, %v530
        %v692 = vpack.c.bf16 %v582, %v582
        %v693 = vpack.c.bf16 %v634, %v634
        %v694 = vpack.c.bf16 %v686, %v686
        %696 = vrot.lane.b32.xlu0 %v691, 120
        %v697 = vpop.permute.xlu0 %696
        %vm698 = vcmask 64512
        %v700 = vsel %vm698, %v691, 0
        %v703 = vsel %vm698, %v697, 0
        %705 = vmatprep.subr.bf16.mxu0 0
        %706 = vmatpush1.bf16.xpose.msra.mxu0 %v703
        %707 = vmatprep.subr.bf16.mxu0 0
        %708 = vmatpush1.bf16.xpose.msra.mxu0 0
        %709 = vmatprep.subr.bf16.mxu0 0
        %710 = vmatpush1.bf16.xpose.msra.mxu0 0
        %711 = vmatprep.subr.bf16.mxu0 0
        %712 = vmatpush1.bf16.xpose.msra.mxu0 0
        %713 = vmatprep.subr.bf16.mxu0 0
        %714 = vmatpush1.bf16.xpose.msra.mxu0 0
        %715 = vmatprep.subr.bf16.mxu0 0
        %716 = vmatpush1.bf16.xpose.msra.mxu0 0
        %717 = vmatprep.subr.bf16.mxu0 0
        %718 = vmatpush1.bf16.xpose.msra.mxu0 0
        %719 = vmatprep.subr.bf16.mxu0 0
        %720 = vmatpush1.bf16.xpose.msra.mxu0 0
        %721 = vmatprep.subr.bf16.mxu0 0
        %722 = vmatpush1.bf16.xpose.msra.mxu0 0
        %723 = vmatprep.subr.bf16.mxu0 0
        %724 = vmatpush1.bf16.xpose.msra.mxu0 0
        %725 = vmatprep.subr.bf16.mxu0 0
        %726 = vmatpush1.bf16.xpose.msra.mxu0 0
        %727 = vmatprep.subr.bf16.mxu0 0
        %728 = vmatpush1.bf16.xpose.msra.mxu0 0
        %729 = vmatprep.subr.bf16.mxu0 0
        %730 = vmatpush1.bf16.xpose.msra.mxu0 0
        %731 = vmatprep.subr.bf16.mxu0 0
        %732 = vmatpush1.bf16.xpose.msra.mxu0 0
        %733 = vmatprep.subr.bf16.mxu0 0
        %734 = vmatpush1.bf16.xpose.msra.mxu0 0
        %735 = vmatprep.subr.bf16.mxu0 0
        %736 = vmatpush1.bf16.xpose.msra.mxu0 0
        %737 = vmatprep.mubr.bf16.mxu0 0
        %738 = vmatmul.mubr.bf16.gmra.mrb[0].mxu0 %v700
        %v739 = vpop.f32.mrb[0].mxu0
        %v740 = vadd.f32 0.0, %v739
        %v741 = vpop.f32.mrb[0].mxu0
        %v742 = vpop.f32.mrb[0].mxu0
        %v743 = vpop.f32.mrb[0].mxu0
        %744 = vdwg.mxu0
        %746 = vrot.lane.b32.xlu0 %v692, 120
        %v747 = vpop.permute.xlu0 %746
        %v749 = vsel %vm698, %v692, 0
        %v752 = vsel %vm698, %v747, 0
        %754 = vmatprep.subr.bf16.mxu0 0
        %755 = vmatpush1.bf16.xpose.msra.mxu0 %v752
        %756 = vmatprep.subr.bf16.mxu0 0
        %757 = vmatpush1.bf16.xpose.msra.mxu0 0
        %758 = vmatprep.subr.bf16.mxu0 0
        %759 = vmatpush1.bf16.xpose.msra.mxu0 0
        %760 = vmatprep.subr.bf16.mxu0 0
        %761 = vmatpush1.bf16.xpose.msra.mxu0 0
        %762 = vmatprep.subr.bf16.mxu0 0
        %763 = vmatpush1.bf16.xpose.msra.mxu0 0
        %764 = vmatprep.subr.bf16.mxu0 0
        %765 = vmatpush1.bf16.xpose.msra.mxu0 0
        %766 = vmatprep.subr.bf16.mxu0 0
        %767 = vmatpush1.bf16.xpose.msra.mxu0 0
        %768 = vmatprep.subr.bf16.mxu0 0
        %769 = vmatpush1.bf16.xpose.msra.mxu0 0
        %770 = vmatprep.subr.bf16.mxu0 0
        %771 = vmatpush1.bf16.xpose.msra.mxu0 0
        %772 = vmatprep.subr.bf16.mxu0 0
        %773 = vmatpush1.bf16.xpose.msra.mxu0 0
        %774 = vmatprep.subr.bf16.mxu0 0
        %775 = vmatpush1.bf16.xpose.msra.mxu0 0
        %776 = vmatprep.subr.bf16.mxu0 0
        %777 = vmatpush1.bf16.xpose.msra.mxu0 0
        %778 = vmatprep.subr.bf16.mxu0 0
        %779 = vmatpush1.bf16.xpose.msra.mxu0 0
        %780 = vmatprep.subr.bf16.mxu0 0
        %781 = vmatpush1.bf16.xpose.msra.mxu0 0
        %782 = vmatprep.subr.bf16.mxu0 0
        %783 = vmatpush1.bf16.xpose.msra.mxu0 0
        %784 = vmatprep.subr.bf16.mxu0 0
        %785 = vmatpush1.bf16.xpose.msra.mxu0 0
        %786 = vmatprep.mubr.bf16.mxu0 0
        %787 = vmatmul.mubr.bf16.gmra.mrb[0].mxu0 %v749
        %v788 = vpop.f32.mrb[0].mxu0
        %v789 = vadd.f32 0.0, %v788
        %v790 = vpop.f32.mrb[0].mxu0
        %v791 = vpop.f32.mrb[0].mxu0
        %v792 = vpop.f32.mrb[0].mxu0
        %793 = vdwg.mxu0
        %795 = vrot.lane.b32.xlu0 %v693, 120
        %v796 = vpop.permute.xlu0 %795
        %v798 = vsel %vm698, %v693, 0
        %v801 = vsel %vm698, %v796, 0
        %803 = vmatprep.subr.bf16.mxu0 0
        %804 = vmatpush1.bf16.xpose.msra.mxu0 %v801
        %805 = vmatprep.subr.bf16.mxu0 0
        %806 = vmatpush1.bf16.xpose.msra.mxu0 0
        %807 = vmatprep.subr.bf16.mxu0 0
        %808 = vmatpush1.bf16.xpose.msra.mxu0 0
        %809 = vmatprep.subr.bf16.mxu0 0
        %810 = vmatpush1.bf16.xpose.msra.mxu0 0
        %811 = vmatprep.subr.bf16.mxu0 0
        %812 = vmatpush1.bf16.xpose.msra.mxu0 0
        %813 = vmatprep.subr.bf16.mxu0 0
        %814 = vmatpush1.bf16.xpose.msra.mxu0 0
        %815 = vmatprep.subr.bf16.mxu0 0
        %816 = vmatpush1.bf16.xpose.msra.mxu0 0
        %817 = vmatprep.subr.bf16.mxu0 0
        %818 = vmatpush1.bf16.xpose.msra.mxu0 0
        %819 = vmatprep.subr.bf16.mxu0 0
        %820 = vmatpush1.bf16.xpose.msra.mxu0 0
        %821 = vmatprep.subr.bf16.mxu0 0
        %822 = vmatpush1.bf16.xpose.msra.mxu0 0
        %823 = vmatprep.subr.bf16.mxu0 0
        %824 = vmatpush1.bf16.xpose.msra.mxu0 0
        %825 = vmatprep.subr.bf16.mxu0 0
        %826 = vmatpush1.bf16.xpose.msra.mxu0 0
        %827 = vmatprep.subr.bf16.mxu0 0
        %828 = vmatpush1.bf16.xpose.msra.mxu0 0
        %829 = vmatprep.subr.bf16.mxu0 0
        %830 = vmatpush1.bf16.xpose.msra.mxu0 0
        %831 = vmatprep.subr.bf16.mxu0 0
        %832 = vmatpush1.bf16.xpose.msra.mxu0 0
        %833 = vmatprep.subr.bf16.mxu0 0
        %834 = vmatpush1.bf16.xpose.msra.mxu0 0
        %835 = vmatprep.mubr.bf16.mxu0 0
        %836 = vmatmul.mubr.bf16.gmra.mrb[0].mxu0 %v798
        %v837 = vpop.f32.mrb[0].mxu0
        %v838 = vadd.f32 0.0, %v837
        %v839 = vpop.f32.mrb[0].mxu0
        %v840 = vpop.f32.mrb[0].mxu0
        %v841 = vpop.f32.mrb[0].mxu0
        %842 = vdwg.mxu0
        %844 = vrot.lane.b32.xlu0 %v694, 120
        %v845 = vpop.permute.xlu0 %844
        %v847 = vsel %vm698, %v694, 0
        %v850 = vsel %vm698, %v845, 0
        %852 = vmatprep.subr.bf16.mxu0 0
        %853 = vmatpush1.bf16.xpose.msra.mxu0 %v850
        %854 = vmatprep.subr.bf16.mxu0 0
        %855 = vmatpush1.bf16.xpose.msra.mxu0 0
        %856 = vmatprep.subr.bf16.mxu0 0
        %857 = vmatpush1.bf16.xpose.msra.mxu0 0
        %858 = vmatprep.subr.bf16.mxu0 0
        %859 = vmatpush1.bf16.xpose.msra.mxu0 0
        %860 = vmatprep.subr.bf16.mxu0 0
        %861 = vmatpush1.bf16.xpose.msra.mxu0 0
        %862 = vmatprep.subr.bf16.mxu0 0
        %863 = vmatpush1.bf16.xpose.msra.mxu0 0
        %864 = vmatprep.subr.bf16.mxu0 0
        %865 = vmatpush1.bf16.xpose.msra.mxu0 0
        %866 = vmatprep.subr.bf16.mxu0 0
        %867 = vmatpush1.bf16.xpose.msra.mxu0 0
        %868 = vmatprep.subr.bf16.mxu0 0
        %869 = vmatpush1.bf16.xpose.msra.mxu0 0
        %870 = vmatprep.subr.bf16.mxu0 0
        %871 = vmatpush1.bf16.xpose.msra.mxu0 0
        %872 = vmatprep.subr.bf16.mxu0 0
        %873 = vmatpush1.bf16.xpose.msra.mxu0 0
        %874 = vmatprep.subr.bf16.mxu0 0
        %875 = vmatpush1.bf16.xpose.msra.mxu0 0
        %876 = vmatprep.subr.bf16.mxu0 0
        %877 = vmatpush1.bf16.xpose.msra.mxu0 0
        %878 = vmatprep.subr.bf16.mxu0 0
        %879 = vmatpush1.bf16.xpose.msra.mxu0 0
        %880 = vmatprep.subr.bf16.mxu0 0
        %881 = vmatpush1.bf16.xpose.msra.mxu0 0
        %882 = vmatprep.subr.bf16.mxu0 0
        %883 = vmatpush1.bf16.xpose.msra.mxu0 0
        %884 = vmatprep.mubr.bf16.mxu0 0
        %885 = vmatmul.mubr.bf16.gmra.mrb[0].mxu0 %v847
        %v886 = vpop.f32.mrb[0].mxu0
        %v887 = vadd.f32 0.0, %v886
        %v888 = vpop.f32.mrb[0].mxu0
        %v889 = vpop.f32.mrb[0].mxu0
        %v890 = vpop.f32.mrb[0].mxu0
        %891 = vdwg.mxu0
        %v892 = vsel %vm698, %v740, -inf
        %893 = vmax.xlane.f32.xlu0 %v892
        %v894 = vpop.xlane.xlu0 %893
        %v895 = vsel %vm698, %v789, -inf
        %896 = vmax.xlane.f32.xlu0 %v895
        %v897 = vpop.xlane.xlu0 %896
        %v898 = vsel %vm698, %v838, -inf
        %899 = vmax.xlane.f32.xlu0 %v898
        %v900 = vpop.xlane.xlu0 %899
        %v901 = vsel %vm698, %v887, -inf
        %902 = vmax.xlane.f32.xlu0 %v901
        %v903 = vpop.xlane.xlu0 %902
        %v904 = vsub.f32 %v740, %v894
        %v905 = vsub.f32 %v789, %v897
        %v906 = vsub.f32 %v838, %v900
        %v907 = vsub.f32 %v887, %v903
        %v908 = vmul.f32 %v904, 1.442695
        %v909 = vpow.pop %v908
        %v910 = vmul.f32 %v905, 1.442695
        %v911 = vpow.pop %v910
        %v912 = vmul.f32 %v906, 1.442695
        %v913 = vpow.pop %v912
        %v914 = vmul.f32 %v907, 1.442695
        %v915 = vpow.pop %v914
        %v916 = vsel %vm698, %v909, 0.0
        %917 = vadd.xlane.f32.xlu0 %v916
        %v918 = vpop.xlane.xlu0 %917
        %v919 = vsel %vm698, %v911, 0.0
        %920 = vadd.xlane.f32.xlu0 %v919
        %v921 = vpop.xlane.xlu0 %920
        %v922 = vsel %vm698, %v913, 0.0
        %923 = vadd.xlane.f32.xlu0 %v922
        %v924 = vpop.xlane.xlu0 %923
        %v925 = vsel %vm698, %v915, 0.0
        %926 = vadd.xlane.f32.xlu0 %v925
        %v927 = vpop.xlane.xlu0 %926
        %v928 = vpack.c.bf16 %v909, %v909
        %v929 = vpack.c.bf16 %v911, %v911
        %v930 = vpack.c.bf16 %v913, %v913
        %v931 = vpack.c.bf16 %v915, %v915
        %932 = vrot.lane.b32.xlu0 %v691, 112
        %v933 = vpop.permute.xlu0 %932
        %v935 = vsel %vm698, %v928, 0
        %vm937 = vcmask 1043456
        %v939 = vsel %vm937, %v933, 0
        %941 = vmatprep.subr.bf16.mxu0 0
        %942 = vmatpush1.bf16.msra.mxu0 %v939
        %943 = vmatprep.subr.bf16.mxu0 0
        %944 = vmatpush1.bf16.msra.mxu0 0
        %945 = vmatprep.subr.bf16.mxu0 0
        %946 = vmatpush1.bf16.msra.mxu0 0
        %947 = vmatprep.subr.bf16.mxu0 0
        %948 = vmatpush1.bf16.msra.mxu0 0
        %949 = vmatprep.subr.bf16.mxu0 0
        %950 = vmatpush1.bf16.msra.mxu0 0
        %951 = vmatprep.subr.bf16.mxu0 0
        %952 = vmatpush1.bf16.msra.mxu0 0
        %953 = vmatprep.subr.bf16.mxu0 0
        %954 = vmatpush1.bf16.msra.mxu0 0
        %955 = vmatprep.subr.bf16.mxu0 0
        %956 = vmatpush1.bf16.msra.mxu0 0
        %957 = vmatprep.subr.bf16.mxu0 0
        %958 = vmatpush1.bf16.msra.mxu0 0
        %959 = vmatprep.subr.bf16.mxu0 0
        %960 = vmatpush1.bf16.msra.mxu0 0
        %961 = vmatprep.subr.bf16.mxu0 0
        %962 = vmatpush1.bf16.msra.mxu0 0
        %963 = vmatprep.subr.bf16.mxu0 0
        %964 = vmatpush1.bf16.msra.mxu0 0
        %965 = vmatprep.subr.bf16.mxu0 0
        %966 = vmatpush1.bf16.msra.mxu0 0
        %967 = vmatprep.subr.bf16.mxu0 0
        %968 = vmatpush1.bf16.msra.mxu0 0
        %969 = vmatprep.subr.bf16.mxu0 0
        %970 = vmatpush1.bf16.msra.mxu0 0
        %971 = vmatprep.subr.bf16.mxu0 0
        %972 = vmatpush1.bf16.msra.mxu0 0
        %973 = vmatprep.mubr.bf16.mxu0 0
        %974 = vmatmul.mubr.bf16.gmra.mrb[0].mxu0 %v935
        %v975 = vpop.f32.mrb[0].mxu0
        %v976 = vadd.f32 0.0, %v975
        %v977 = vpop.f32.mrb[0].mxu0
        %v978 = vpop.f32.mrb[0].mxu0
        %v979 = vpop.f32.mrb[0].mxu0
        %980 = vdwg.mxu0
        %981 = vrot.lane.b32.xlu0 %v692, 112
        %v982 = vpop.permute.xlu0 %981
        %v984 = vsel %vm698, %v929, 0
        %v987 = vsel %vm937, %v982, 0
        %989 = vmatprep.subr.bf16.mxu0 0
        %990 = vmatpush1.bf16.msra.mxu0 %v987
        %991 = vmatprep.subr.bf16.mxu0 0
        %992 = vmatpush1.bf16.msra.mxu0 0
        %993 = vmatprep.subr.bf16.mxu0 0
        %994 = vmatpush1.bf16.msra.mxu0 0
        %995 = vmatprep.subr.bf16.mxu0 0
        %996 = vmatpush1.bf16.msra.mxu0 0
        %997 = vmatprep.subr.bf16.mxu0 0
        %998 = vmatpush1.bf16.msra.mxu0 0
        %999 = vmatprep.subr.bf16.mxu0 0
        %1000 = vmatpush1.bf16.msra.mxu0 0
        %1001 = vmatprep.subr.bf16.mxu0 0
        %1002 = vmatpush1.bf16.msra.mxu0 0
        %1003 = vmatprep.subr.bf16.mxu0 0
        %1004 = vmatpush1.bf16.msra.mxu0 0
        %1005 = vmatprep.subr.bf16.mxu0 0
        %1006 = vmatpush1.bf16.msra.mxu0 0
        %1007 = vmatprep.subr.bf16.mxu0 0
        %1008 = vmatpush1.bf16.msra.mxu0 0
        %1009 = vmatprep.subr.bf16.mxu0 0
        %1010 = vmatpush1.bf16.msra.mxu0 0
        %1011 = vmatprep.subr.bf16.mxu0 0
        %1012 = vmatpush1.bf16.msra.mxu0 0
        %1013 = vmatprep.subr.bf16.mxu0 0
        %1014 = vmatpush1.bf16.msra.mxu0 0
        %1015 = vmatprep.subr.bf16.mxu0 0
        %1016 = vmatpush1.bf16.msra.mxu0 0
        %1017 = vmatprep.subr.bf16.mxu0 0
        %1018 = vmatpush1.bf16.msra.mxu0 0
        %1019 = vmatprep.subr.bf16.mxu0 0
        %1020 = vmatpush1.bf16.msra.mxu0 0
        %1021 = vmatprep.mubr.bf16.mxu0 0
        %1022 = vmatmul.mubr.bf16.gmra.mrb[0].mxu0 %v984
        %v1023 = vpop.f32.mrb[0].mxu0
        %v1024 = vadd.f32 0.0, %v1023
        %v1025 = vpop.f32.mrb[0].mxu0
        %v1026 = vpop.f32.mrb[0].mxu0
        %v1027 = vpop.f32.mrb[0].mxu0
        %1028 = vdwg.mxu0
        %1029 = vrot.lane.b32.xlu0 %v693, 112
        %v1030 = vpop.permute.xlu0 %1029
        %v1032 = vsel %vm698, %v930, 0
        %v1035 = vsel %vm937, %v1030, 0
        %1037 = vmatprep.subr.bf16.mxu0 0
        %1038 = vmatpush1.bf16.msra.mxu0 %v1035
        %1039 = vmatprep.subr.bf16.mxu0 0
        %1040 = vmatpush1.bf16.msra.mxu0 0
        %1041 = vmatprep.subr.bf16.mxu0 0
        %1042 = vmatpush1.bf16.msra.mxu0 0
        %1043 = vmatprep.subr.bf16.mxu0 0
        %1044 = vmatpush1.bf16.msra.mxu0 0
        %1045 = vmatprep.subr.bf16.mxu0 0
        %1046 = vmatpush1.bf16.msra.mxu0 0
        %1047 = vmatprep.subr.bf16.mxu0 0
        %1048 = vmatpush1.bf16.msra.mxu0 0
        %1049 = vmatprep.subr.bf16.mxu0 0
        %1050 = vmatpush1.bf16.msra.mxu0 0
        %1051 = vmatprep.subr.bf16.mxu0 0
        %1052 = vmatpush1.bf16.msra.mxu0 0
        %1053 = vmatprep.subr.bf16.mxu0 0
        %1054 = vmatpush1.bf16.msra.mxu0 0
        %1055 = vmatprep.subr.bf16.mxu0 0
        %1056 = vmatpush1.bf16.msra.mxu0 0
        %1057 = vmatprep.subr.bf16.mxu0 0
        %1058 = vmatpush1.bf16.msra.mxu0 0
        %1059 = vmatprep.subr.bf16.mxu0 0
        %1060 = vmatpush1.bf16.msra.mxu0 0
        %1061 = vmatprep.subr.bf16.mxu0 0
        %1062 = vmatpush1.bf16.msra.mxu0 0
        %1063 = vmatprep.subr.bf16.mxu0 0
        %1064 = vmatpush1.bf16.msra.mxu0 0
        %1065 = vmatprep.subr.bf16.mxu0 0
        %1066 = vmatpush1.bf16.msra.mxu0 0
        %1067 = vmatprep.subr.bf16.mxu0 0
        %1068 = vmatpush1.bf16.msra.mxu0 0
        %1069 = vmatprep.mubr.bf16.mxu0 0
        %1070 = vmatmul.mubr.bf16.gmra.mrb[0].mxu0 %v1032
        %v1071 = vpop.f32.mrb[0].mxu0
        %v1072 = vadd.f32 0.0, %v1071
        %v1073 = vpop.f32.mrb[0].mxu0
        %v1074 = vpop.f32.mrb[0].mxu0
        %v1075 = vpop.f32.mrb[0].mxu0
        %1076 = vdwg.mxu0
        %1077 = vrot.lane.b32.xlu0 %v694, 112
        %v1078 = vpop.permute.xlu0 %1077
        %v1080 = vsel %vm698, %v931, 0
        %v1083 = vsel %vm937, %v1078, 0
        %1085 = vmatprep.subr.bf16.mxu0 0
        %1086 = vmatpush1.bf16.msra.mxu0 %v1083
        %1087 = vmatprep.subr.bf16.mxu0 0
        %1088 = vmatpush1.bf16.msra.mxu0 0
        %1089 = vmatprep.subr.bf16.mxu0 0
        %1090 = vmatpush1.bf16.msra.mxu0 0
        %1091 = vmatprep.subr.bf16.mxu0 0
        %1092 = vmatpush1.bf16.msra.mxu0 0
        %1093 = vmatprep.subr.bf16.mxu0 0
        %1094 = vmatpush1.bf16.msra.mxu0 0
        %1095 = vmatprep.subr.bf16.mxu0 0
        %1096 = vmatpush1.bf16.msra.mxu0 0
        %1097 = vmatprep.subr.bf16.mxu0 0
        %1098 = vmatpush1.bf16.msra.mxu0 0
        %1099 = vmatprep.subr.bf16.mxu0 0
        %1100 = vmatpush1.bf16.msra.mxu0 0
        %1101 = vmatprep.subr.bf16.mxu0 0
        %1102 = vmatpush1.bf16.msra.mxu0 0
        %1103 = vmatprep.subr.bf16.mxu0 0
        %1104 = vmatpush1.bf16.msra.mxu0 0
        %1105 = vmatprep.subr.bf16.mxu0 0
        %1106 = vmatpush1.bf16.msra.mxu0 0
        %1107 = vmatprep.subr.bf16.mxu0 0
        %1108 = vmatpush1.bf16.msra.mxu0 0
        %1109 = vmatprep.subr.bf16.mxu0 0
        %1110 = vmatpush1.bf16.msra.mxu0 0
        %1111 = vmatprep.subr.bf16.mxu0 0
        %1112 = vmatpush1.bf16.msra.mxu0 0
        %1113 = vmatprep.subr.bf16.mxu0 0
        %1114 = vmatpush1.bf16.msra.mxu0 0
        %1115 = vmatprep.subr.bf16.mxu0 0
        %1116 = vmatpush1.bf16.msra.mxu0 0
        %1117 = vmatprep.mubr.bf16.mxu0 0
        %1118 = vmatmul.mubr.bf16.gmra.mrb[0].mxu0 %v1080
        %v1119 = vpop.f32.mrb[0].mxu0
        %v1120 = vadd.f32 0.0, %v1119
        %v1121 = vpop.f32.mrb[0].mxu0
        %v1122 = vpop.f32.mrb[0].mxu0
        %v1123 = vpop.f32.mrb[0].mxu0
        %1124 = vdwg.mxu0
        %v1125 = vrcp.pop %v918
        %v1126 = vrcp.pop %v921
        %v1127 = vrcp.pop %v924
        %v1128 = vrcp.pop %v927
        %v1129 = vmul.f32 %v976, %v1125
        %v1130 = vmul.f32 %v1024, %v1126
        %v1131 = vmul.f32 %v1072, %v1127
        %v1132 = vmul.f32 %v1120, %v1128
        %v1133 = vpack.c.bf16 %v1129, %v1129
        %v1134 = vpack.c.bf16 %v1130, %v1130
        %v1135 = vpack.c.bf16 %v1131, %v1131
        %v1136 = vpack.c.bf16 %v1132, %v1132
        %v1137 = vld [vmem:[%s3] sm:$0xf]
        %v1138 = vld [vmem:[%s3 + $0x4] sm:$0xf]
        %v1139 = vld [vmem:[%s3 + $0x8] sm:$0xf]
        %v1140 = vld [vmem:[%s3 + $0xc] sm:$0xf]
        %v1142 = vsel %vm698, %v1133, 0
        %v1145 = vsel %vm937, %v1137, 0
        %1147 = vmatprep.subr.bf16.mxu0 0
        %1148 = vmatpush1.bf16.msra.mxu0 %v1145
        %1149 = vmatprep.subr.bf16.mxu0 0
        %1150 = vmatpush1.bf16.msra.mxu0 0
        %1151 = vmatprep.subr.bf16.mxu0 0
        %1152 = vmatpush1.bf16.msra.mxu0 0
        %1153 = vmatprep.subr.bf16.mxu0 0
        %1154 = vmatpush1.bf16.msra.mxu0 0
        %1155 = vmatprep.subr.bf16.mxu0 0
        %1156 = vmatpush1.bf16.msra.mxu0 0
        %1157 = vmatprep.subr.bf16.mxu0 0
        %1158 = vmatpush1.bf16.msra.mxu0 0
        %1159 = vmatprep.subr.bf16.mxu0 0
        %1160 = vmatpush1.bf16.msra.mxu0 0
        %1161 = vmatprep.subr.bf16.mxu0 0
        %1162 = vmatpush1.bf16.msra.mxu0 0
        %1163 = vmatprep.subr.bf16.mxu0 0
        %1164 = vmatpush1.bf16.msra.mxu0 0
        %1165 = vmatprep.subr.bf16.mxu0 0
        %1166 = vmatpush1.bf16.msra.mxu0 0
        %1167 = vmatprep.subr.bf16.mxu0 0
        %1168 = vmatpush1.bf16.msra.mxu0 0
        %1169 = vmatprep.subr.bf16.mxu0 0
        %1170 = vmatpush1.bf16.msra.mxu0 0
        %1171 = vmatprep.subr.bf16.mxu0 0
        %1172 = vmatpush1.bf16.msra.mxu0 0
        %1173 = vmatprep.subr.bf16.mxu0 0
        %1174 = vmatpush1.bf16.msra.mxu0 0
        %1175 = vmatprep.subr.bf16.mxu0 0
        %1176 = vmatpush1.bf16.msra.mxu0 0
        %1177 = vmatprep.subr.bf16.mxu0 0
        %1178 = vmatpush1.bf16.msra.mxu0 0
        %1179 = vmatprep.mubr.bf16.mxu0 0
        %1180 = vmatmul.mubr.bf16.gmra.mrb[0].mxu0 %v1142
        %v1181 = vpop.f32.mrb[0].mxu0
        %v1182 = vadd.f32 0.0, %v1181
        %v1183 = vpop.f32.mrb[0].mxu0
        %v1184 = vpop.f32.mrb[0].mxu0
        %v1185 = vpop.f32.mrb[0].mxu0
        %1186 = vdwg.mxu0
        %v1188 = vsel %vm698, %v1134, 0
        %v1191 = vsel %vm937, %v1138, 0
        %1193 = vmatprep.subr.bf16.mxu0 0
        %1194 = vmatpush1.bf16.msra.mxu0 %v1191
        %1195 = vmatprep.subr.bf16.mxu0 0
        %1196 = vmatpush1.bf16.msra.mxu0 0
        %1197 = vmatprep.subr.bf16.mxu0 0
        %1198 = vmatpush1.bf16.msra.mxu0 0
        %1199 = vmatprep.subr.bf16.mxu0 0
        %1200 = vmatpush1.bf16.msra.mxu0 0
        %1201 = vmatprep.subr.bf16.mxu0 0
        %1202 = vmatpush1.bf16.msra.mxu0 0
        %1203 = vmatprep.subr.bf16.mxu0 0
        %1204 = vmatpush1.bf16.msra.mxu0 0
        %1205 = vmatprep.subr.bf16.mxu0 0
        %1206 = vmatpush1.bf16.msra.mxu0 0
        %1207 = vmatprep.subr.bf16.mxu0 0
        %1208 = vmatpush1.bf16.msra.mxu0 0
        %1209 = vmatprep.subr.bf16.mxu0 0
        %1210 = vmatpush1.bf16.msra.mxu0 0
        %1211 = vmatprep.subr.bf16.mxu0 0
        %1212 = vmatpush1.bf16.msra.mxu0 0
        %1213 = vmatprep.subr.bf16.mxu0 0
        %1214 = vmatpush1.bf16.msra.mxu0 0
        %1215 = vmatprep.subr.bf16.mxu0 0
        %1216 = vmatpush1.bf16.msra.mxu0 0
        %1217 = vmatprep.subr.bf16.mxu0 0
        %1218 = vmatpush1.bf16.msra.mxu0 0
        %1219 = vmatprep.subr.bf16.mxu0 0
        %1220 = vmatpush1.bf16.msra.mxu0 0
        %1221 = vmatprep.subr.bf16.mxu0 0
        %1222 = vmatpush1.bf16.msra.mxu0 0
        %1223 = vmatprep.subr.bf16.mxu0 0
        %1224 = vmatpush1.bf16.msra.mxu0 0
        %1225 = vmatprep.mubr.bf16.mxu0 0
        %1226 = vmatmul.mubr.bf16.gmra.mrb[0].mxu0 %v1188
        %v1227 = vpop.f32.mrb[0].mxu0
        %v1228 = vadd.f32 0.0, %v1227
        %v1229 = vpop.f32.mrb[0].mxu0
        %v1230 = vpop.f32.mrb[0].mxu0
        %v1231 = vpop.f32.mrb[0].mxu0
        %1232 = vdwg.mxu0
        %v1234 = vsel %vm698, %v1135, 0
        %v1237 = vsel %vm937, %v1139, 0
        %1239 = vmatprep.subr.bf16.mxu0 0
        %1240 = vmatpush1.bf16.msra.mxu0 %v1237
        %1241 = vmatprep.subr.bf16.mxu0 0
        %1242 = vmatpush1.bf16.msra.mxu0 0
        %1243 = vmatprep.subr.bf16.mxu0 0
        %1244 = vmatpush1.bf16.msra.mxu0 0
        %1245 = vmatprep.subr.bf16.mxu0 0
        %1246 = vmatpush1.bf16.msra.mxu0 0
        %1247 = vmatprep.subr.bf16.mxu0 0
        %1248 = vmatpush1.bf16.msra.mxu0 0
        %1249 = vmatprep.subr.bf16.mxu0 0
        %1250 = vmatpush1.bf16.msra.mxu0 0
        %1251 = vmatprep.subr.bf16.mxu0 0
        %1252 = vmatpush1.bf16.msra.mxu0 0
        %1253 = vmatprep.subr.bf16.mxu0 0
        %1254 = vmatpush1.bf16.msra.mxu0 0
        %1255 = vmatprep.subr.bf16.mxu0 0
        %1256 = vmatpush1.bf16.msra.mxu0 0
        %1257 = vmatprep.subr.bf16.mxu0 0
        %1258 = vmatpush1.bf16.msra.mxu0 0
        %1259 = vmatprep.subr.bf16.mxu0 0
        %1260 = vmatpush1.bf16.msra.mxu0 0
        %1261 = vmatprep.subr.bf16.mxu0 0
        %1262 = vmatpush1.bf16.msra.mxu0 0
        %1263 = vmatprep.subr.bf16.mxu0 0
        %1264 = vmatpush1.bf16.msra.mxu0 0
        %1265 = vmatprep.subr.bf16.mxu0 0
        %1266 = vmatpush1.bf16.msra.mxu0 0
        %1267 = vmatprep.subr.bf16.mxu0 0
        %1268 = vmatpush1.bf16.msra.mxu0 0
        %1269 = vmatprep.subr.bf16.mxu0 0
        %1270 = vmatpush1.bf16.msra.mxu0 0
        %1271 = vmatprep.mubr.bf16.mxu0 0
        %1272 = vmatmul.mubr.bf16.gmra.mrb[0].mxu0 %v1234
        %v1273 = vpop.f32.mrb[0].mxu0
        %v1274 = vadd.f32 0.0, %v1273
        %v1275 = vpop.f32.mrb[0].mxu0
        %v1276 = vpop.f32.mrb[0].mxu0
        %v1277 = vpop.f32.mrb[0].mxu0
        %1278 = vdwg.mxu0
        %v1280 = vsel %vm698, %v1136, 0
        %v1283 = vsel %vm937, %v1140, 0
        %1285 = vmatprep.subr.bf16.mxu0 0
        %1286 = vmatpush1.bf16.msra.mxu0 %v1283
        %1287 = vmatprep.subr.bf16.mxu0 0
        %1288 = vmatpush1.bf16.msra.mxu0 0
        %1289 = vmatprep.subr.bf16.mxu0 0
        %1290 = vmatpush1.bf16.msra.mxu0 0
        %1291 = vmatprep.subr.bf16.mxu0 0
        %1292 = vmatpush1.bf16.msra.mxu0 0
        %1293 = vmatprep.subr.bf16.mxu0 0
        %1294 = vmatpush1.bf16.msra.mxu0 0
        %1295 = vmatprep.subr.bf16.mxu0 0
        %1296 = vmatpush1.bf16.msra.mxu0 0
        %1297 = vmatprep.subr.bf16.mxu0 0
        %1298 = vmatpush1.bf16.msra.mxu0 0
        %1299 = vmatprep.subr.bf16.mxu0 0
        %1300 = vmatpush1.bf16.msra.mxu0 0
        %1301 = vmatprep.subr.bf16.mxu0 0
        %1302 = vmatpush1.bf16.msra.mxu0 0
        %1303 = vmatprep.subr.bf16.mxu0 0
        %1304 = vmatpush1.bf16.msra.mxu0 0
        %1305 = vmatprep.subr.bf16.mxu0 0
        %1306 = vmatpush1.bf16.msra.mxu0 0
        %1307 = vmatprep.subr.bf16.mxu0 0
        %1308 = vmatpush1.bf16.msra.mxu0 0
        %1309 = vmatprep.subr.bf16.mxu0 0
        %1310 = vmatpush1.bf16.msra.mxu0 0
        %1311 = vmatprep.subr.bf16.mxu0 0
        %1312 = vmatpush1.bf16.msra.mxu0 0
        %1313 = vmatprep.subr.bf16.mxu0 0
        %1314 = vmatpush1.bf16.msra.mxu0 0
        %1315 = vmatprep.subr.bf16.mxu0 0
        %1316 = vmatpush1.bf16.msra.mxu0 0
        %1317 = vmatprep.mubr.bf16.mxu0 0
        %1318 = vmatmul.mubr.bf16.gmra.mrb[0].mxu0 %v1280
        %v1319 = vpop.f32.mrb[0].mxu0
        %v1320 = vadd.f32 0.0, %v1319
        %v1321 = vpop.f32.mrb[0].mxu0
        %v1322 = vpop.f32.mrb[0].mxu0
        %v1323 = vpop.f32.mrb[0].mxu0
        %1324 = vdwg.mxu0
        %v1325 = vsel %vm491, %v1182, 0.0
        %v1326 = vsel %vm491, %v1228, 0.0
        %v1327 = vadd.f32 %v1325, %v1326
        %v1328 = vsel %vm491, %v1274, 0.0
        %v1329 = vadd.f32 %v1327, %v1328
        %v1330 = vsel %vm491, %v1320, 0.0
        %v1331 = vadd.f32 %v1329, %v1330
        %v1332 = vld [vmem:[%s4] sm:$0x1]
        %v1333 = vunpack.c.l.bf16 %v1332
        %v1334 = vlaneseq
        %v1335 = vshrl.u32 %v1334, 7
        %v1336 = vsub.s32 0, %v1335
        %v1337 = vrot.slane %v1333, %v1336
        %v1338 = vadd.f32 %v1331, %v1337
        %v1339 = vadd.f32 %v1338, %v438
        %v1340 = vsel %vm491, %v1339, 0.0
        %1341 = vadd.xlane.f32.xlu0 %v1340
        %v1342 = vpop.xlane.xlu0 %1341
        %v1343 = vrcp.pop 32.0
        %v1344 = vmul.f32 %v1342, %v1343
        %v1345 = vsub.f32 %v1339, %v1344
        %v1346 = vmul.f32 %v1345, %v1345
        %v1347 = vsel %vm491, %v1346, 0.0
        %1348 = vadd.xlane.f32.xlu0 %v1347
        %v1349 = vpop.xlane.xlu0 %1348
        %v1350 = vmul.f32 %v1349, %v1343
        %v1351 = vadd.f32 %v1350, 1e-05
        %v1352 = vrsqrt.pop %v1351
        %v1353 = vmul.f32 %v1345, %v1352
        %v1354 = vld [vmem:[%s9] sm:$0x1]
        %v1356 = vlaneseq
        %v1357 = vshrl.u32 %v1356, 7
        %v1358 = vsub.s32 0, %v1357
        %v1359 = vrot.slane %v1354, %v1358
        %v1361 = vmul.f32 %v1353, %v1359
        %v1362 = vld [vmem:[%s10] sm:$0x1]
        %v1364 = vlaneseq
        %v1365 = vshrl.u32 %v1364, 7
        %v1366 = vsub.s32 0, %v1365
        %v1367 = vrot.slane %v1362, %v1366
        %v1369 = vadd.f32 %v1361, %v1367
        %v1370 = vpack.c.bf16 %v1369, %v1369
        %v1371 = vld [vmem:[%s5] sm:$0xf]
        %v1372 = vld [vmem:[%s5 + $0x4] sm:$0xf]
        %v1373 = vld [vmem:[%s5 + $0x8] sm:$0xf]
        %v1374 = vld [vmem:[%s5 + $0xc] sm:$0xf]
        %v1375 = vld [vmem:[%s6] sm:$0x1]
        %v1376 = vunpack.c.l.bf16 %v1375
        %v1377 = vlaneseq
        %v1378 = vshrl.u32 %v1377, 7
        %v1379 = vsub.s32 0, %v1378
        %v1380 = vrot.slane %v1376, %v1379
        %v1385 = vunpack.c.l.b16 %v1371
        %v1386 = vunpack.c.l.b16 %v1372
        %v1387 = vunpack.c.l.b16 %v1373
        %v1388 = vunpack.c.l.b16 %v1374
        %v1389 = vpack.c.b16 %v1386, %v1385
        %v1390 = vpack.c.b16 %v1388, %v1387
        %v1394 = vsel %vm491, %v1370, 0
        %1396 = vmatprep.subr.bf16.mxu0 0
        %1397 = vmatpush1.bf16.msra.mxu0 %v1389
        %1398 = vmatprep.subr.bf16.mxu0 0
        %1399 = vmatpush1.bf16.msra.mxu0 %v1390
        %1400 = vmatprep.subr.bf16.mxu0 0
        %1401 = vmatpush1.bf16.msra.mxu0 0
        %1402 = vmatprep.subr.bf16.mxu0 0
        %1403 = vmatpush1.bf16.msra.mxu0 0
        %1404 = vmatprep.subr.bf16.mxu0 0
        %1405 = vmatpush1.bf16.msra.mxu0 0
        %1406 = vmatprep.subr.bf16.mxu0 0
        %1407 = vmatpush1.bf16.msra.mxu0 0
        %1408 = vmatprep.subr.bf16.mxu0 0
        %1409 = vmatpush1.bf16.msra.mxu0 0
        %1410 = vmatprep.subr.bf16.mxu0 0
        %1411 = vmatpush1.bf16.msra.mxu0 0
        %1412 = vmatprep.subr.bf16.mxu0 0
        %1413 = vmatpush1.bf16.msra.mxu0 0
        %1414 = vmatprep.subr.bf16.mxu0 0
        %1415 = vmatpush1.bf16.msra.mxu0 0
        %1416 = vmatprep.subr.bf16.mxu0 0
        %1417 = vmatpush1.bf16.msra.mxu0 0
        %1418 = vmatprep.subr.bf16.mxu0 0
        %1419 = vmatpush1.bf16.msra.mxu0 0
        %1420 = vmatprep.subr.bf16.mxu0 0
        %1421 = vmatpush1.bf16.msra.mxu0 0
        %1422 = vmatprep.subr.bf16.mxu0 0
        %1423 = vmatpush1.bf16.msra.mxu0 0
        %1424 = vmatprep.subr.bf16.mxu0 0
        %1425 = vmatpush1.bf16.msra.mxu0 0
        %1426 = vmatprep.subr.bf16.mxu0 0
        %1427 = vmatpush1.bf16.msra.mxu0 0
        %1428 = vmatprep.mubr.bf16.mxu0 0
        %1429 = vmatmul.mubr.bf16.gmra.mrb[0].mxu0 %v1394
        %v1430 = vpop.f32.mrb[0].mxu0
        %v1431 = vadd.f32 %v1380, %v1430
        %v1432 = vpop.f32.mrb[0].mxu0
        %v1433 = vpop.f32.mrb[0].mxu0
        %v1434 = vpop.f32.mrb[0].mxu0
        %1435 = vdwg.mxu0
        %v1436 = vmul.f32 %v1431, 0.01
        %v1437 = vmax.f32 %v1431, %v1436
        %v1438 = vpack.c.bf16 %v1437, %v1437
        %v1439 = vld [vmem:[%s7] sm:$0xf]
        %v1440 = vld [vmem:[%s7 + $0x4] sm:$0xf]
        %v1441 = vld [vmem:[%s7 + $0x8] sm:$0xf]
        %v1442 = vld [vmem:[%s7 + $0xc] sm:$0xf]
        %v1443 = vld [vmem:[%s8] sm:$0x1]
        %v1444 = vunpack.c.l.bf16 %v1443
        %v1445 = vlaneseq
        %v1446 = vshrl.u32 %v1445, 7
        %v1447 = vsub.s32 0, %v1446
        %v1448 = vrot.slane %v1444, %v1447
        %v1453 = vunpack.c.l.b16 %v1439
        %v1454 = vunpack.c.l.b16 %v1440
        %v1455 = vunpack.c.l.b16 %v1441
        %v1456 = vunpack.c.l.b16 %v1442
        %v1457 = vpack.c.b16 %v1454, %v1453
        %v1458 = vpack.c.b16 %v1456, %v1455
        %v1462 = vsel %vm491, %v1438, 0
        %1464 = vmatprep.subr.bf16.mxu0 0
        %1465 = vmatpush1.bf16.msra.mxu0 %v1457
        %1466 = vmatprep.subr.bf16.mxu0 0
        %1467 = vmatpush1.bf16.msra.mxu0 %v1458
        %1468 = vmatprep.subr.bf16.mxu0 0
        %1469 = vmatpush1.bf16.msra.mxu0 0
        %1470 = vmatprep.subr.bf16.mxu0 0
        %1471 = vmatpush1.bf16.msra.mxu0 0
        %1472 = vmatprep.subr.bf16.mxu0 0
        %1473 = vmatpush1.bf16.msra.mxu0 0
        %1474 = vmatprep.subr.bf16.mxu0 0
        %1475 = vmatpush1.bf16.msra.mxu0 0
        %1476 = vmatprep.subr.bf16.mxu0 0
        %1477 = vmatpush1.bf16.msra.mxu0 0
        %1478 = vmatprep.subr.bf16.mxu0 0
        %1479 = vmatpush1.bf16.msra.mxu0 0
        %1480 = vmatprep.subr.bf16.mxu0 0
        %1481 = vmatpush1.bf16.msra.mxu0 0
        %1482 = vmatprep.subr.bf16.mxu0 0
        %1483 = vmatpush1.bf16.msra.mxu0 0
        %1484 = vmatprep.subr.bf16.mxu0 0
        %1485 = vmatpush1.bf16.msra.mxu0 0
        %1486 = vmatprep.subr.bf16.mxu0 0
        %1487 = vmatpush1.bf16.msra.mxu0 0
        %1488 = vmatprep.subr.bf16.mxu0 0
        %1489 = vmatpush1.bf16.msra.mxu0 0
        %1490 = vmatprep.subr.bf16.mxu0 0
        %1491 = vmatpush1.bf16.msra.mxu0 0
        %1492 = vmatprep.subr.bf16.mxu0 0
        %1493 = vmatpush1.bf16.msra.mxu0 0
        %1494 = vmatprep.subr.bf16.mxu0 0
        %1495 = vmatpush1.bf16.msra.mxu0 0
        %1496 = vmatprep.mubr.bf16.mxu0 0
        %1497 = vmatmul.mubr.bf16.gmra.mrb[0].mxu0 %v1462
        %v1498 = vpop.f32.mrb[0].mxu0
        %v1499 = vadd.f32 %v1448, %v1498
        %v1500 = vpop.f32.mrb[0].mxu0
        %v1501 = vpop.f32.mrb[0].mxu0
        %v1502 = vpop.f32.mrb[0].mxu0
        %1503 = vdwg.mxu0
        %v1504 = vadd.f32 %v1499, %v1369
        %v1505 = vsel %vm491, %v1504, 0.0
        %1506 = vadd.xlane.f32.xlu0 %v1505
        %v1507 = vpop.xlane.xlu0 %1506
        %v1508 = vmul.f32 %v1507, %v1343
        %v1509 = vsub.f32 %v1504, %v1508
        %v1510 = vmul.f32 %v1509, %v1509
        %v1511 = vsel %vm491, %v1510, 0.0
        %1512 = vadd.xlane.f32.xlu0 %v1511
        %v1513 = vpop.xlane.xlu0 %1512
        %v1514 = vmul.f32 %v1513, %v1343
        %v1515 = vadd.f32 %v1514, 1e-05
        %v1516 = vrsqrt.pop %v1515
        %v1517 = vmul.f32 %v1509, %v1516
        %v1518 = vld [vmem:[%s11] sm:$0x1]
        %v1520 = vlaneseq
        %v1521 = vshrl.u32 %v1520, 7
        %v1522 = vsub.s32 0, %v1521
        %v1523 = vrot.slane %v1518, %v1522
        %v1525 = vmul.f32 %v1517, %v1523
        %v1526 = vld [vmem:[%s12] sm:$0x1]
        %v1528 = vlaneseq
        %v1529 = vshrl.u32 %v1528, 7
        %v1530 = vsub.s32 0, %v1529
        %v1531 = vrot.slane %v1526, %v1530
        %v1533 = vadd.f32 %v1525, %v1531
        %v1534 = vpack.c.bf16 %v1533, %v1533
        %vm1535 = vcmask 257024
        %1536 = vst.msk [vmem:[%s431] sm:$0xf] %vm1535, %v1534
        %s1537 = sand.u32 %s313, 1
        %s1538 = scalar_lea.sflag [#allocation3], %s1537
        %s1539 = sand.u32 %s313, 1
        %s1540 = smul.addr %s1539, 4
        %s1541 = scalar_lea.vmem [#allocation2], %s1540
        // Predicated region
        $region73: #{tpu_custom_call.1} parent=71 // pred_check
          %p1542 = pneg %p323
        $region74: #{tpu_custom_call.1} parent=71 // pred_check_branch
          %1544 = sbr.rel (%p1542) target = $region76
        $region75: #{tpu_custom_call.1} parent=71 // pred_region
          %s1546 = ssub.s32 64, 64
          %1547 = vsyncadd %s1538, %s1546
          %s1548 = smul.addr %s27, 64
          %s1549 = scalar_lea.hbm %s13, %s1548
          %s1551 = sshll.u32 %s1541, 4
          %s1552 = int_to_ptr.vmem [resolvable:$true] %s1551
          %1554 = dma.vmem_to_hbm [thread:$0]  %s1552, 64, %s1549, %s1538
        $region76: #{tpu_custom_call.1} parent=71 // pred_fallthru
          _
      $region72: #{tpu_custom_call.1} parent=5 // pred_fallthru
        _
      %p1555 = scmp.le.s32.totalorder 2, %s22
      // Predicated region
      $region77: #{tpu_custom_call.1} parent=5 // pred_check
        %p1556 = pneg %p1555
      $region78: #{tpu_custom_call.1} parent=5 // pred_check_branch
        %1558 = sbr.rel (%p1556) target = $region80
      $region79: #{tpu_custom_call.1} parent=5 // pred_region
        %s1559 = ssub.s32 %s22, 2
        // Predicated region
        $region81: #{tpu_custom_call.1} parent=79 // pred_check
          %p1560 = pneg %p329
        $region82: #{tpu_custom_call.1} parent=79 // pred_check_branch
          %1562 = sbr.rel (%p1560) target = $region84
        $region83: #{tpu_custom_call.1} parent=79 // pred_region
          %s1563 = sand.u32 %s314, 1
          %s1564 = scalar_lea.sflag [#allocation3], %s1563
          %s1565 = sand.u32 %s314, 1
          %s1566 = smul.addr %s1565, 4
          %s1567 = scalar_lea.vmem [#allocation2], %s1566
          %1568 = dma.done %s1564, 64
        $region84: #{tpu_custom_call.1} parent=79 // pred_fallthru
          _
      $region80: #{tpu_custom_call.1} parent=5 // pred_fallthru
        _
    $region6: #{tpu_custom_call.1} parent=1 // loop_footer
      %s26 = sadd.s32 1, %s22
    $region7: #{tpu_custom_call.1} parent=1 // loop_footer_branch
      %21 = sbr.rel target = $region3
    $region8: #{tpu_custom_call.1} parent=1 // loop_exit
      _
    %1569 = vsyncpa [#allocation3], 1
    %s1570 = scalar_lea.sflag [#allocation3], 1
    %1571 = vsyncpa %s1570, 1

</llo_original>
